<compile_context>
chip_gen: v7x
topology: tpu7x:2x2x1
jax: 0.10.0
libtpu: 0.0.40
codegen_flags: <defaults>
</compile_context>

<pallas_src>
import functools
import math

import jax
import jax.numpy as jnp
from jax.experimental import pallas as pl
from jax.experimental.pallas import tpu as pltpu


_VMEM_LIMIT = 48 * 1024 * 1024   # safe on v5e/v6e (128 MiB) and v7x (64 MiB)


def _cparams(semantics):
    return pltpu.CompilerParams(dimension_semantics=semantics,
                                vmem_limit_bytes=_VMEM_LIMIT)


def _round_up(x, m):
    return ((x + m - 1) // m) * m


def _seq_tile(n, target=256):
    """Largest multiple-of-8 divisor of n that is <= target (n itself if n<=target)."""
    if n <= target:
        return n
    for cand in range(target - target % 8, 7, -8):
        if n % cand == 0:
            return cand
    # TODO(synk): no multiple-of-8 divisor <= target (odd/prime S): fall back to S.
    return n


def _kv_tile(n, target=256):
    """kv tile sits on a lane dim (mask blocks): multiple of 128 or full extent."""
    for cand in (target, 128):
        if n % cand == 0 and cand <= n:
            return cand
    return n


def _ln_f32(z, g, b, eps):
    mu = jnp.mean(z, axis=-1, keepdims=True)
    zc = z - mu
    var = jnp.mean(zc * zc, axis=-1, keepdims=True)
    return zc * jax.lax.rsqrt(var + eps) * g + b


# ---------------------------------------------------------------------------
# Kernels
# ---------------------------------------------------------------------------
def _frontend_kernel(x_ref, w1_ref, b1_ref, w2_ref, b2_ref, we_ref, be_ref,
                     pe_ref, o_ref, *, scale):
    # Fused: encoder1 (*scale, ReLU) -> encoder2 (ReLU) -> embeddings -> + pe.
    # x: (1, ts, dim_input) f32, weights bf16, biases/pe f32 -> o: (1, ts, dm) bf16
    x = x_ref[0].astype(jnp.bfloat16)
    z = jnp.dot(x, w1_ref[...], preferred_element_type=jnp.float32) + b1_ref[...]
    z = jnp.maximum(z * scale, 0.0)
    z = jnp.dot(z.astype(jnp.bfloat16), w2_ref[...],
                preferred_element_type=jnp.float32) + b2_ref[...]
    z = jnp.maximum(z, 0.0)
    z = jnp.dot(z.astype(jnp.bfloat16), we_ref[...],
                preferred_element_type=jnp.float32) + be_ref[...]
    z = z + pe_ref[...]
    # TODO(synk): training-mode dropout omitted (eval() semantics: identity).
    o_ref[0] = z.astype(o_ref.dtype)


def _qkv_kernel(h_ref, w_ref, b_ref, q_ref, k_ref, v_ref, *, nhead, dh):
    # Fused in_proj; writes q/k/v directly in [B,H,S,dh] layout (no HBM transposes).
    # h: (1, ts, E) bf16, w: (E, 3E) bf16, b: (1, 3E) f32.
    e = nhead * dh
    y = jnp.dot(h_ref[0], w_ref[...], preferred_element_type=jnp.float32) + b_ref[...]
    for hd in range(nhead):
        q_ref[0, hd] = y[:, 0 * e + hd * dh: 0 * e + (hd + 1) * dh].astype(q_ref.dtype)
        k_ref[0, hd] = y[:, 1 * e + hd * dh: 1 * e + (hd + 1) * dh].astype(k_ref.dtype)
        v_ref[0, hd] = y[:, 2 * e + hd * dh: 2 * e + (hd + 1) * dh].astype(v_ref.dtype)


def _flash_kernel(*refs, scale, has_src_mask):
    # Flash-attention forward: online softmax over kv tiles, f32 accumulators.
    if has_src_mask:
        kp_ref, sm_ref, q_ref, k_ref, v_ref, o_ref, m_sc, l_sc, acc_sc = refs
    else:
        kp_ref, q_ref, k_ref, v_ref, o_ref, m_sc, l_sc, acc_sc = refs
        sm_ref = None
    ki = pl.program_id(3)

    @pl.when(ki == 0)
    def _():
        m_sc[...] = jnp.full(m_sc.shape, -jnp.inf, m_sc.dtype)
        l_sc[...] = jnp.zeros(l_sc.shape, l_sc.dtype)
        acc_sc[...] = jnp.zeros(acc_sc.shape, acc_sc.dtype)

    q = q_ref[0, 0]                         # (tq, dh) bf16
    k = k_ref[0, 0]                         # (tk, dh) bf16
    v = v_ref[0, 0]                         # (tk, dh) bf16
    s = jax.lax.dot_general(q, k, (((1,), (1,)), ((), ())),
                            preferred_element_type=jnp.float32) * scale
    s = s + kp_ref[0]                       # (1, tk) key-padding bias, f32
    if has_src_mask:
        s = s + sm_ref[...]                 # (tq, tk) additive src_mask, f32

    m_prev = m_sc[...]
    m_new = jnp.maximum(m_prev, jnp.max(s, axis=-1, keepdims=True))
    alpha = jnp.exp(m_prev - m_new)
    p = jnp.exp(s - m_new)
    l_sc[...] = alpha * l_sc[...] + jnp.sum(p, axis=-1, keepdims=True)
    acc_sc[...] = alpha * acc_sc[...] + jnp.dot(p.astype(v.dtype), v,
                                                preferred_element_type=jnp.float32)
    m_sc[...] = m_new

    @pl.when(ki == pl.num_programs(3) - 1)
    def _():
        inv = pl.reciprocal(l_sc[...], approx=True)
        o_ref[0, 0] = (acc_sc[...] * inv).astype(o_ref.dtype)


def _outproj_ln_kernel(ctx_ref, wo_ref, bo_ref, res_ref, g_ref, b_ref, o_ref,
                       *, nhead, eps):
    # Fused out_proj (per-head matmuls on [H,ts,dh] ctx) + residual add + LayerNorm.
    ts = ctx_ref.shape[2]
    e = bo_ref.shape[-1]
    y = jnp.zeros((ts, e), jnp.float32)
    for hd in range(nhead):
        y = y + jnp.dot(ctx_ref[0, hd], wo_ref[hd],
                        preferred_element_type=jnp.float32)
    y = y + bo_ref[...] + res_ref[0].astype(jnp.float32)
    o_ref[0] = _ln_f32(y, g_ref[...], b_ref[...], eps).astype(o_ref.dtype)


def _ffn_ln_kernel(x_ref, w1_ref, b1_ref, w2_ref, b2_ref, g_ref, b_ref, o_ref, *, eps):
    # Fused ff1 + ReLU + ff2 + residual + LayerNorm; (tn, d_hid) stays in VMEM.
    x = x_ref[...]                                       # (tn, E) bf16
    z = jnp.dot(x, w1_ref[...], preferred_element_type=jnp.float32) + b1_ref[...]
    z = jnp.maximum(z, 0.0)
    z = jnp.dot(z.astype(jnp.bfloat16), w2_ref[...],
                preferred_element_type=jnp.float32) + b2_ref[...]
    z = z + x.astype(jnp.float32)
    o_ref[...] = _ln_f32(z, g_ref[...], b_ref[...], eps).astype(o_ref.dtype)


# ---------------------------------------------------------------------------
# pallas_call wrappers
# ---------------------------------------------------------------------------
def pallas_frontend(x, w1, b1, w2, b2, we, be, pe2d, *, scale, seq_tile=256):
    bsz, s, din = x.shape
    d1, d2, dm = w1.shape[1], w2.shape[1], we.shape[1]
    ts = _seq_tile(s, seq_tile)
    kern = functools.partial(_frontend_kernel, scale=float(scale))
    return pl.pallas_call(
        kern,
        out_shape=jax.ShapeDtypeStruct((bsz, s, dm), jnp.bfloat16),
        grid_spec=pltpu.PrefetchScalarGridSpec(
            num_scalar_prefetch=0,
            grid=(bsz, s // ts),
            in_specs=[
                pl.BlockSpec((1, ts, din), lambda b, i: (b, i, 0)),
                pl.BlockSpec((din, d1), lambda b, i: (0, 0)),
                pl.BlockSpec((1, d1), lambda b, i: (0, 0)),
                pl.BlockSpec((d1, d2), lambda b, i: (0, 0)),
                pl.BlockSpec((1, d2), lambda b, i: (0, 0)),
                pl.BlockSpec((d2, dm), lambda b, i: (0, 0)),
                pl.BlockSpec((1, dm), lambda b, i: (0, 0)),
                # pe tiles read straight out of the full (max_len, dm) buffer.
                pl.BlockSpec((ts, dm), lambda b, i: (i, 0)),
            ],
            out_specs=pl.BlockSpec((1, ts, dm), lambda b, i: (b, i, 0)),
        ),
        compiler_params=_cparams(("parallel", "parallel")),
    )(x, w1, b1.reshape(1, -1), w2, b2.reshape(1, -1), we, be.reshape(1, -1), pe2d)


def pallas_qkv_proj(h, w, b, *, nhead, seq_tile=256):
    bsz, s, e = h.shape
    dh = e // nhead
    ts = _seq_tile(s, seq_tile)
    kern = functools.partial(_qkv_kernel, nhead=nhead, dh=dh)
    out_sd = jax.ShapeDtypeStruct((bsz, nhead, s, dh), h.dtype)
    out_spec = pl.BlockSpec((1, nhead, ts, dh), lambda b, i: (b, 0, i, 0))
    return pl.pallas_call(
        kern,
        out_shape=(out_sd, out_sd, out_sd),
        grid_spec=pltpu.PrefetchScalarGridSpec(
            num_scalar_prefetch=0,
            grid=(bsz, s // ts),
            in_specs=[
                pl.BlockSpec((1, ts, e), lambda b, i: (b, i, 0)),
                pl.BlockSpec((e, 3 * e), lambda b, i: (0, 0)),
                pl.BlockSpec((1, 3 * e), lambda b, i: (0, 0)),
            ],
            out_specs=(out_spec, out_spec, out_spec),
        ),
        compiler_params=_cparams(("parallel", "parallel")),
    )(h, w, b.reshape(1, -1))


def pallas_flash_mha(q, k, v, kp_bias, src_bias=None, *, q_tile=256, kv_tile=256):
    bsz, h, s, dh = q.shape
    tq = _seq_tile(s, q_tile)
    tk = _kv_tile(s, kv_tile)
    has_sm = src_bias is not None
    kern = functools.partial(_flash_kernel, scale=1.0 / math.sqrt(dh),
                             has_src_mask=has_sm)
    in_specs = [pl.BlockSpec((1, 1, tk), lambda b, hh, qi, ki: (b, 0, ki))]
    args = [kp_bias]
    if has_sm:
        in_specs.append(pl.BlockSpec((tq, tk), lambda b, hh, qi, ki: (qi, ki)))
        args.append(src_bias)
    in_specs += [
        pl.BlockSpec((1, 1, tq, dh), lambda b, hh, qi, ki: (b, hh, qi, 0)),
        pl.BlockSpec((1, 1, tk, dh), lambda b, hh, qi, ki: (b, hh, ki, 0)),
        pl.BlockSpec((1, 1, tk, dh), lambda b, hh, qi, ki: (b, hh, ki, 0)),
    ]
    args += [q, k, v]
    return pl.pallas_call(
        kern,
        out_shape=jax.ShapeDtypeStruct((bsz, h, s, dh), q.dtype),
        grid_spec=pltpu.PrefetchScalarGridSpec(
            num_scalar_prefetch=0,
            grid=(bsz, h, s // tq, s // tk),
            in_specs=in_specs,
            out_specs=pl.BlockSpec((1, 1, tq, dh),
                                   lambda b, hh, qi, ki: (b, hh, qi, 0)),
            scratch_shapes=[pltpu.VMEM((tq, 1), jnp.float32),
                            pltpu.VMEM((tq, 1), jnp.float32),
                            pltpu.VMEM((tq, dh), jnp.float32)],
        ),
        compiler_params=_cparams(("parallel", "parallel", "parallel", "arbitrary")),
    )(*args)


def pallas_outproj_ln(ctx, wo3, bo, resid, g, beta, *, eps=1e-5, seq_tile=256):
    bsz, h, s, dh = ctx.shape
    e = h * dh
    ts = _seq_tile(s, seq_tile)
    kern = functools.partial(_outproj_ln_kernel, nhead=h, eps=float(eps))
    return pl.pallas_call(
        kern,
        out_shape=jax.ShapeDtypeStruct((bsz, s, e), resid.dtype),
        grid_spec=pltpu.PrefetchScalarGridSpec(
            num_scalar_prefetch=0,
            grid=(bsz, s // ts),
            in_specs=[
                pl.BlockSpec((1, h, ts, dh), lambda b, i: (b, 0, i, 0)),
                pl.BlockSpec((h, dh, e), lambda b, i: (0, 0, 0)),
                pl.BlockSpec((1, e), lambda b, i: (0, 0)),
                pl.BlockSpec((1, ts, e), lambda b, i: (b, i, 0)),
                pl.BlockSpec((1, e), lambda b, i: (0, 0)),
                pl.BlockSpec((1, e), lambda b, i: (0, 0)),
            ],
            out_specs=pl.BlockSpec((1, ts, e), lambda b, i: (b, i, 0)),
        ),
        compiler_params=_cparams(("parallel", "parallel")),
    )(ctx, wo3, bo.reshape(1, -1), resid, g.reshape(1, -1), beta.reshape(1, -1))


def pallas_ffn_ln(x2d, w1, b1, w2, b2, g, beta, *, eps=1e-5, row_tile=512):
    n, e = x2d.shape
    d_hid = w1.shape[1]
    tn = min(row_tile, _round_up(n, 8))
    n_pad = _round_up(n, tn)
    xp = x2d if n_pad == n else jnp.pad(x2d, ((0, n_pad - n), (0, 0)))
    kern = functools.partial(_ffn_ln_kernel, eps=float(eps))
    out = pl.pallas_call(
        kern,
        out_shape=jax.ShapeDtypeStruct((n_pad, e), x2d.dtype),
        grid_spec=pltpu.PrefetchScalarGridSpec(
            num_scalar_prefetch=0,
            grid=(n_pad // tn,),
            in_specs=[
                pl.BlockSpec((tn, e), lambda i: (i, 0)),
                pl.BlockSpec((e, d_hid), lambda i: (0, 0)),
                pl.BlockSpec((1, d_hid), lambda i: (0, 0)),
                pl.BlockSpec((d_hid, e), lambda i: (0, 0)),
                pl.BlockSpec((1, e), lambda i: (0, 0)),
                pl.BlockSpec((1, e), lambda i: (0, 0)),
                pl.BlockSpec((1, e), lambda i: (0, 0)),
            ],
            out_specs=pl.BlockSpec((tn, e), lambda i: (i, 0)),
        ),
        compiler_params=_cparams(("parallel",)),
    )(xp, w1, b1.reshape(1, -1), w2, b2.reshape(1, -1),
      g.reshape(1, -1), beta.reshape(1, -1))
    return out if n_pad == n else out[:n]


# ---------------------------------------------------------------------------
# Parameters (mirrors TransformerModel.__init__ / init_weights)
# ---------------------------------------------------------------------------
def make_positional_encoding(d_model, max_len=5000):
    position = jnp.arange(max_len, dtype=jnp.float32)[:, None]
    div_term = jnp.exp(jnp.arange(0, d_model, 2, dtype=jnp.float32)
                       * (-math.log(10000.0) / d_model))
    pe = jnp.zeros((max_len, d_model), jnp.float32)
    pe = pe.at[:, 0::2].set(jnp.sin(position * div_term))
    pe = pe.at[:, 1::2].set(jnp.cos(position * div_term))
    return pe


def init_params(key, *, dim_input, d_model, nhead, d_hid, nlayers, max_len=5000):
    initrange = 0.1
    wdt = jnp.bfloat16            # matmul weights stored in bf16 (MXU-native)
    dh = d_model // nhead

    def unif(k, shape, dtype=jnp.float32):
        return jax.random.uniform(k, shape, jnp.float32,
                                  -initrange, initrange).astype(dtype)

    keys = iter(jax.random.split(key, 16 + 12 * nlayers))
    p = {
        "enc1_w": unif(next(keys), (dim_input, 2 * d_model), wdt),
        "enc1_b": unif(next(keys), (2 * d_model,)),
        "enc2_w": unif(next(keys), (2 * d_model, 2 * d_model), wdt),
        "enc2_b": unif(next(keys), (2 * d_model,)),
        "emb_w": unif(next(keys), (2 * d_model, d_model), wdt),
        "emb_b": unif(next(keys), (d_model,)),
        "reg_w": unif(next(keys), (d_model, 1)),
        "reg_b": jnp.zeros((1,), jnp.float32),
        "pe": make_positional_encoding(d_model, max_len),       # (max_len, d_model)
        "layers": [],
    }
    for _ in range(nlayers):
        p["layers"].append({
            "in_proj_w": unif(next(keys), (d_model, 3 * d_model), wdt),
            "in_proj_b": unif(next(keys), (3 * d_model,)),
            # out_proj stored as (H, dh, d_model) for the per-head fused kernel.
            "out_proj_w": unif(next(keys), (d_model, d_model), wdt).reshape(
                nhead, dh, d_model),
            "out_proj_b": unif(next(keys), (d_model,)),
            "ff1_w": unif(next(keys), (d_model, d_hid), wdt),
            "ff1_b": unif(next(keys), (d_hid,)),
            "ff2_w": unif(next(keys), (d_hid, d_model), wdt),
            "ff2_b": unif(next(keys), (d_model,)),
            "ln1_g": jnp.ones((d_model,), jnp.float32),
            "ln1_b": jnp.zeros((d_model,), jnp.float32),
            "ln2_g": jnp.ones((d_model,), jnp.float32),
            "ln2_b": jnp.zeros((d_model,), jnp.float32),
        })
    return p


# ---------------------------------------------------------------------------
# Forward pass (Pallas)
# ---------------------------------------------------------------------------
def _encoder_layer(h, kp_bias, src_bias, lp, *, nhead):
    bsz, s, e = h.shape
    q, k, v = pallas_qkv_proj(h, lp["in_proj_w"], lp["in_proj_b"], nhead=nhead)
    ctx = pallas_flash_mha(q, k, v, kp_bias, src_bias)
    h1 = pallas_outproj_ln(ctx, lp["out_proj_w"], lp["out_proj_b"], h,
                           lp["ln1_g"], lp["ln1_b"])
    h2 = pallas_ffn_ln(h1.reshape(bsz * s, e), lp["ff1_w"], lp["ff1_b"],
                       lp["ff2_w"], lp["ff2_b"], lp["ln2_g"], lp["ln2_b"])
    return h2.reshape(bsz, s, e)


def transformer_forward(params, src, src_mask=None, *, d_model, nhead):
    # src: [batch, seq, dim_input] (matches src[:, :, 0].isnan() + permute(1,0,2);
    # internally we keep a batch-major [B, S, D] layout throughout).
    bsz, seq_len, _ = src.shape
    key_padding_mask = jnp.isnan(src[:, :, 0])                    # [B, S]
    x = jnp.nan_to_num(src).astype(jnp.float32)

    h = pallas_frontend(x, params["enc1_w"], params["enc1_b"],
                        params["enc2_w"], params["enc2_b"],
                        params["emb_w"], params["emb_b"], params["pe"],
                        scale=math.sqrt(2 * d_model))             # [B, S, dm] bf16

    # Tiny (B,1,S) additive key-padding bias; the (B,S,S) bias is never built.
    kp_bias = jnp.where(key_padding_mask, -1e9, 0.0).astype(jnp.float32)[:, None, :]
    src_bias = None
    if src_mask is not None:
        if src_mask.dtype == jnp.bool_:
            src_bias = jnp.where(src_mask, -1e9, 0.0).astype(jnp.float32)
        else:
            src_bias = src_mask.astype(jnp.float32)

    for lp in params["layers"]:
        h = _encoder_layer(h, kp_bias, src_bias, lp, nhead=nhead)

    # Regression head (dout=1) in plain JAX: avoids N=1 MXU matmul / masked stores.
    h0 = h[:, 0, :].astype(jnp.float32)                           # seq position 0
    return jnp.maximum(h0 @ params["reg_w"] + params["reg_b"], 0.0)   # [B, 1]


# ---------------------------------------------------------------------------
# Pure-JAX reference (same math & bf16 casting points) for the self-check
# ---------------------------------------------------------------------------
def reference_forward(params, src, src_mask=None, *, d_model, nhead):
    f32, bf16 = jnp.float32, jnp.bfloat16
    bsz, s, _ = src.shape
    e, h_heads = d_model, nhead
    dh = e // h_heads
    kp = jnp.isnan(src[:, :, 0])
    x = jnp.nan_to_num(src).astype(f32)

    def mm(a, w):
        return jnp.dot(a.astype(bf16), w.astype(bf16), preferred_element_type=f32)

    scale = math.sqrt(2 * e)
    z = jnp.maximum((mm(x, params["enc1_w"]) + params["enc1_b"]) * scale, 0.0)
    z = jnp.maximum(mm(z, params["enc2_w"]) + params["enc2_b"], 0.0)
    z = mm(z, params["emb_w"]) + params["emb_b"]
    z = z + params["pe"][:s][None]
    h = z.astype(bf16)

    kpb = jnp.where(kp, -1e9, 0.0).astype(f32)
    smb = None
    if src_mask is not None:
        smb = (jnp.where(src_mask, -1e9, 0.0).astype(f32)
               if src_mask.dtype == jnp.bool_ else src_mask.astype(f32))

    for lp in params["layers"]:
        qkv = (mm(h, lp["in_proj_w"]) + lp["in_proj_b"]).astype(bf16)
        qkv = qkv.reshape(bsz, s, 3, h_heads, dh)
        q = jnp.transpose(qkv[:, :, 0], (0, 2, 1, 3))
        k = jnp.transpose(qkv[:, :, 1], (0, 2, 1, 3))
        v = jnp.transpose(qkv[:, :, 2], (0, 2, 1, 3))
        sc = jnp.einsum("bhqd,bhkd->bhqk", q, k,
                        preferred_element_type=f32) / math.sqrt(dh)
        sc = sc + kpb[:, None, None, :]
        if smb is not None:
            sc = sc + smb[None, None]
        p = jax.nn.softmax(sc, axis=-1)
        ctx = jnp.einsum("bhqk,bhkd->bhqd", p.astype(bf16), v,
                         preferred_element_type=f32).astype(bf16)
        y = jnp.einsum("bhqd,hde->bqe", ctx, lp["out_proj_w"].astype(bf16),
                       preferred_element_type=f32) + lp["out_proj_b"]
        h1 = _ln_f32(y + h.astype(f32), lp["ln1_g"], lp["ln1_b"], 1e-5).astype(bf16)
        ff = jnp.maximum(mm(h1, lp["ff1_w"]) + lp["ff1_b"], 0.0).astype(bf16)
        ff = mm(ff, lp["ff2_w"]) + lp["ff2_b"]
        h = _ln_f32(ff + h1.astype(f32), lp["ln2_g"], lp["ln2_b"], 1e-5).astype(bf16)

    h0 = h[:, 0, :].astype(f32)
    return jnp.maximum(h0 @ params["reg_w"] + params["reg_b"], 0.0)


# ---------------------------------------------------------------------------
# Demo / self-check
# ---------------------------------------------------------------------------
if __name__ == "__main__":
    dim_input, d_model, nhead, d_hid, nlayers = 16, 32, 4, 64, 2
    batch, seq = 2, 8

    root = jax.random.PRNGKey(0)
    k_param, k_src = jax.random.split(root)
    params = init_params(k_param, dim_input=dim_input, d_model=d_model,
                         nhead=nhead, d_hid=d_hid, nlayers=nlayers, max_len=5000)

    src = jax.random.normal(k_src, (batch, seq, dim_input), jnp.float32)
    # Mark one position as padding via NaN (exercises src[:,:,0].isnan() + nan_to_num).
    src = src.at[0, seq - 1, :].set(jnp.nan)

    fwd = jax.jit(functools.partial(transformer_forward, d_model=d_model, nhead=nhead))
    out = jax.block_until_ready(fwd(params, src))
    assert out.shape == (batch, 1), out.shape
    assert bool(jnp.all(jnp.isfinite(out)))

    ref = jax.block_until_ready(
        reference_forward(params, src, d_model=d_model, nhead=nhead))
    err = float(jnp.max(jnp.abs(out - ref)))
    assert err < 2e-2, (err, out, ref)

    print("KERNEL_OK")
</pallas_src>

<mosaic_0001>
module attributes {stable_mosaic.version = 11 : i64} {
  func.func @_frontend_kernel(%arg0: i32, %arg1: i32, %arg2: memref<1x8x16xf32, #tpu.memory_space<vmem>>, %arg3: memref<16x64xbf16, #tpu.memory_space<vmem>>, %arg4: memref<1x64xf32, #tpu.memory_space<vmem>>, %arg5: memref<64x64xbf16, #tpu.memory_space<vmem>>, %arg6: memref<1x64xf32, #tpu.memory_space<vmem>>, %arg7: memref<64x32xbf16, #tpu.memory_space<vmem>>, %arg8: memref<1x32xf32, #tpu.memory_space<vmem>>, %arg9: memref<8x32xf32, #tpu.memory_space<vmem>>, %arg10: memref<1x8x32xbf16, #tpu.memory_space<vmem>>) attributes {dimension_semantics = [#tpu.dimension_semantics<parallel>, #tpu.dimension_semantics<parallel>], iteration_bounds = array<i64: 2, 1>, scalar_prefetch = 0 : i64, scratch_operands = 0 : i64, tpu.core_type = #tpu.core_type<tc>, window_params = [{transform_indices = @transform_0, window_bounds = array<i64: 1, 8, 16>}, {pipeline_mode = #tpu.pipeline_mode<synchronous>, transform_indices = @transform_1, window_bounds = array<i64: 16, 64>}, {pipeline_mode = #tpu.pipeline_mode<synchronous>, transform_indices = @transform_2, window_bounds = array<i64: 1, 64>}, {pipeline_mode = #tpu.pipeline_mode<synchronous>, transform_indices = @transform_3, window_bounds = array<i64: 64, 64>}, {pipeline_mode = #tpu.pipeline_mode<synchronous>, transform_indices = @transform_4, window_bounds = array<i64: 1, 64>}, {pipeline_mode = #tpu.pipeline_mode<synchronous>, transform_indices = @transform_5, window_bounds = array<i64: 64, 32>}, {pipeline_mode = #tpu.pipeline_mode<synchronous>, transform_indices = @transform_6, window_bounds = array<i64: 1, 32>}, {transform_indices = @transform_7, window_bounds = array<i64: 8, 32>}, {transform_indices = @transform_8, window_bounds = array<i64: 1, 8, 32>}]} {
    %c0 = arith.constant 0 : index
    %c0_0 = arith.constant 0 : index
    %c0_1 = arith.constant 0 : index
    %0 = vector.load %arg2[%c0, %c0_0, %c0_1] : memref<1x8x16xf32, #tpu.memory_space<vmem>>, vector<1x8x16xf32>
    %1 = vector.shape_cast %0 : vector<1x8x16xf32> to vector<8x16xf32>
    %2 = arith.truncf %1 : vector<8x16xf32> to vector<8x16xbf16>
    %c0_2 = arith.constant 0 : index
    %c0_3 = arith.constant 0 : index
    %3 = vector.load %arg3[%c0_2, %c0_3] : memref<16x64xbf16, #tpu.memory_space<vmem>>, vector<16x64xbf16>
    %cst = arith.constant dense<0.000000e+00> : vector<8x64xf32>
    %4 = tpu.matmul %2, %3, %cst {dimension_numbers = #tpu.dot_dimension_numbers<[1], [0], [0], [1], [0, 0, 1, 1], [], []>} : vector<8x16xbf16>, vector<16x64xbf16>, vector<8x64xf32> -> vector<8x64xf32>
    %c0_4 = arith.constant 0 : index
    %c0_5 = arith.constant 0 : index
    %5 = vector.load %arg4[%c0_4, %c0_5] : memref<1x64xf32, #tpu.memory_space<vmem>>, vector<1x64xf32>
    %6 = vector.broadcast %5 : vector<1x64xf32> to vector<8x64xf32>
    %7 = arith.addf %4, %6 : vector<8x64xf32>
    %cst_6 = arith.constant 8.000000e+00 : f32
    %8 = vector.broadcast %cst_6 : f32 to vector<8x64xf32>
    %9 = arith.mulf %7, %8 : vector<8x64xf32>
    %cst_7 = arith.constant 0.000000e+00 : f32
    %10 = vector.broadcast %cst_7 : f32 to vector<8x64xf32>
    %11 = arith.maximumf %9, %10 : vector<8x64xf32>
    %12 = arith.truncf %11 : vector<8x64xf32> to vector<8x64xbf16>
    %c0_8 = arith.constant 0 : index
    %c0_9 = arith.constant 0 : index
    %13 = vector.load %arg5[%c0_8, %c0_9] : memref<64x64xbf16, #tpu.memory_space<vmem>>, vector<64x64xbf16>
    %cst_10 = arith.constant dense<0.000000e+00> : vector<8x64xf32>
    %14 = tpu.matmul %12, %13, %cst_10 {dimension_numbers = #tpu.dot_dimension_numbers<[1], [0], [0], [1], [0, 0, 1, 1], [], []>} : vector<8x64xbf16>, vector<64x64xbf16>, vector<8x64xf32> -> vector<8x64xf32>
    %c0_11 = arith.constant 0 : index
    %c0_12 = arith.constant 0 : index
    %15 = vector.load %arg6[%c0_11, %c0_12] : memref<1x64xf32, #tpu.memory_space<vmem>>, vector<1x64xf32>
    %16 = vector.broadcast %15 : vector<1x64xf32> to vector<8x64xf32>
    %17 = arith.addf %14, %16 : vector<8x64xf32>
    %cst_13 = arith.constant 0.000000e+00 : f32
    %18 = vector.broadcast %cst_13 : f32 to vector<8x64xf32>
    %19 = arith.maximumf %17, %18 : vector<8x64xf32>
    %20 = arith.truncf %19 : vector<8x64xf32> to vector<8x64xbf16>
    %c0_14 = arith.constant 0 : index
    %c0_15 = arith.constant 0 : index
    %21 = vector.load %arg7[%c0_14, %c0_15] : memref<64x32xbf16, #tpu.memory_space<vmem>>, vector<64x32xbf16>
    %cst_16 = arith.constant dense<0.000000e+00> : vector<8x32xf32>
    %22 = tpu.matmul %20, %21, %cst_16 {dimension_numbers = #tpu.dot_dimension_numbers<[1], [0], [0], [1], [0, 0, 1, 1], [], []>} : vector<8x64xbf16>, vector<64x32xbf16>, vector<8x32xf32> -> vector<8x32xf32>
    %c0_17 = arith.constant 0 : index
    %c0_18 = arith.constant 0 : index
    %23 = vector.load %arg8[%c0_17, %c0_18] : memref<1x32xf32, #tpu.memory_space<vmem>>, vector<1x32xf32>
    %24 = vector.broadcast %23 : vector<1x32xf32> to vector<8x32xf32>
    %25 = arith.addf %22, %24 : vector<8x32xf32>
    %c0_19 = arith.constant 0 : index
    %c0_20 = arith.constant 0 : index
    %26 = vector.load %arg9[%c0_19, %c0_20] : memref<8x32xf32, #tpu.memory_space<vmem>>, vector<8x32xf32>
    %27 = arith.addf %25, %26 : vector<8x32xf32>
    %28 = arith.truncf %27 : vector<8x32xf32> to vector<8x32xbf16>
    %c0_21 = arith.constant 0 : index
    %c0_22 = arith.constant 0 : index
    %c0_23 = arith.constant 0 : index
    %29 = vector.load %arg10[%c0_21, %c0_22, %c0_23] : memref<1x8x32xbf16, #tpu.memory_space<vmem>>, vector<1x8x32xbf16>
    %30 = vector.shape_cast %29 : vector<1x8x32xbf16> to vector<8x32xbf16>
    %31 = vector.shape_cast %28 : vector<8x32xbf16> to vector<1x8x32xbf16>
    tpu.vector_store %arg10[%c0_21, %c0_22, %c0_23], %31 {strides = array<i32>} : memref<1x8x32xbf16, #tpu.memory_space<vmem>>, vector<1x8x32xbf16>,
    return
  }
  func.func @transform_0(%arg0: i32, %arg1: i32) -> (i32, i32, i32) {
    %c0_i32 = arith.constant 0 : i32
    %c0_i32_0 = arith.constant 0 : i32
    return %arg0, %arg1, %c0_i32 : i32, i32, i32
  }
  func.func @transform_1(%arg0: i32, %arg1: i32) -> (i32, i32) {
    %c0_i32 = arith.constant 0 : i32
    %c0_i32_0 = arith.constant 0 : i32
    %c0_i32_1 = arith.constant 0 : i32
    return %c0_i32, %c0_i32_0 : i32, i32
  }
  func.func @transform_2(%arg0: i32, %arg1: i32) -> (i32, i32) {
    %c0_i32 = arith.constant 0 : i32
    %c0_i32_0 = arith.constant 0 : i32
    %c0_i32_1 = arith.constant 0 : i32
    return %c0_i32, %c0_i32_0 : i32, i32
  }
  func.func @transform_3(%arg0: i32, %arg1: i32) -> (i32, i32) {
    %c0_i32 = arith.constant 0 : i32
    %c0_i32_0 = arith.constant 0 : i32
    %c0_i32_1 = arith.constant 0 : i32
    return %c0_i32, %c0_i32_0 : i32, i32
  }
  func.func @transform_4(%arg0: i32, %arg1: i32) -> (i32, i32) {
    %c0_i32 = arith.constant 0 : i32
    %c0_i32_0 = arith.constant 0 : i32
    %c0_i32_1 = arith.constant 0 : i32
    return %c0_i32, %c0_i32_0 : i32, i32
  }
  func.func @transform_5(%arg0: i32, %arg1: i32) -> (i32, i32) {
    %c0_i32 = arith.constant 0 : i32
    %c0_i32_0 = arith.constant 0 : i32
    %c0_i32_1 = arith.constant 0 : i32
    return %c0_i32, %c0_i32_0 : i32, i32
  }
  func.func @transform_6(%arg0: i32, %arg1: i32) -> (i32, i32) {
    %c0_i32 = arith.constant 0 : i32
    %c0_i32_0 = arith.constant 0 : i32
    %c0_i32_1 = arith.constant 0 : i32
    return %c0_i32, %c0_i32_0 : i32, i32
  }
  func.func @transform_7(%arg0: i32, %arg1: i32) -> (i32, i32) {
    %c0_i32 = arith.constant 0 : i32
    %c0_i32_0 = arith.constant 0 : i32
    return %arg1, %c0_i32 : i32, i32
  }
  func.func @transform_8(%arg0: i32, %arg1: i32) -> (i32, i32, i32) {
    %c0_i32 = arith.constant 0 : i32
    %c0_i32_0 = arith.constant 0 : i32
    return %arg0, %arg1, %c0_i32 : i32, i32, i32
  }
}

module attributes {stable_mosaic.version = 11 : i64} {
  func.func @_qkv_kernel(%arg0: i32, %arg1: i32, %arg2: memref<1x8x32xbf16, #tpu.memory_space<vmem>>, %arg3: memref<32x96xbf16, #tpu.memory_space<vmem>>, %arg4: memref<1x96xf32, #tpu.memory_space<vmem>>, %arg5: memref<1x4x8x8xbf16, #tpu.memory_space<vmem>>, %arg6: memref<1x4x8x8xbf16, #tpu.memory_space<vmem>>, %arg7: memref<1x4x8x8xbf16, #tpu.memory_space<vmem>>) attributes {dimension_semantics = [#tpu.dimension_semantics<parallel>, #tpu.dimension_semantics<parallel>], iteration_bounds = array<i64: 2, 1>, scalar_prefetch = 0 : i64, scratch_operands = 0 : i64, tpu.core_type = #tpu.core_type<tc>, window_params = [{transform_indices = @transform_0, window_bounds = array<i64: 1, 8, 32>}, {pipeline_mode = #tpu.pipeline_mode<synchronous>, transform_indices = @transform_1, window_bounds = array<i64: 32, 96>}, {pipeline_mode = #tpu.pipeline_mode<synchronous>, transform_indices = @transform_2, window_bounds = array<i64: 1, 96>}, {transform_indices = @transform_3, window_bounds = array<i64: 1, 4, 8, 8>}, {transform_indices = @transform_4, window_bounds = array<i64: 1, 4, 8, 8>}, {transform_indices = @transform_5, window_bounds = array<i64: 1, 4, 8, 8>}]} {
    %c0 = arith.constant 0 : index
    %c0_0 = arith.constant 0 : index
    %c0_1 = arith.constant 0 : index
    %0 = vector.load %arg2[%c0, %c0_0, %c0_1] : memref<1x8x32xbf16, #tpu.memory_space<vmem>>, vector<1x8x32xbf16>
    %1 = vector.shape_cast %0 : vector<1x8x32xbf16> to vector<8x32xbf16>
    %c0_2 = arith.constant 0 : index
    %c0_3 = arith.constant 0 : index
    %2 = vector.load %arg3[%c0_2, %c0_3] : memref<32x96xbf16, #tpu.memory_space<vmem>>, vector<32x96xbf16>
    %cst = arith.constant dense<0.000000e+00> : vector<8x96xf32>
    %3 = tpu.matmul %1, %2, %cst {dimension_numbers = #tpu.dot_dimension_numbers<[1], [0], [0], [1], [0, 0, 1, 1], [], []>} : vector<8x32xbf16>, vector<32x96xbf16>, vector<8x96xf32> -> vector<8x96xf32>
    %c0_4 = arith.constant 0 : index
    %c0_5 = arith.constant 0 : index
    %4 = vector.load %arg4[%c0_4, %c0_5] : memref<1x96xf32, #tpu.memory_space<vmem>>, vector<1x96xf32>
    %5 = vector.broadcast %4 : vector<1x96xf32> to vector<8x96xf32>
    %6 = arith.addf %3, %5 : vector<8x96xf32>
    %7 = vector.extract_strided_slice %6 {offsets = [0, 0], sizes = [8, 8], strides = [1, 1]} : vector<8x96xf32> to vector<8x8xf32>
    %8 = arith.truncf %7 : vector<8x8xf32> to vector<8x8xbf16>
    %c0_6 = arith.constant 0 : index
    %c0_7 = arith.constant 0 : index
    %c0_8 = arith.constant 0 : index
    %c0_9 = arith.constant 0 : index
    %9 = vector.load %arg5[%c0_6, %c0_7, %c0_8, %c0_9] : memref<1x4x8x8xbf16, #tpu.memory_space<vmem>>, vector<1x1x8x8xbf16>
    %10 = vector.shape_cast %9 : vector<1x1x8x8xbf16> to vector<8x8xbf16>
    %11 = vector.shape_cast %8 : vector<8x8xbf16> to vector<1x1x8x8xbf16>
    tpu.vector_store %arg5[%c0_6, %c0_7, %c0_8, %c0_9], %11 {strides = array<i32>} : memref<1x4x8x8xbf16, #tpu.memory_space<vmem>>, vector<1x1x8x8xbf16>,
    %12 = vector.extract_strided_slice %6 {offsets = [0, 32], sizes = [8, 8], strides = [1, 1]} : vector<8x96xf32> to vector<8x8xf32>
    %13 = arith.truncf %12 : vector<8x8xf32> to vector<8x8xbf16>
    %c0_10 = arith.constant 0 : index
    %c0_11 = arith.constant 0 : index
    %c0_12 = arith.constant 0 : index
    %c0_13 = arith.constant 0 : index
    %14 = vector.load %arg6[%c0_10, %c0_11, %c0_12, %c0_13] : memref<1x4x8x8xbf16, #tpu.memory_space<vmem>>, vector<1x1x8x8xbf16>
    %15 = vector.shape_cast %14 : vector<1x1x8x8xbf16> to vector<8x8xbf16>
    %16 = vector.shape_cast %13 : vector<8x8xbf16> to vector<1x1x8x8xbf16>
    tpu.vector_store %arg6[%c0_10, %c0_11, %c0_12, %c0_13], %16 {strides = array<i32>} : memref<1x4x8x8xbf16, #tpu.memory_space<vmem>>, vector<1x1x8x8xbf16>,
    %17 = vector.extract_strided_slice %6 {offsets = [0, 64], sizes = [8, 8], strides = [1, 1]} : vector<8x96xf32> to vector<8x8xf32>
    %18 = arith.truncf %17 : vector<8x8xf32> to vector<8x8xbf16>
    %c0_14 = arith.constant 0 : index
    %c0_15 = arith.constant 0 : index
    %c0_16 = arith.constant 0 : index
    %c0_17 = arith.constant 0 : index
    %19 = vector.load %arg7[%c0_14, %c0_15, %c0_16, %c0_17] : memref<1x4x8x8xbf16, #tpu.memory_space<vmem>>, vector<1x1x8x8xbf16>
    %20 = vector.shape_cast %19 : vector<1x1x8x8xbf16> to vector<8x8xbf16>
    %21 = vector.shape_cast %18 : vector<8x8xbf16> to vector<1x1x8x8xbf16>
    tpu.vector_store %arg7[%c0_14, %c0_15, %c0_16, %c0_17], %21 {strides = array<i32>} : memref<1x4x8x8xbf16, #tpu.memory_space<vmem>>, vector<1x1x8x8xbf16>,
    %22 = vector.extract_strided_slice %6 {offsets = [0, 8], sizes = [8, 8], strides = [1, 1]} : vector<8x96xf32> to vector<8x8xf32>
    %23 = arith.truncf %22 : vector<8x8xf32> to vector<8x8xbf16>
    %c0_18 = arith.constant 0 : index
    %c1 = arith.constant 1 : index
    %c0_19 = arith.constant 0 : index
    %c0_20 = arith.constant 0 : index
    %24 = vector.load %arg5[%c0_18, %c1, %c0_19, %c0_20] : memref<1x4x8x8xbf16, #tpu.memory_space<vmem>>, vector<1x1x8x8xbf16>
    %25 = vector.shape_cast %24 : vector<1x1x8x8xbf16> to vector<8x8xbf16>
    %26 = vector.shape_cast %23 : vector<8x8xbf16> to vector<1x1x8x8xbf16>
    tpu.vector_store %arg5[%c0_18, %c1, %c0_19, %c0_20], %26 {strides = array<i32>} : memref<1x4x8x8xbf16, #tpu.memory_space<vmem>>, vector<1x1x8x8xbf16>,
    %27 = vector.extract_strided_slice %6 {offsets = [0, 40], sizes = [8, 8], strides = [1, 1]} : vector<8x96xf32> to vector<8x8xf32>
    %28 = arith.truncf %27 : vector<8x8xf32> to vector<8x8xbf16>
    %c0_21 = arith.constant 0 : index
    %c1_22 = arith.constant 1 : index
    %c0_23 = arith.constant 0 : index
    %c0_24 = arith.constant 0 : index
    %29 = vector.load %arg6[%c0_21, %c1_22, %c0_23, %c0_24] : memref<1x4x8x8xbf16, #tpu.memory_space<vmem>>, vector<1x1x8x8xbf16>
    %30 = vector.shape_cast %29 : vector<1x1x8x8xbf16> to vector<8x8xbf16>
    %31 = vector.shape_cast %28 : vector<8x8xbf16> to vector<1x1x8x8xbf16>
    tpu.vector_store %arg6[%c0_21, %c1_22, %c0_23, %c0_24], %31 {strides = array<i32>} : memref<1x4x8x8xbf16, #tpu.memory_space<vmem>>, vector<1x1x8x8xbf16>,
    %32 = vector.extract_strided_slice %6 {offsets = [0, 72], sizes = [8, 8], strides = [1, 1]} : vector<8x96xf32> to vector<8x8xf32>
    %33 = arith.truncf %32 : vector<8x8xf32> to vector<8x8xbf16>
    %c0_25 = arith.constant 0 : index
    %c1_26 = arith.constant 1 : index
    %c0_27 = arith.constant 0 : index
    %c0_28 = arith.constant 0 : index
    %34 = vector.load %arg7[%c0_25, %c1_26, %c0_27, %c0_28] : memref<1x4x8x8xbf16, #tpu.memory_space<vmem>>, vector<1x1x8x8xbf16>
    %35 = vector.shape_cast %34 : vector<1x1x8x8xbf16> to vector<8x8xbf16>
    %36 = vector.shape_cast %33 : vector<8x8xbf16> to vector<1x1x8x8xbf16>
    tpu.vector_store %arg7[%c0_25, %c1_26, %c0_27, %c0_28], %36 {strides = array<i32>} : memref<1x4x8x8xbf16, #tpu.memory_space<vmem>>, vector<1x1x8x8xbf16>,
    %37 = vector.extract_strided_slice %6 {offsets = [0, 16], sizes = [8, 8], strides = [1, 1]} : vector<8x96xf32> to vector<8x8xf32>
    %38 = arith.truncf %37 : vector<8x8xf32> to vector<8x8xbf16>
    %c0_29 = arith.constant 0 : index
    %c2 = arith.constant 2 : index
    %c0_30 = arith.constant 0 : index
    %c0_31 = arith.constant 0 : index
    %39 = vector.load %arg5[%c0_29, %c2, %c0_30, %c0_31] : memref<1x4x8x8xbf16, #tpu.memory_space<vmem>>, vector<1x1x8x8xbf16>
    %40 = vector.shape_cast %39 : vector<1x1x8x8xbf16> to vector<8x8xbf16>
    %41 = vector.shape_cast %38 : vector<8x8xbf16> to vector<1x1x8x8xbf16>
    tpu.vector_store %arg5[%c0_29, %c2, %c0_30, %c0_31], %41 {strides = array<i32>} : memref<1x4x8x8xbf16, #tpu.memory_space<vmem>>, vector<1x1x8x8xbf16>,
    %42 = vector.extract_strided_slice %6 {offsets = [0, 48], sizes = [8, 8], strides = [1, 1]} : vector<8x96xf32> to vector<8x8xf32>
    %43 = arith.truncf %42 : vector<8x8xf32> to vector<8x8xbf16>
    %c0_32 = arith.constant 0 : index
    %c2_33 = arith.constant 2 : index
    %c0_34 = arith.constant 0 : index
    %c0_35 = arith.constant 0 : index
    %44 = vector.load %arg6[%c0_32, %c2_33, %c0_34, %c0_35] : memref<1x4x8x8xbf16, #tpu.memory_space<vmem>>, vector<1x1x8x8xbf16>
    %45 = vector.shape_cast %44 : vector<1x1x8x8xbf16> to vector<8x8xbf16>
    %46 = vector.shape_cast %43 : vector<8x8xbf16> to vector<1x1x8x8xbf16>
    tpu.vector_store %arg6[%c0_32, %c2_33, %c0_34, %c0_35], %46 {strides = array<i32>} : memref<1x4x8x8xbf16, #tpu.memory_space<vmem>>, vector<1x1x8x8xbf16>,
    %47 = vector.extract_strided_slice %6 {offsets = [0, 80], sizes = [8, 8], strides = [1, 1]} : vector<8x96xf32> to vector<8x8xf32>
    %48 = arith.truncf %47 : vector<8x8xf32> to vector<8x8xbf16>
    %c0_36 = arith.constant 0 : index
    %c2_37 = arith.constant 2 : index
    %c0_38 = arith.constant 0 : index
    %c0_39 = arith.constant 0 : index
    %49 = vector.load %arg7[%c0_36, %c2_37, %c0_38, %c0_39] : memref<1x4x8x8xbf16, #tpu.memory_space<vmem>>, vector<1x1x8x8xbf16>
    %50 = vector.shape_cast %49 : vector<1x1x8x8xbf16> to vector<8x8xbf16>
    %51 = vector.shape_cast %48 : vector<8x8xbf16> to vector<1x1x8x8xbf16>
    tpu.vector_store %arg7[%c0_36, %c2_37, %c0_38, %c0_39], %51 {strides = array<i32>} : memref<1x4x8x8xbf16, #tpu.memory_space<vmem>>, vector<1x1x8x8xbf16>,
    %52 = vector.extract_strided_slice %6 {offsets = [0, 24], sizes = [8, 8], strides = [1, 1]} : vector<8x96xf32> to vector<8x8xf32>
    %53 = arith.truncf %52 : vector<8x8xf32> to vector<8x8xbf16>
    %c0_40 = arith.constant 0 : index
    %c3 = arith.constant 3 : index
    %c0_41 = arith.constant 0 : index
    %c0_42 = arith.constant 0 : index
    %54 = vector.load %arg5[%c0_40, %c3, %c0_41, %c0_42] : memref<1x4x8x8xbf16, #tpu.memory_space<vmem>>, vector<1x1x8x8xbf16>
    %55 = vector.shape_cast %54 : vector<1x1x8x8xbf16> to vector<8x8xbf16>
    %56 = vector.shape_cast %53 : vector<8x8xbf16> to vector<1x1x8x8xbf16>
    tpu.vector_store %arg5[%c0_40, %c3, %c0_41, %c0_42], %56 {strides = array<i32>} : memref<1x4x8x8xbf16, #tpu.memory_space<vmem>>, vector<1x1x8x8xbf16>,
    %57 = vector.extract_strided_slice %6 {offsets = [0, 56], sizes = [8, 8], strides = [1, 1]} : vector<8x96xf32> to vector<8x8xf32>
    %58 = arith.truncf %57 : vector<8x8xf32> to vector<8x8xbf16>
    %c0_43 = arith.constant 0 : index
    %c3_44 = arith.constant 3 : index
    %c0_45 = arith.constant 0 : index
    %c0_46 = arith.constant 0 : index
    %59 = vector.load %arg6[%c0_43, %c3_44, %c0_45, %c0_46] : memref<1x4x8x8xbf16, #tpu.memory_space<vmem>>, vector<1x1x8x8xbf16>
    %60 = vector.shape_cast %59 : vector<1x1x8x8xbf16> to vector<8x8xbf16>
    %61 = vector.shape_cast %58 : vector<8x8xbf16> to vector<1x1x8x8xbf16>
    tpu.vector_store %arg6[%c0_43, %c3_44, %c0_45, %c0_46], %61 {strides = array<i32>} : memref<1x4x8x8xbf16, #tpu.memory_space<vmem>>, vector<1x1x8x8xbf16>,
    %62 = vector.extract_strided_slice %6 {offsets = [0, 88], sizes = [8, 8], strides = [1, 1]} : vector<8x96xf32> to vector<8x8xf32>
    %63 = arith.truncf %62 : vector<8x8xf32> to vector<8x8xbf16>
    %c0_47 = arith.constant 0 : index
    %c3_48 = arith.constant 3 : index
    %c0_49 = arith.constant 0 : index
    %c0_50 = arith.constant 0 : index
    %64 = vector.load %arg7[%c0_47, %c3_48, %c0_49, %c0_50] : memref<1x4x8x8xbf16, #tpu.memory_space<vmem>>, vector<1x1x8x8xbf16>
    %65 = vector.shape_cast %64 : vector<1x1x8x8xbf16> to vector<8x8xbf16>
    %66 = vector.shape_cast %63 : vector<8x8xbf16> to vector<1x1x8x8xbf16>
    tpu.vector_store %arg7[%c0_47, %c3_48, %c0_49, %c0_50], %66 {strides = array<i32>} : memref<1x4x8x8xbf16, #tpu.memory_space<vmem>>, vector<1x1x8x8xbf16>,
    return
  }
  func.func @transform_0(%arg0: i32, %arg1: i32) -> (i32, i32, i32) {
    %c0_i32 = arith.constant 0 : i32
    %c0_i32_0 = arith.constant 0 : i32
    return %arg0, %arg1, %c0_i32 : i32, i32, i32
  }
  func.func @transform_1(%arg0: i32, %arg1: i32) -> (i32, i32) {
    %c0_i32 = arith.constant 0 : i32
    %c0_i32_0 = arith.constant 0 : i32
    %c0_i32_1 = arith.constant 0 : i32
    return %c0_i32, %c0_i32_0 : i32, i32
  }
  func.func @transform_2(%arg0: i32, %arg1: i32) -> (i32, i32) {
    %c0_i32 = arith.constant 0 : i32
    %c0_i32_0 = arith.constant 0 : i32
    %c0_i32_1 = arith.constant 0 : i32
    return %c0_i32, %c0_i32_0 : i32, i32
  }
  func.func @transform_3(%arg0: i32, %arg1: i32) -> (i32, i32, i32, i32) {
    %c0_i32 = arith.constant 0 : i32
    %c0_i32_0 = arith.constant 0 : i32
    %c0_i32_1 = arith.constant 0 : i32
    return %arg0, %c0_i32, %arg1, %c0_i32_0 : i32, i32, i32, i32
  }
  func.func @transform_4(%arg0: i32, %arg1: i32) -> (i32, i32, i32, i32) {
    %c0_i32 = arith.constant 0 : i32
    %c0_i32_0 = arith.constant 0 : i32
    %c0_i32_1 = arith.constant 0 : i32
    return %arg0, %c0_i32, %arg1, %c0_i32_0 : i32, i32, i32, i32
  }
  func.func @transform_5(%arg0: i32, %arg1: i32) -> (i32, i32, i32, i32) {
    %c0_i32 = arith.constant 0 : i32
    %c0_i32_0 = arith.constant 0 : i32
    %c0_i32_1 = arith.constant 0 : i32
    return %arg0, %c0_i32, %arg1, %c0_i32_0 : i32, i32, i32, i32
  }
}

module attributes {stable_mosaic.version = 11 : i64} {
  func.func @_flash_kernel(%arg0: i32, %arg1: i32, %arg2: i32, %arg3: i32, %arg4: memref<1x1x8xf32, #tpu.memory_space<vmem>>, %arg5: memref<1x1x8x8xbf16, #tpu.memory_space<vmem>>, %arg6: memref<1x1x8x8xbf16, #tpu.memory_space<vmem>>, %arg7: memref<1x1x8x8xbf16, #tpu.memory_space<vmem>>, %arg8: memref<1x1x8x8xbf16, #tpu.memory_space<vmem>>, %arg9: memref<8x1xf32, #tpu.memory_space<vmem>>, %arg10: memref<8x1xf32, #tpu.memory_space<vmem>>, %arg11: memref<8x8xf32, #tpu.memory_space<vmem>>) attributes {dimension_semantics = [#tpu.dimension_semantics<parallel>, #tpu.dimension_semantics<parallel>, #tpu.dimension_semantics<parallel>, #tpu.dimension_semantics<arbitrary>], iteration_bounds = array<i64: 2, 4, 1, 1>, scalar_prefetch = 0 : i64, scratch_operands = 3 : i64, tpu.core_type = #tpu.core_type<tc>, window_params = [{transform_indices = @transform_0, window_bounds = array<i64: 1, 1, 8>}, {transform_indices = @transform_1, window_bounds = array<i64: 1, 1, 8, 8>}, {transform_indices = @transform_2, window_bounds = array<i64: 1, 1, 8, 8>}, {transform_indices = @transform_3, window_bounds = array<i64: 1, 1, 8, 8>}, {transform_indices = @transform_4, window_bounds = array<i64: 1, 1, 8, 8>}]} {
    %c0_i32 = arith.constant 0 : i32
    %0 = arith.cmpi eq, %arg3, %c0_i32 : i32
    %1 = arith.extui %0 : i1 to i32
    %c0_i32_0 = arith.constant 0 : i32
    %2 = arith.cmpi ne, %1, %c0_i32_0 : i32
    scf.if %2 {
      %cst_33 = arith.constant 0xFF800000 : f32
      %42 = vector.broadcast %cst_33 : f32 to vector<8x1xf32>
      %c0_34 = arith.constant 0 : index
      %c0_35 = arith.constant 0 : index
      %43 = vector.load %arg9[%c0_34, %c0_35] : memref<8x1xf32, #tpu.memory_space<vmem>>, vector<8x1xf32>
      tpu.vector_store %arg9[%c0_34, %c0_35], %42 {strides = array<i32>} : memref<8x1xf32, #tpu.memory_space<vmem>>, vector<8x1xf32>,
      %cst_36 = arith.constant 0.000000e+00 : f32
      %44 = vector.broadcast %cst_36 : f32 to vector<8x1xf32>
      %c0_37 = arith.constant 0 : index
      %c0_38 = arith.constant 0 : index
      %45 = vector.load %arg10[%c0_37, %c0_38] : memref<8x1xf32, #tpu.memory_space<vmem>>, vector<8x1xf32>
      tpu.vector_store %arg10[%c0_37, %c0_38], %44 {strides = array<i32>} : memref<8x1xf32, #tpu.memory_space<vmem>>, vector<8x1xf32>,
      %cst_39 = arith.constant 0.000000e+00 : f32
      %46 = vector.broadcast %cst_39 : f32 to vector<8x8xf32>
      %c0_40 = arith.constant 0 : index
      %c0_41 = arith.constant 0 : index
      %47 = vector.load %arg11[%c0_40, %c0_41] : memref<8x8xf32, #tpu.memory_space<vmem>>, vector<8x8xf32>
      tpu.vector_store %arg11[%c0_40, %c0_41], %46 {strides = array<i32>} : memref<8x8xf32, #tpu.memory_space<vmem>>, vector<8x8xf32>,
    } else {
    }
    %c0 = arith.constant 0 : index
    %c0_1 = arith.constant 0 : index
    %c0_2 = arith.constant 0 : index
    %c0_3 = arith.constant 0 : index
    %3 = vector.load %arg5[%c0, %c0_1, %c0_2, %c0_3] : memref<1x1x8x8xbf16, #tpu.memory_space<vmem>>, vector<1x1x8x8xbf16>
    %4 = vector.shape_cast %3 : vector<1x1x8x8xbf16> to vector<8x8xbf16>
    %c0_4 = arith.constant 0 : index
    %c0_5 = arith.constant 0 : index
    %c0_6 = arith.constant 0 : index
    %c0_7 = arith.constant 0 : index
    %5 = vector.load %arg6[%c0_4, %c0_5, %c0_6, %c0_7] : memref<1x1x8x8xbf16, #tpu.memory_space<vmem>>, vector<1x1x8x8xbf16>
    %6 = vector.shape_cast %5 : vector<1x1x8x8xbf16> to vector<8x8xbf16>
    %c0_8 = arith.constant 0 : index
    %c0_9 = arith.constant 0 : index
    %c0_10 = arith.constant 0 : index
    %c0_11 = arith.constant 0 : index
    %7 = vector.load %arg7[%c0_8, %c0_9, %c0_10, %c0_11] : memref<1x1x8x8xbf16, #tpu.memory_space<vmem>>, vector<1x1x8x8xbf16>
    %8 = vector.shape_cast %7 : vector<1x1x8x8xbf16> to vector<8x8xbf16>
    %cst = arith.constant dense<0.000000e+00> : vector<8x8xf32>
    %9 = tpu.matmul %4, %6, %cst {dimension_numbers = #tpu.dot_dimension_numbers<[1], [1], [0], [0], [0, 0, 1, 0], [], []>} : vector<8x8xbf16>, vector<8x8xbf16>, vector<8x8xf32> -> vector<8x8xf32>
    %cst_12 = arith.constant 0.353553385 : f32
    %10 = vector.broadcast %cst_12 : f32 to vector<8x8xf32>
    %11 = arith.mulf %9, %10 : vector<8x8xf32>
    %c0_13 = arith.constant 0 : index
    %c0_14 = arith.constant 0 : index
    %c0_15 = arith.constant 0 : index
    %12 = vector.load %arg4[%c0_13, %c0_14, %c0_15] : memref<1x1x8xf32, #tpu.memory_space<vmem>>, vector<1x1x8xf32>
    %13 = vector.shape_cast %12 : vector<1x1x8xf32> to vector<1x8xf32>
    %14 = vector.broadcast %13 : vector<1x8xf32> to vector<8x8xf32>
    %15 = arith.addf %11, %14 : vector<8x8xf32>
    %c0_16 = arith.constant 0 : index
    %c0_17 = arith.constant 0 : index
    %16 = vector.load %arg9[%c0_16, %c0_17] : memref<8x1xf32, #tpu.memory_space<vmem>>, vector<8x1xf32>
    %cst_18 = arith.constant dense<0xFF800000> : vector<8xf32>
    %17 = vector.multi_reduction <maximumf>, %15, %cst_18 [1] : vector<8x8xf32> to vector<8xf32>
    %18 = vector.shape_cast %17 : vector<8xf32> to vector<8x1xf32>
    %19 = arith.maximumf %16, %18 : vector<8x1xf32>
    %20 = arith.subf %16, %19 : vector<8x1xf32>
    %21 = math.exp %20 : vector<8x1xf32>
    %22 = vector.broadcast %19 : vector<8x1xf32> to vector<8x8xf32>
    %23 = arith.subf %15, %22 : vector<8x8xf32>
    %24 = math.exp %23 : vector<8x8xf32>
    %c0_19 = arith.constant 0 : index
    %c0_20 = arith.constant 0 : index
    %25 = vector.load %arg10[%c0_19, %c0_20] : memref<8x1xf32, #tpu.memory_space<vmem>>, vector<8x1xf32>
    %26 = arith.mulf %21, %25 : vector<8x1xf32>
    %cst_21 = arith.constant dense<0.000000e+00> : vector<8xf32>
    %27 = vector.multi_reduction <add>, %24, %cst_21 [1] : vector<8x8xf32> to vector<8xf32>
    %28 = vector.shape_cast %27 : vector<8xf32> to vector<8x1xf32>
    %29 = arith.addf %26, %28 : vector<8x1xf32>
    %c0_22 = arith.constant 0 : index
    %c0_23 = arith.constant 0 : index
    %30 = vector.load %arg10[%c0_22, %c0_23] : memref<8x1xf32, #tpu.memory_space<vmem>>, vector<8x1xf32>
    tpu.vector_store %arg10[%c0_22, %c0_23], %29 {strides = array<i32>} : memref<8x1xf32, #tpu.memory_space<vmem>>, vector<8x1xf32>,
    %c0_24 = arith.constant 0 : index
    %c0_25 = arith.constant 0 : index
    %31 = vector.load %arg11[%c0_24, %c0_25] : memref<8x8xf32, #tpu.memory_space<vmem>>, vector<8x8xf32>
    %32 = vector.broadcast %21 : vector<8x1xf32> to vector<8x8xf32>
    %33 = arith.mulf %32, %31 : vector<8x8xf32>
    %34 = arith.truncf %24 : vector<8x8xf32> to vector<8x8xbf16>
    %cst_26 = arith.constant dense<0.000000e+00> : vector<8x8xf32>
    %35 = tpu.matmul %34, %8, %cst_26 {dimension_numbers = #tpu.dot_dimension_numbers<[1], [0], [0], [1], [0, 0, 1, 1], [], []>} : vector<8x8xbf16>, vector<8x8xbf16>, vector<8x8xf32> -> vector<8x8xf32>
    %36 = arith.addf %33, %35 : vector<8x8xf32>
    %c0_27 = arith.constant 0 : index
    %c0_28 = arith.constant 0 : index
    %37 = vector.load %arg11[%c0_27, %c0_28] : memref<8x8xf32, #tpu.memory_space<vmem>>, vector<8x8xf32>
    tpu.vector_store %arg11[%c0_27, %c0_28], %36 {strides = array<i32>} : memref<8x8xf32, #tpu.memory_space<vmem>>, vector<8x8xf32>,
    %c0_29 = arith.constant 0 : index
    %c0_30 = arith.constant 0 : index
    %38 = vector.load %arg9[%c0_29, %c0_30] : memref<8x1xf32, #tpu.memory_space<vmem>>, vector<8x1xf32>
    tpu.vector_store %arg9[%c0_29, %c0_30], %19 {strides = array<i32>} : memref<8x1xf32, #tpu.memory_space<vmem>>, vector<8x1xf32>,
    %c0_i32_31 = arith.constant 0 : i32
    %39 = arith.cmpi eq, %arg3, %c0_i32_31 : i32
    %40 = arith.extui %39 : i1 to i32
    %c0_i32_32 = arith.constant 0 : i32
    %41 = arith.cmpi ne, %40, %c0_i32_32 : i32
    scf.if %41 {
      %c0_33 = arith.constant 0 : index
      %c0_34 = arith.constant 0 : index
      %42 = vector.load %arg10[%c0_33, %c0_34] : memref<8x1xf32, #tpu.memory_space<vmem>>, vector<8x1xf32>
      %43 = tpu.reciprocal %42 {approx = true} : vector<8x1xf32> -> vector<8x1xf32>
      %c0_35 = arith.constant 0 : index
      %c0_36 = arith.constant 0 : index
      %44 = vector.load %arg11[%c0_35, %c0_36] : memref<8x8xf32, #tpu.memory_space<vmem>>, vector<8x8xf32>
      %45 = vector.broadcast %43 : vector<8x1xf32> to vector<8x8xf32>
      %46 = arith.mulf %44, %45 : vector<8x8xf32>
      %47 = arith.truncf %46 : vector<8x8xf32> to vector<8x8xbf16>
      %c0_37 = arith.constant 0 : index
      %c0_38 = arith.constant 0 : index
      %c0_39 = arith.constant 0 : index
      %c0_40 = arith.constant 0 : index
      %48 = vector.load %arg8[%c0_37, %c0_38, %c0_39, %c0_40] : memref<1x1x8x8xbf16, #tpu.memory_space<vmem>>, vector<1x1x8x8xbf16>
      %49 = vector.shape_cast %48 : vector<1x1x8x8xbf16> to vector<8x8xbf16>
      %50 = vector.shape_cast %47 : vector<8x8xbf16> to vector<1x1x8x8xbf16>
      tpu.vector_store %arg8[%c0_37, %c0_38, %c0_39, %c0_40], %50 {strides = array<i32>} : memref<1x1x8x8xbf16, #tpu.memory_space<vmem>>, vector<1x1x8x8xbf16>,
    } else {
    }
    return
  }
  func.func @transform_0(%arg0: i32, %arg1: i32, %arg2: i32, %arg3: i32) -> (i32, i32, i32) {
    %c0_i32 = arith.constant 0 : i32
    %c0_i32_0 = arith.constant 0 : i32
    return %arg0, %c0_i32, %arg3 : i32, i32, i32
  }
  func.func @transform_1(%arg0: i32, %arg1: i32, %arg2: i32, %arg3: i32) -> (i32, i32, i32, i32) {
    %c0_i32 = arith.constant 0 : i32
    %c0_i32_0 = arith.constant 0 : i32
    return %arg0, %arg1, %arg2, %c0_i32 : i32, i32, i32, i32
  }
  func.func @transform_2(%arg0: i32, %arg1: i32, %arg2: i32, %arg3: i32) -> (i32, i32, i32, i32) {
    %c0_i32 = arith.constant 0 : i32
    %c0_i32_0 = arith.constant 0 : i32
    return %arg0, %arg1, %arg3, %c0_i32 : i32, i32, i32, i32
  }
  func.func @transform_3(%arg0: i32, %arg1: i32, %arg2: i32, %arg3: i32) -> (i32, i32, i32, i32) {
    %c0_i32 = arith.constant 0 : i32
    %c0_i32_0 = arith.constant 0 : i32
    return %arg0, %arg1, %arg3, %c0_i32 : i32, i32, i32, i32
  }
  func.func @transform_4(%arg0: i32, %arg1: i32, %arg2: i32, %arg3: i32) -> (i32, i32, i32, i32) {
    %c0_i32 = arith.constant 0 : i32
    %c0_i32_0 = arith.constant 0 : i32
    return %arg0, %arg1, %arg2, %c0_i32 : i32, i32, i32, i32
  }
}

module attributes {stable_mosaic.version = 11 : i64} {
  func.func @_outproj_ln_kernel(%arg0: i32, %arg1: i32, %arg2: memref<1x4x8x8xbf16, #tpu.memory_space<vmem>>, %arg3: memref<4x8x32xbf16, #tpu.memory_space<vmem>>, %arg4: memref<1x32xf32, #tpu.memory_space<vmem>>, %arg5: memref<1x8x32xbf16, #tpu.memory_space<vmem>>, %arg6: memref<1x32xf32, #tpu.memory_space<vmem>>, %arg7: memref<1x32xf32, #tpu.memory_space<vmem>>, %arg8: memref<1x8x32xbf16, #tpu.memory_space<vmem>>) attributes {dimension_semantics = [#tpu.dimension_semantics<parallel>, #tpu.dimension_semantics<parallel>], iteration_bounds = array<i64: 2, 1>, scalar_prefetch = 0 : i64, scratch_operands = 0 : i64, tpu.core_type = #tpu.core_type<tc>, window_params = [{transform_indices = @transform_0, window_bounds = array<i64: 1, 4, 8, 8>}, {pipeline_mode = #tpu.pipeline_mode<synchronous>, transform_indices = @transform_1, window_bounds = array<i64: 4, 8, 32>}, {pipeline_mode = #tpu.pipeline_mode<synchronous>, transform_indices = @transform_2, window_bounds = array<i64: 1, 32>}, {transform_indices = @transform_3, window_bounds = array<i64: 1, 8, 32>}, {pipeline_mode = #tpu.pipeline_mode<synchronous>, transform_indices = @transform_4, window_bounds = array<i64: 1, 32>}, {pipeline_mode = #tpu.pipeline_mode<synchronous>, transform_indices = @transform_5, window_bounds = array<i64: 1, 32>}, {transform_indices = @transform_6, window_bounds = array<i64: 1, 8, 32>}]} {
    %cst = arith.constant 0.000000e+00 : f32
    %0 = vector.broadcast %cst : f32 to vector<8x32xf32>
    %c0 = arith.constant 0 : index
    %c0_0 = arith.constant 0 : index
    %c0_1 = arith.constant 0 : index
    %c0_2 = arith.constant 0 : index
    %1 = vector.load %arg2[%c0, %c0_0, %c0_1, %c0_2] : memref<1x4x8x8xbf16, #tpu.memory_space<vmem>>, vector<1x1x8x8xbf16>
    %2 = vector.shape_cast %1 : vector<1x1x8x8xbf16> to vector<8x8xbf16>
    %c0_3 = arith.constant 0 : index
    %c0_4 = arith.constant 0 : index
    %c0_5 = arith.constant 0 : index
    %3 = vector.load %arg3[%c0_3, %c0_4, %c0_5] : memref<4x8x32xbf16, #tpu.memory_space<vmem>>, vector<1x8x32xbf16>
    %4 = vector.shape_cast %3 : vector<1x8x32xbf16> to vector<8x32xbf16>
    %cst_6 = arith.constant dense<0.000000e+00> : vector<8x32xf32>
    %5 = tpu.matmul %2, %4, %cst_6 {dimension_numbers = #tpu.dot_dimension_numbers<[1], [0], [0], [1], [0, 0, 1, 1], [], []>} : vector<8x8xbf16>, vector<8x32xbf16>, vector<8x32xf32> -> vector<8x32xf32>
    %6 = arith.addf %0, %5 : vector<8x32xf32>
    %c0_7 = arith.constant 0 : index
    %c1 = arith.constant 1 : index
    %c0_8 = arith.constant 0 : index
    %c0_9 = arith.constant 0 : index
    %7 = vector.load %arg2[%c0_7, %c1, %c0_8, %c0_9] : memref<1x4x8x8xbf16, #tpu.memory_space<vmem>>, vector<1x1x8x8xbf16>
    %8 = vector.shape_cast %7 : vector<1x1x8x8xbf16> to vector<8x8xbf16>
    %c1_10 = arith.constant 1 : index
    %c0_11 = arith.constant 0 : index
    %c0_12 = arith.constant 0 : index
    %9 = vector.load %arg3[%c1_10, %c0_11, %c0_12] : memref<4x8x32xbf16, #tpu.memory_space<vmem>>, vector<1x8x32xbf16>
    %10 = vector.shape_cast %9 : vector<1x8x32xbf16> to vector<8x32xbf16>
    %cst_13 = arith.constant dense<0.000000e+00> : vector<8x32xf32>
    %11 = tpu.matmul %8, %10, %cst_13 {dimension_numbers = #tpu.dot_dimension_numbers<[1], [0], [0], [1], [0, 0, 1, 1], [], []>} : vector<8x8xbf16>, vector<8x32xbf16>, vector<8x32xf32> -> vector<8x32xf32>
    %12 = arith.addf %6, %11 : vector<8x32xf32>
    %c0_14 = arith.constant 0 : index
    %c2 = arith.constant 2 : index
    %c0_15 = arith.constant 0 : index
    %c0_16 = arith.constant 0 : index
    %13 = vector.load %arg2[%c0_14, %c2, %c0_15, %c0_16] : memref<1x4x8x8xbf16, #tpu.memory_space<vmem>>, vector<1x1x8x8xbf16>
    %14 = vector.shape_cast %13 : vector<1x1x8x8xbf16> to vector<8x8xbf16>
    %c2_17 = arith.constant 2 : index
    %c0_18 = arith.constant 0 : index
    %c0_19 = arith.constant 0 : index
    %15 = vector.load %arg3[%c2_17, %c0_18, %c0_19] : memref<4x8x32xbf16, #tpu.memory_space<vmem>>, vector<1x8x32xbf16>
    %16 = vector.shape_cast %15 : vector<1x8x32xbf16> to vector<8x32xbf16>
    %cst_20 = arith.constant dense<0.000000e+00> : vector<8x32xf32>
    %17 = tpu.matmul %14, %16, %cst_20 {dimension_numbers = #tpu.dot_dimension_numbers<[1], [0], [0], [1], [0, 0, 1, 1], [], []>} : vector<8x8xbf16>, vector<8x32xbf16>, vector<8x32xf32> -> vector<8x32xf32>
    %18 = arith.addf %12, %17 : vector<8x32xf32>
    %c0_21 = arith.constant 0 : index
    %c3 = arith.constant 3 : index
    %c0_22 = arith.constant 0 : index
    %c0_23 = arith.constant 0 : index
    %19 = vector.load %arg2[%c0_21, %c3, %c0_22, %c0_23] : memref<1x4x8x8xbf16, #tpu.memory_space<vmem>>, vector<1x1x8x8xbf16>
    %20 = vector.shape_cast %19 : vector<1x1x8x8xbf16> to vector<8x8xbf16>
    %c3_24 = arith.constant 3 : index
    %c0_25 = arith.constant 0 : index
    %c0_26 = arith.constant 0 : index
    %21 = vector.load %arg3[%c3_24, %c0_25, %c0_26] : memref<4x8x32xbf16, #tpu.memory_space<vmem>>, vector<1x8x32xbf16>
    %22 = vector.shape_cast %21 : vector<1x8x32xbf16> to vector<8x32xbf16>
    %cst_27 = arith.constant dense<0.000000e+00> : vector<8x32xf32>
    %23 = tpu.matmul %20, %22, %cst_27 {dimension_numbers = #tpu.dot_dimension_numbers<[1], [0], [0], [1], [0, 0, 1, 1], [], []>} : vector<8x8xbf16>, vector<8x32xbf16>, vector<8x32xf32> -> vector<8x32xf32>
    %24 = arith.addf %18, %23 : vector<8x32xf32>
    %c0_28 = arith.constant 0 : index
    %c0_29 = arith.constant 0 : index
    %25 = vector.load %arg4[%c0_28, %c0_29] : memref<1x32xf32, #tpu.memory_space<vmem>>, vector<1x32xf32>
    %26 = vector.broadcast %25 : vector<1x32xf32> to vector<8x32xf32>
    %27 = arith.addf %24, %26 : vector<8x32xf32>
    %c0_30 = arith.constant 0 : index
    %c0_31 = arith.constant 0 : index
    %c0_32 = arith.constant 0 : index
    %28 = vector.load %arg5[%c0_30, %c0_31, %c0_32] : memref<1x8x32xbf16, #tpu.memory_space<vmem>>, vector<1x8x32xbf16>
    %29 = vector.shape_cast %28 : vector<1x8x32xbf16> to vector<8x32xbf16>
    %30 = arith.extf %29 : vector<8x32xbf16> to vector<8x32xf32>
    %31 = arith.addf %27, %30 : vector<8x32xf32>
    %c0_33 = arith.constant 0 : index
    %c0_34 = arith.constant 0 : index
    %32 = vector.load %arg6[%c0_33, %c0_34] : memref<1x32xf32, #tpu.memory_space<vmem>>, vector<1x32xf32>
    %c0_35 = arith.constant 0 : index
    %c0_36 = arith.constant 0 : index
    %33 = vector.load %arg7[%c0_35, %c0_36] : memref<1x32xf32, #tpu.memory_space<vmem>>, vector<1x32xf32>
    %cst_37 = arith.constant dense<0.000000e+00> : vector<8xf32>
    %34 = vector.multi_reduction <add>, %31, %cst_37 [1] : vector<8x32xf32> to vector<8xf32>
    %35 = vector.shape_cast %34 : vector<8xf32> to vector<8x1xf32>
    %cst_38 = arith.constant 3.200000e+01 : f32
    %36 = vector.broadcast %cst_38 : f32 to vector<8x1xf32>
    %37 = arith.divf %35, %36 : vector<8x1xf32>
    %38 = vector.broadcast %37 : vector<8x1xf32> to vector<8x32xf32>
    %39 = arith.subf %31, %38 : vector<8x32xf32>
    %40 = arith.mulf %39, %39 : vector<8x32xf32>
    %cst_39 = arith.constant dense<0.000000e+00> : vector<8xf32>
    %41 = vector.multi_reduction <add>, %40, %cst_39 [1] : vector<8x32xf32> to vector<8xf32>
    %42 = vector.shape_cast %41 : vector<8xf32> to vector<8x1xf32>
    %cst_40 = arith.constant 3.200000e+01 : f32
    %43 = vector.broadcast %cst_40 : f32 to vector<8x1xf32>
    %44 = arith.divf %42, %43 : vector<8x1xf32>
    %cst_41 = arith.constant 9.99999974E-6 : f32
    %45 = vector.broadcast %cst_41 : f32 to vector<8x1xf32>
    %46 = arith.addf %44, %45 : vector<8x1xf32>
    %47 = math.rsqrt %46 : vector<8x1xf32>
    %48 = vector.broadcast %47 : vector<8x1xf32> to vector<8x32xf32>
    %49 = arith.mulf %39, %48 : vector<8x32xf32>
    %50 = vector.broadcast %32 : vector<1x32xf32> to vector<8x32xf32>
    %51 = arith.mulf %49, %50 : vector<8x32xf32>
    %52 = vector.broadcast %33 : vector<1x32xf32> to vector<8x32xf32>
    %53 = arith.addf %51, %52 : vector<8x32xf32>
    %54 = arith.truncf %53 : vector<8x32xf32> to vector<8x32xbf16>
    %c0_42 = arith.constant 0 : index
    %c0_43 = arith.constant 0 : index
    %c0_44 = arith.constant 0 : index
    %55 = vector.load %arg8[%c0_42, %c0_43, %c0_44] : memref<1x8x32xbf16, #tpu.memory_space<vmem>>, vector<1x8x32xbf16>
    %56 = vector.shape_cast %55 : vector<1x8x32xbf16> to vector<8x32xbf16>
    %57 = vector.shape_cast %54 : vector<8x32xbf16> to vector<1x8x32xbf16>
    tpu.vector_store %arg8[%c0_42, %c0_43, %c0_44], %57 {strides = array<i32>} : memref<1x8x32xbf16, #tpu.memory_space<vmem>>, vector<1x8x32xbf16>,
    return
  }
  func.func @transform_0(%arg0: i32, %arg1: i32) -> (i32, i32, i32, i32) {
    %c0_i32 = arith.constant 0 : i32
    %c0_i32_0 = arith.constant 0 : i32
    %c0_i32_1 = arith.constant 0 : i32
    return %arg0, %c0_i32, %arg1, %c0_i32_0 : i32, i32, i32, i32
  }
  func.func @transform_1(%arg0: i32, %arg1: i32) -> (i32, i32, i32) {
    %c0_i32 = arith.constant 0 : i32
    %c0_i32_0 = arith.constant 0 : i32
    %c0_i32_1 = arith.constant 0 : i32
    %c0_i32_2 = arith.constant 0 : i32
    return %c0_i32, %c0_i32_0, %c0_i32_1 : i32, i32, i32
  }
  func.func @transform_2(%arg0: i32, %arg1: i32) -> (i32, i32) {
    %c0_i32 = arith.constant 0 : i32
    %c0_i32_0 = arith.constant 0 : i32
    %c0_i32_1 = arith.constant 0 : i32
    return %c0_i32, %c0_i32_0 : i32, i32
  }
  func.func @transform_3(%arg0: i32, %arg1: i32) -> (i32, i32, i32) {
    %c0_i32 = arith.constant 0 : i32
    %c0_i32_0 = arith.constant 0 : i32
    return %arg0, %arg1, %c0_i32 : i32, i32, i32
  }
  func.func @transform_4(%arg0: i32, %arg1: i32) -> (i32, i32) {
    %c0_i32 = arith.constant 0 : i32
    %c0_i32_0 = arith.constant 0 : i32
    %c0_i32_1 = arith.constant 0 : i32
    return %c0_i32, %c0_i32_0 : i32, i32
  }
  func.func @transform_5(%arg0: i32, %arg1: i32) -> (i32, i32) {
    %c0_i32 = arith.constant 0 : i32
    %c0_i32_0 = arith.constant 0 : i32
    %c0_i32_1 = arith.constant 0 : i32
    return %c0_i32, %c0_i32_0 : i32, i32
  }
  func.func @transform_6(%arg0: i32, %arg1: i32) -> (i32, i32, i32) {
    %c0_i32 = arith.constant 0 : i32
    %c0_i32_0 = arith.constant 0 : i32
    return %arg0, %arg1, %c0_i32 : i32, i32, i32
  }
}

module attributes {stable_mosaic.version = 11 : i64} {
  func.func @_ffn_ln_kernel(%arg0: i32, %arg1: memref<16x32xbf16, #tpu.memory_space<vmem>>, %arg2: memref<32x64xbf16, #tpu.memory_space<vmem>>, %arg3: memref<1x64xf32, #tpu.memory_space<vmem>>, %arg4: memref<64x32xbf16, #tpu.memory_space<vmem>>, %arg5: memref<1x32xf32, #tpu.memory_space<vmem>>, %arg6: memref<1x32xf32, #tpu.memory_space<vmem>>, %arg7: memref<1x32xf32, #tpu.memory_space<vmem>>, %arg8: memref<16x32xbf16, #tpu.memory_space<vmem>>) attributes {dimension_semantics = [#tpu.dimension_semantics<parallel>], iteration_bounds = array<i64: 1>, scalar_prefetch = 0 : i64, scratch_operands = 0 : i64, tpu.core_type = #tpu.core_type<tc>, window_params = [{transform_indices = @transform_0, window_bounds = array<i64: 16, 32>}, {pipeline_mode = #tpu.pipeline_mode<synchronous>, transform_indices = @transform_1, window_bounds = array<i64: 32, 64>}, {pipeline_mode = #tpu.pipeline_mode<synchronous>, transform_indices = @transform_2, window_bounds = array<i64: 1, 64>}, {pipeline_mode = #tpu.pipeline_mode<synchronous>, transform_indices = @transform_3, window_bounds = array<i64: 64, 32>}, {pipeline_mode = #tpu.pipeline_mode<synchronous>, transform_indices = @transform_4, window_bounds = array<i64: 1, 32>}, {pipeline_mode = #tpu.pipeline_mode<synchronous>, transform_indices = @transform_5, window_bounds = array<i64: 1, 32>}, {pipeline_mode = #tpu.pipeline_mode<synchronous>, transform_indices = @transform_6, window_bounds = array<i64: 1, 32>}, {transform_indices = @transform_7, window_bounds = array<i64: 16, 32>}]} {
    %c0 = arith.constant 0 : index
    %c0_0 = arith.constant 0 : index
    %0 = vector.load %arg1[%c0, %c0_0] : memref<16x32xbf16, #tpu.memory_space<vmem>>, vector<16x32xbf16>
    %c0_1 = arith.constant 0 : index
    %c0_2 = arith.constant 0 : index
    %1 = vector.load %arg2[%c0_1, %c0_2] : memref<32x64xbf16, #tpu.memory_space<vmem>>, vector<32x64xbf16>
    %cst = arith.constant dense<0.000000e+00> : vector<16x64xf32>
    %2 = tpu.matmul %0, %1, %cst {dimension_numbers = #tpu.dot_dimension_numbers<[1], [0], [0], [1], [0, 0, 1, 1], [], []>} : vector<16x32xbf16>, vector<32x64xbf16>, vector<16x64xf32> -> vector<16x64xf32>
    %c0_3 = arith.constant 0 : index
    %c0_4 = arith.constant 0 : index
    %3 = vector.load %arg3[%c0_3, %c0_4] : memref<1x64xf32, #tpu.memory_space<vmem>>, vector<1x64xf32>
    %4 = vector.broadcast %3 : vector<1x64xf32> to vector<16x64xf32>
    %5 = arith.addf %2, %4 : vector<16x64xf32>
    %cst_5 = arith.constant 0.000000e+00 : f32
    %6 = vector.broadcast %cst_5 : f32 to vector<16x64xf32>
    %7 = arith.maximumf %5, %6 : vector<16x64xf32>
    %8 = arith.truncf %7 : vector<16x64xf32> to vector<16x64xbf16>
    %c0_6 = arith.constant 0 : index
    %c0_7 = arith.constant 0 : index
    %9 = vector.load %arg4[%c0_6, %c0_7] : memref<64x32xbf16, #tpu.memory_space<vmem>>, vector<64x32xbf16>
    %cst_8 = arith.constant dense<0.000000e+00> : vector<16x32xf32>
    %10 = tpu.matmul %8, %9, %cst_8 {dimension_numbers = #tpu.dot_dimension_numbers<[1], [0], [0], [1], [0, 0, 1, 1], [], []>} : vector<16x64xbf16>, vector<64x32xbf16>, vector<16x32xf32> -> vector<16x32xf32>
    %c0_9 = arith.constant 0 : index
    %c0_10 = arith.constant 0 : index
    %11 = vector.load %arg5[%c0_9, %c0_10] : memref<1x32xf32, #tpu.memory_space<vmem>>, vector<1x32xf32>
    %12 = vector.broadcast %11 : vector<1x32xf32> to vector<16x32xf32>
    %13 = arith.addf %10, %12 : vector<16x32xf32>
    %14 = arith.extf %0 : vector<16x32xbf16> to vector<16x32xf32>
    %15 = arith.addf %13, %14 : vector<16x32xf32>
    %c0_11 = arith.constant 0 : index
    %c0_12 = arith.constant 0 : index
    %16 = vector.load %arg6[%c0_11, %c0_12] : memref<1x32xf32, #tpu.memory_space<vmem>>, vector<1x32xf32>
    %c0_13 = arith.constant 0 : index
    %c0_14 = arith.constant 0 : index
    %17 = vector.load %arg7[%c0_13, %c0_14] : memref<1x32xf32, #tpu.memory_space<vmem>>, vector<1x32xf32>
    %cst_15 = arith.constant dense<0.000000e+00> : vector<16xf32>
    %18 = vector.multi_reduction <add>, %15, %cst_15 [1] : vector<16x32xf32> to vector<16xf32>
    %19 = vector.shape_cast %18 : vector<16xf32> to vector<16x1xf32>
    %cst_16 = arith.constant 3.200000e+01 : f32
    %20 = vector.broadcast %cst_16 : f32 to vector<16x1xf32>
    %21 = arith.divf %19, %20 : vector<16x1xf32>
    %22 = vector.broadcast %21 : vector<16x1xf32> to vector<16x32xf32>
    %23 = arith.subf %15, %22 : vector<16x32xf32>
    %24 = arith.mulf %23, %23 : vector<16x32xf32>
    %cst_17 = arith.constant dense<0.000000e+00> : vector<16xf32>
    %25 = vector.multi_reduction <add>, %24, %cst_17 [1] : vector<16x32xf32> to vector<16xf32>
    %26 = vector.shape_cast %25 : vector<16xf32> to vector<16x1xf32>
    %cst_18 = arith.constant 3.200000e+01 : f32
    %27 = vector.broadcast %cst_18 : f32 to vector<16x1xf32>
    %28 = arith.divf %26, %27 : vector<16x1xf32>
    %cst_19 = arith.constant 9.99999974E-6 : f32
    %29 = vector.broadcast %cst_19 : f32 to vector<16x1xf32>
    %30 = arith.addf %28, %29 : vector<16x1xf32>
    %31 = math.rsqrt %30 : vector<16x1xf32>
    %32 = vector.broadcast %31 : vector<16x1xf32> to vector<16x32xf32>
    %33 = arith.mulf %23, %32 : vector<16x32xf32>
    %34 = vector.broadcast %16 : vector<1x32xf32> to vector<16x32xf32>
    %35 = arith.mulf %33, %34 : vector<16x32xf32>
    %36 = vector.broadcast %17 : vector<1x32xf32> to vector<16x32xf32>
    %37 = arith.addf %35, %36 : vector<16x32xf32>
    %38 = arith.truncf %37 : vector<16x32xf32> to vector<16x32xbf16>
    %c0_20 = arith.constant 0 : index
    %c0_21 = arith.constant 0 : index
    %39 = vector.load %arg8[%c0_20, %c0_21] : memref<16x32xbf16, #tpu.memory_space<vmem>>, vector<16x32xbf16>
    tpu.vector_store %arg8[%c0_20, %c0_21], %38 {strides = array<i32>} : memref<16x32xbf16, #tpu.memory_space<vmem>>, vector<16x32xbf16>,
    return
  }
  func.func @transform_0(%arg0: i32) -> (i32, i32) {
    %c0_i32 = arith.constant 0 : i32
    %c0_i32_0 = arith.constant 0 : i32
    return %arg0, %c0_i32 : i32, i32
  }
  func.func @transform_1(%arg0: i32) -> (i32, i32) {
    %c0_i32 = arith.constant 0 : i32
    %c0_i32_0 = arith.constant 0 : i32
    %c0_i32_1 = arith.constant 0 : i32
    return %c0_i32, %c0_i32_0 : i32, i32
  }
  func.func @transform_2(%arg0: i32) -> (i32, i32) {
    %c0_i32 = arith.constant 0 : i32
    %c0_i32_0 = arith.constant 0 : i32
    %c0_i32_1 = arith.constant 0 : i32
    return %c0_i32, %c0_i32_0 : i32, i32
  }
  func.func @transform_3(%arg0: i32) -> (i32, i32) {
    %c0_i32 = arith.constant 0 : i32
    %c0_i32_0 = arith.constant 0 : i32
    %c0_i32_1 = arith.constant 0 : i32
    return %c0_i32, %c0_i32_0 : i32, i32
  }
  func.func @transform_4(%arg0: i32) -> (i32, i32) {
    %c0_i32 = arith.constant 0 : i32
    %c0_i32_0 = arith.constant 0 : i32
    %c0_i32_1 = arith.constant 0 : i32
    return %c0_i32, %c0_i32_0 : i32, i32
  }
  func.func @transform_5(%arg0: i32) -> (i32, i32) {
    %c0_i32 = arith.constant 0 : i32
    %c0_i32_0 = arith.constant 0 : i32
    %c0_i32_1 = arith.constant 0 : i32
    return %c0_i32, %c0_i32_0 : i32, i32
  }
  func.func @transform_6(%arg0: i32) -> (i32, i32) {
    %c0_i32 = arith.constant 0 : i32
    %c0_i32_0 = arith.constant 0 : i32
    %c0_i32_1 = arith.constant 0 : i32
    return %c0_i32, %c0_i32_0 : i32, i32
  }
  func.func @transform_7(%arg0: i32) -> (i32, i32) {
    %c0_i32 = arith.constant 0 : i32
    %c0_i32_0 = arith.constant 0 : i32
    return %arg0, %c0_i32 : i32, i32
  }
}

</mosaic_0001>

<llo_original>
// kernel: transformer_forward.9
$region0: #{transformer_forward.9}
  #allocation0 [shape = 'u32[]', space=smem, size = 0x4, offset = 0x4, fixed_abs, tag = 'smem constant byte address 0x4 - core index']
  #allocation1 [shape = 'u32[144,128]{1,0:T(1,128)}', space=vmem, size = 0x12000, scoped, tag = 'internal scratch']
  %s0 = inlined_call_operand.vmem [shape: f32[2,8,16], index: 0, kind: input, shape index: {}]
  %s1 = inlined_call_operand.vmem [shape: bf16[16,64], index: 1, kind: input, shape index: {}]
  %s2 = inlined_call_operand.vmem [shape: f32[1,64], index: 2, kind: input, shape index: {}]
  %s3 = inlined_call_operand.vmem [shape: bf16[64,64], index: 3, kind: input, shape index: {}]
  %s4 = inlined_call_operand.vmem [shape: f32[1,64], index: 4, kind: input, shape index: {}]
  %s5 = inlined_call_operand.vmem [shape: bf16[64,32], index: 5, kind: input, shape index: {}]
  %s6 = inlined_call_operand.vmem [shape: f32[1,32], index: 6, kind: input, shape index: {}]
  %s7 = inlined_call_operand.vmem [shape: f32[5000,32], index: 7, kind: input, shape index: {}]
  %s8 = inlined_call_operand.vmem [shape: bf16[2,8,32], index: 8, kind: output, shape index: {}]
  %s9 = sld [smem:[#allocation0]]
  $region65: #{transformer_forward.9} parent=0
    _
  %s11 = ssub.s32 1, %s9
  %s12 = scalar_select 0, %s11, %s9
  loop: start=0, step=1, limit=4
  $region2: #{transformer_forward.9} parent=0 // loop_pre_header
    _
  $region3: #{transformer_forward.9} parent=0 // loop_header
    %s14 = sphi 0, %s18
    %p15 = scmp.ge.s32.totalorder %s14, 4
    %s21 = sphi 0, %s33
    %s22 = sphi 0, %s29
    %s23 = sphi 0, %s21
    %s24 = sphi 0, %s22
    %s25 = sphi 0, %s23
    %s26 = sphi 0, %s24
    %s38 = sphi 0, %s40
    %s41 = sphi 0, %s38
    %s42 = sphi 0, %s41
    %s58 = sphi 0, %s42
    %s62 = sphi 0, %s62
    %s64 = sphi 0, %s62
    %s65 = sphi 0, %s64
    %s79 = sphi 0, %s65
    %s83 = sphi 0, %s83
    %s85 = sphi 0, %s83
    %s86 = sphi 0, %s85
    %s100 = sphi 0, %s86
    %s104 = sphi 0, %s104
    %s106 = sphi 0, %s104
    %s107 = sphi 0, %s106
    %s121 = sphi 0, %s107
    %s125 = sphi 0, %s125
    %s127 = sphi 0, %s125
    %s128 = sphi 0, %s127
    %s142 = sphi 0, %s128
    %s146 = sphi 0, %s146
    %s148 = sphi 0, %s146
    %s149 = sphi 0, %s148
    %s163 = sphi 0, %s149
    %s167 = sphi 0, %s167
    %s169 = sphi 0, %s167
    %s170 = sphi 0, %s169
    %s184 = sphi 0, %s170
    %s190 = sphi 0, %s192
    %s193 = sphi 0, %s190
    %s194 = sphi 0, %s193
    %s210 = sphi 0, %s194
    %s218 = sphi 0, %s220
    %s221 = sphi 0, %s218
    %s222 = sphi 0, %s221
    %s238 = sphi 0, %s222
  $region4: #{transformer_forward.9} parent=0 // loop_header_branch
    %17 = sbr.rel (%p15) target = $region8
  $region5: #{transformer_forward.9} parent=0 // loop_body
    %s19 = ssub.s32 %s14, 1
    %s20 = ssub.s32 %s14, 2
    %s27 = sadd.s32 1, %s22
    %p28 = scmp.ge.s32.totalorder %s27, 1
    %s29 = scalar_select %p28, 0, %s27
    %s30 = sadd.s32 1, %s21
    %s31 = scalar_select %p28, %s30, %s21
    %p32 = scmp.ge.s32.totalorder %s31, 2
    %s33 = scalar_select %p32, 0, %s31
    %s34 = ssub.s32 %s21, %s33
    %s35 = ssub.s32 %s22, %s29
    %s36 = sor.u32 %s34, %s35
    %p37 = scmp.eq.s32.totalorder %s36, 0
    %s39 = sadd.s32 %s38, 1
    %s40 = scalar_select %p37, %s38, %s39
    %p43 = pneg %p37
    %p44 = scmp.eq.s32.totalorder %s14, 1
    %p45 = por %p43, %p44
    %p46 = scmp.ne.s32.totalorder %s38, %s41
    %p47 = scmp.eq.s32.totalorder %s14, 0
    %p48 = por %p46, %p47
    %p49 = scmp.ne.s32.totalorder %s38, %s41
    %p50 = scmp.eq.s32.totalorder %s19, 1
    %p51 = por %p49, %p50
    %p52 = scmp.ne.s32.totalorder %s41, %s42
    %p53 = scmp.eq.s32.totalorder %s19, 0
    %p54 = por %p52, %p53
    %p55 = scmp.ne.s32.totalorder %s41, %s42
    %p56 = scmp.eq.s32.totalorder %s20, 1
    %p57 = por %p55, %p56
    %p59 = scmp.ne.s32.totalorder %s42, %s58
    %p60 = scmp.eq.s32.totalorder %s20, 0
    %p61 = por %p59, %p60
    %s63 = sadd.s32 %s62, 1
    %p66 = scmp.eq.s32.totalorder %s14, 1
    %p67 = scmp.ne.s32.totalorder %s62, %s64
    %p68 = scmp.eq.s32.totalorder %s14, 0
    %p69 = por %p67, %p68
    %p70 = scmp.ne.s32.totalorder %s62, %s64
    %p71 = scmp.eq.s32.totalorder %s19, 1
    %p72 = por %p70, %p71
    %p73 = scmp.ne.s32.totalorder %s64, %s65
    %p74 = scmp.eq.s32.totalorder %s19, 0
    %p75 = por %p73, %p74
    %p76 = scmp.ne.s32.totalorder %s64, %s65
    %p77 = scmp.eq.s32.totalorder %s20, 1
    %p78 = por %p76, %p77
    %p80 = scmp.ne.s32.totalorder %s65, %s79
    %p81 = scmp.eq.s32.totalorder %s20, 0
    %p82 = por %p80, %p81
    %s84 = sadd.s32 %s83, 1
    %p87 = scmp.eq.s32.totalorder %s14, 1
    %p88 = scmp.ne.s32.totalorder %s83, %s85
    %p89 = scmp.eq.s32.totalorder %s14, 0
    %p90 = por %p88, %p89
    %p91 = scmp.ne.s32.totalorder %s83, %s85
    %p92 = scmp.eq.s32.totalorder %s19, 1
    %p93 = por %p91, %p92
    %p94 = scmp.ne.s32.totalorder %s85, %s86
    %p95 = scmp.eq.s32.totalorder %s19, 0
    %p96 = por %p94, %p95
    %p97 = scmp.ne.s32.totalorder %s85, %s86
    %p98 = scmp.eq.s32.totalorder %s20, 1
    %p99 = por %p97, %p98
    %p101 = scmp.ne.s32.totalorder %s86, %s100
    %p102 = scmp.eq.s32.totalorder %s20, 0
    %p103 = por %p101, %p102
    %s105 = sadd.s32 %s104, 1
    %p108 = scmp.eq.s32.totalorder %s14, 1
    %p109 = scmp.ne.s32.totalorder %s104, %s106
    %p110 = scmp.eq.s32.totalorder %s14, 0
    %p111 = por %p109, %p110
    %p112 = scmp.ne.s32.totalorder %s104, %s106
    %p113 = scmp.eq.s32.totalorder %s19, 1
    %p114 = por %p112, %p113
    %p115 = scmp.ne.s32.totalorder %s106, %s107
    %p116 = scmp.eq.s32.totalorder %s19, 0
    %p117 = por %p115, %p116
    %p118 = scmp.ne.s32.totalorder %s106, %s107
    %p119 = scmp.eq.s32.totalorder %s20, 1
    %p120 = por %p118, %p119
    %p122 = scmp.ne.s32.totalorder %s107, %s121
    %p123 = scmp.eq.s32.totalorder %s20, 0
    %p124 = por %p122, %p123
    %s126 = sadd.s32 %s125, 1
    %p129 = scmp.eq.s32.totalorder %s14, 1
    %p130 = scmp.ne.s32.totalorder %s125, %s127
    %p131 = scmp.eq.s32.totalorder %s14, 0
    %p132 = por %p130, %p131
    %p133 = scmp.ne.s32.totalorder %s125, %s127
    %p134 = scmp.eq.s32.totalorder %s19, 1
    %p135 = por %p133, %p134
    %p136 = scmp.ne.s32.totalorder %s127, %s128
    %p137 = scmp.eq.s32.totalorder %s19, 0
    %p138 = por %p136, %p137
    %p139 = scmp.ne.s32.totalorder %s127, %s128
    %p140 = scmp.eq.s32.totalorder %s20, 1
    %p141 = por %p139, %p140
    %p143 = scmp.ne.s32.totalorder %s128, %s142
    %p144 = scmp.eq.s32.totalorder %s20, 0
    %p145 = por %p143, %p144
    %s147 = sadd.s32 %s146, 1
    %p150 = scmp.eq.s32.totalorder %s14, 1
    %p151 = scmp.ne.s32.totalorder %s146, %s148
    %p152 = scmp.eq.s32.totalorder %s14, 0
    %p153 = por %p151, %p152
    %p154 = scmp.ne.s32.totalorder %s146, %s148
    %p155 = scmp.eq.s32.totalorder %s19, 1
    %p156 = por %p154, %p155
    %p157 = scmp.ne.s32.totalorder %s148, %s149
    %p158 = scmp.eq.s32.totalorder %s19, 0
    %p159 = por %p157, %p158
    %p160 = scmp.ne.s32.totalorder %s148, %s149
    %p161 = scmp.eq.s32.totalorder %s20, 1
    %p162 = por %p160, %p161
    %p164 = scmp.ne.s32.totalorder %s149, %s163
    %p165 = scmp.eq.s32.totalorder %s20, 0
    %p166 = por %p164, %p165
    %s168 = sadd.s32 %s167, 1
    %p171 = scmp.eq.s32.totalorder %s14, 1
    %p172 = scmp.ne.s32.totalorder %s167, %s169
    %p173 = scmp.eq.s32.totalorder %s14, 0
    %p174 = por %p172, %p173
    %p175 = scmp.ne.s32.totalorder %s167, %s169
    %p176 = scmp.eq.s32.totalorder %s19, 1
    %p177 = por %p175, %p176
    %p178 = scmp.ne.s32.totalorder %s169, %s170
    %p179 = scmp.eq.s32.totalorder %s19, 0
    %p180 = por %p178, %p179
    %p181 = scmp.ne.s32.totalorder %s169, %s170
    %p182 = scmp.eq.s32.totalorder %s20, 1
    %p183 = por %p181, %p182
    %p185 = scmp.ne.s32.totalorder %s170, %s184
    %p186 = scmp.eq.s32.totalorder %s20, 0
    %p187 = por %p185, %p186
    %s188 = ssub.s32 %s22, %s29
    %p189 = scmp.eq.s32.totalorder %s188, 0
    %s191 = sadd.s32 %s190, 1
    %s192 = scalar_select %p189, %s190, %s191
    %p195 = pneg %p189
    %p196 = scmp.eq.s32.totalorder %s14, 1
    %p197 = por %p195, %p196
    %p198 = scmp.ne.s32.totalorder %s190, %s193
    %p199 = scmp.eq.s32.totalorder %s14, 0
    %p200 = por %p198, %p199
    %p201 = scmp.ne.s32.totalorder %s190, %s193
    %p202 = scmp.eq.s32.totalorder %s19, 1
    %p203 = por %p201, %p202
    %p204 = scmp.ne.s32.totalorder %s193, %s194
    %p205 = scmp.eq.s32.totalorder %s19, 0
    %p206 = por %p204, %p205
    %p207 = scmp.ne.s32.totalorder %s193, %s194
    %p208 = scmp.eq.s32.totalorder %s20, 1
    %p209 = por %p207, %p208
    %p211 = scmp.ne.s32.totalorder %s194, %s210
    %p212 = scmp.eq.s32.totalorder %s20, 0
    %p213 = por %p211, %p212
    %s214 = ssub.s32 %s21, %s33
    %s215 = ssub.s32 %s22, %s29
    %s216 = sor.u32 %s214, %s215
    %p217 = scmp.eq.s32.totalorder %s216, 0
    %s219 = sadd.s32 %s218, 1
    %s220 = scalar_select %p217, %s218, %s219
    %p223 = pneg %p217
    %p224 = scmp.eq.s32.totalorder %s14, 1
    %p225 = por %p223, %p224
    %p226 = scmp.ne.s32.totalorder %s218, %s221
    %p227 = scmp.eq.s32.totalorder %s14, 0
    %p228 = por %p226, %p227
    %p229 = scmp.ne.s32.totalorder %s218, %s221
    %p230 = scmp.eq.s32.totalorder %s19, 1
    %p231 = por %p229, %p230
    %p232 = scmp.ne.s32.totalorder %s221, %s222
    %p233 = scmp.eq.s32.totalorder %s19, 0
    %p234 = por %p232, %p233
    %p235 = scmp.ne.s32.totalorder %s221, %s222
    %p236 = scmp.eq.s32.totalorder %s20, 1
    %p237 = por %p235, %p236
    %p239 = scmp.ne.s32.totalorder %s222, %s238
    %p240 = scmp.eq.s32.totalorder %s20, 0
    %p241 = por %p239, %p240
    %p242 = scmp.le.s32.totalorder 1, %s14
    %p243 = scmp.lt.s32.totalorder %s14, 3
    %p244 = pnand %p242, %p243
    %p245 = pneg %p244
    // Predicated region
    $region9: #{transformer_forward.9} parent=5 // pred_check
      _
    $region10: #{transformer_forward.9} parent=5 // pred_check_branch
      %247 = sbr.rel (%p244) target = $region12
    $region11: #{transformer_forward.9} parent=5 // pred_region
      %s248 = ssub.s32 %s14, 1
      // Predicated region
      $region13: #{transformer_forward.9} parent=11 // pred_check
        %p249 = pneg %p75
      $region14: #{transformer_forward.9} parent=11 // pred_check_branch
        %251 = sbr.rel (%p249) target = $region16
      $region15: #{transformer_forward.9} parent=11 // pred_region
        _
      $region16: #{transformer_forward.9} parent=11 // pred_fallthru
        _
      // Predicated region
      $region17: #{transformer_forward.9} parent=11 // pred_check
        %p252 = pneg %p96
      $region18: #{transformer_forward.9} parent=11 // pred_check_branch
        %254 = sbr.rel (%p252) target = $region20
      $region19: #{transformer_forward.9} parent=11 // pred_region
        _
      $region20: #{transformer_forward.9} parent=11 // pred_fallthru
        _
      // Predicated region
      $region21: #{transformer_forward.9} parent=11 // pred_check
        %p255 = pneg %p117
      $region22: #{transformer_forward.9} parent=11 // pred_check_branch
        %257 = sbr.rel (%p255) target = $region24
      $region23: #{transformer_forward.9} parent=11 // pred_region
        _
      $region24: #{transformer_forward.9} parent=11 // pred_fallthru
        _
      // Predicated region
      $region25: #{transformer_forward.9} parent=11 // pred_check
        %p258 = pneg %p138
      $region26: #{transformer_forward.9} parent=11 // pred_check_branch
        %260 = sbr.rel (%p258) target = $region28
      $region27: #{transformer_forward.9} parent=11 // pred_region
        _
      $region28: #{transformer_forward.9} parent=11 // pred_fallthru
        _
      // Predicated region
      $region29: #{transformer_forward.9} parent=11 // pred_check
        %p261 = pneg %p159
      $region30: #{transformer_forward.9} parent=11 // pred_check_branch
        %263 = sbr.rel (%p261) target = $region32
      $region31: #{transformer_forward.9} parent=11 // pred_region
        _
      $region32: #{transformer_forward.9} parent=11 // pred_fallthru
        _
      // Predicated region
      $region33: #{transformer_forward.9} parent=11 // pred_check
        %p264 = pneg %p180
      $region34: #{transformer_forward.9} parent=11 // pred_check_branch
        %266 = sbr.rel (%p264) target = $region36
      $region35: #{transformer_forward.9} parent=11 // pred_region
        _
      $region36: #{transformer_forward.9} parent=11 // pred_fallthru
        _
      // Predicated region
      $region37: #{transformer_forward.9} parent=11 // pred_check
        %p267 = pneg %p206
      $region38: #{transformer_forward.9} parent=11 // pred_check_branch
        %269 = sbr.rel (%p267) target = $region40
      $region39: #{transformer_forward.9} parent=11 // pred_region
        %p270 = scmp.lt.s32.totalorder %s24, 624
        %s271 = scalar_select %p270, %s24, 624
        %s272 = smul.addr %s271, 8
        %s273 = scalar_lea.vmem %s7, %s272
      $region40: #{transformer_forward.9} parent=11 // pred_fallthru
        _
    $region12: #{transformer_forward.9} parent=5 // pred_fallthru
      _
    %p274 = scmp.lt.s32.totalorder %s14, 2
    // Predicated region
    $region41: #{transformer_forward.9} parent=5 // pred_check
      %p275 = pneg %p274
    $region42: #{transformer_forward.9} parent=5 // pred_check_branch
      %277 = sbr.rel (%p275) target = $region44
    $region43: #{transformer_forward.9} parent=5 // pred_region
      // Predicated region
      $region45: #{transformer_forward.9} parent=43 // pred_check
        %p278 = pneg %p48
      $region46: #{transformer_forward.9} parent=43 // pred_check_branch
        %280 = sbr.rel (%p278) target = $region48
      $region47: #{transformer_forward.9} parent=43 // pred_region
        %p281 = scmp.lt.s32.totalorder %s21, 1
        %s282 = scalar_select %p281, %s21, 1
        %p283 = scmp.lt.s32.totalorder %s22, 0
        %s284 = scalar_select %p283, %s22, 0
        %s285 = sadd.s32 %s284, %s282
        %s286 = smul.addr %s285, 8
        %s287 = scalar_lea.vmem %s0, %s286
      $region48: #{transformer_forward.9} parent=43 // pred_fallthru
        _
    $region44: #{transformer_forward.9} parent=5 // pred_fallthru
      _
    %p288 = scmp.le.s32.totalorder 1, %s14
    %p289 = scmp.lt.s32.totalorder %s14, 3
    %p290 = pnand %p288, %p289
    %p291 = pneg %p290
    // Predicated region
    $region49: #{transformer_forward.9} parent=5 // pred_check
      _
    $region50: #{transformer_forward.9} parent=5 // pred_check_branch
      %293 = sbr.rel (%p290) target = $region52
    $region51: #{transformer_forward.9} parent=5 // pred_region
      %s294 = ssub.s32 %s14, 1
      %p295 = scmp.lt.s32.totalorder %s23, 1
      %s296 = scalar_select %p295, %s23, 1
      %p297 = scmp.lt.s32.totalorder %s24, 0
      %s298 = scalar_select %p297, %s24, 0
      %s299 = sadd.s32 %s298, %s296
      %s300 = smul.addr %s299, 8
      %s301 = scalar_lea.vmem %s0, %s300
      %p302 = pneg %p54
      %p303 = pneg %p51
      %p304 = pneg %p75
      %p305 = pneg %p72
      %p306 = pneg %p96
      %p307 = pneg %p93
      %p308 = pneg %p117
      %p309 = pneg %p114
      %p310 = pneg %p138
      %p311 = pneg %p135
      %p312 = pneg %p159
      %p313 = pneg %p156
      %p314 = pneg %p180
      %p315 = pneg %p177
      %p316 = scmp.lt.s32.totalorder %s24, 624
      %s317 = scalar_select %p316, %s24, 624
      %s318 = smul.addr %s317, 8
      %s319 = scalar_lea.vmem %s7, %s318
      %p320 = pneg %p206
      %p321 = pneg %p203
      %p322 = pneg %p234
      %p323 = pneg %p231
      %p324 = scmp.lt.s32.totalorder %s23, 1
      %s325 = scalar_select %p324, %s23, 1
      %p326 = scmp.lt.s32.totalorder %s24, 0
      %s327 = scalar_select %p326, %s24, 0
      %s328 = sadd.s32 %s327, %s325
      %s329 = smul.addr %s328, 4
      %s330 = scalar_lea.vmem %s8, %s329
      %p331 = scmp.lt.s32.totalorder %s23, 1
      %s332 = scalar_select %p331, %s23, 1
      %p333 = scmp.lt.s32.totalorder %s24, 0
      %s334 = scalar_select %p333, %s24, 0
      %s335 = sadd.s32 %s334, %s332
      %s336 = smul.addr %s335, 8
      %s337 = scalar_lea.vmem %s0, %s336
      %p338 = scmp.lt.s32.totalorder %s24, 624
      %s339 = scalar_select %p338, %s24, 624
      %s340 = smul.addr %s339, 8
      %s341 = scalar_lea.vmem %s7, %s340
      %p342 = scmp.lt.s32.totalorder %s23, 1
      %s343 = scalar_select %p342, %s23, 1
      %p344 = scmp.lt.s32.totalorder %s24, 0
      %s345 = scalar_select %p344, %s24, 0
      %s346 = sadd.s32 %s345, %s343
      %s347 = smul.addr %s346, 4
      %s348 = scalar_lea.vmem %s8, %s347
      %v350 = vld [vmem:[%s337] sm:$0xff]
      %v351 = vpack.c.bf16 %v350, %v350
      %v352 = vld [vmem:[%s1] sm:$0xf]
      %v353 = vld [vmem:[%s1 + $0x4] sm:$0xf]
      %v354 = vld [vmem:[%s2] sm:$0x1]
      %v356 = vlaneseq
      %v357 = vshrl.u32 %v356, 7
      %v358 = vsub.s32 0, %v357
      %v359 = vrot.slane %v354, %v358
      %v363 = vunpack.c.l.b16 %v352
      %v364 = vunpack.c.l.b16 %v353
      %v365 = vpack.c.b16 %v364, %v363
      %vm367 = vcmask 130048
      %v369 = vsel %vm367, %v351, 0
      %371 = vmatprep.subr.bf16.mxu0 0
      %372 = vmatpush1.bf16.msra.mxu0 %v365
      %373 = vmatprep.subr.bf16.mxu0 0
      %374 = vmatpush1.bf16.msra.mxu0 0
      %375 = vmatprep.subr.bf16.mxu0 0
      %376 = vmatpush1.bf16.msra.mxu0 0
      %377 = vmatprep.subr.bf16.mxu0 0
      %378 = vmatpush1.bf16.msra.mxu0 0
      %379 = vmatprep.subr.bf16.mxu0 0
      %380 = vmatpush1.bf16.msra.mxu0 0
      %381 = vmatprep.subr.bf16.mxu0 0
      %382 = vmatpush1.bf16.msra.mxu0 0
      %383 = vmatprep.subr.bf16.mxu0 0
      %384 = vmatpush1.bf16.msra.mxu0 0
      %385 = vmatprep.subr.bf16.mxu0 0
      %386 = vmatpush1.bf16.msra.mxu0 0
      %387 = vmatprep.subr.bf16.mxu0 0
      %388 = vmatpush1.bf16.msra.mxu0 0
      %389 = vmatprep.subr.bf16.mxu0 0
      %390 = vmatpush1.bf16.msra.mxu0 0
      %391 = vmatprep.subr.bf16.mxu0 0
      %392 = vmatpush1.bf16.msra.mxu0 0
      %393 = vmatprep.subr.bf16.mxu0 0
      %394 = vmatpush1.bf16.msra.mxu0 0
      %395 = vmatprep.subr.bf16.mxu0 0
      %396 = vmatpush1.bf16.msra.mxu0 0
      %397 = vmatprep.subr.bf16.mxu0 0
      %398 = vmatpush1.bf16.msra.mxu0 0
      %399 = vmatprep.subr.bf16.mxu0 0
      %400 = vmatpush1.bf16.msra.mxu0 0
      %401 = vmatprep.subr.bf16.mxu0 0
      %402 = vmatpush1.bf16.msra.mxu0 0
      %403 = vmatprep.mubr.bf16.mxu0 0
      %404 = vmatmul.mubr.bf16.gmra.mrb[0].mxu0 %v369
      %v405 = vpop.f32.mrb[0].mxu0
      %v406 = vadd.f32 %v359, %v405
      %v407 = vpop.f32.mrb[0].mxu0
      %v408 = vpop.f32.mrb[0].mxu0
      %v409 = vpop.f32.mrb[0].mxu0
      %410 = vdwg.mxu0
      %v411 = vmul.f32 %v406, 8.0
      %v412 = vmax.f32 %v411, 0.0
      %v413 = vpack.c.bf16 %v412, %v412
      %v414 = vld [vmem:[%s3] sm:$0xf]
      %v415 = vld [vmem:[%s3 + $0x4] sm:$0xf]
      %v416 = vld [vmem:[%s3 + $0x8] sm:$0xf]
      %v417 = vld [vmem:[%s3 + $0xc] sm:$0xf]
      %v418 = vld [vmem:[%s3 + $0x10] sm:$0xf]
      %v419 = vld [vmem:[%s3 + $0x14] sm:$0xf]
      %v420 = vld [vmem:[%s3 + $0x18] sm:$0xf]
      %v421 = vld [vmem:[%s3 + $0x1c] sm:$0xf]
      %v422 = vld [vmem:[%s4] sm:$0x1]
      %v424 = vlaneseq
      %v425 = vshrl.u32 %v424, 7
      %v426 = vsub.s32 0, %v425
      %v427 = vrot.slane %v422, %v426
      %v437 = vunpack.c.l.b16 %v414
      %v438 = vunpack.c.l.b16 %v415
      %v439 = vunpack.c.l.b16 %v416
      %v440 = vunpack.c.l.b16 %v417
      %v441 = vunpack.c.l.b16 %v418
      %v442 = vunpack.c.l.b16 %v419
      %v443 = vunpack.c.l.b16 %v420
      %v444 = vunpack.c.l.b16 %v421
      %v445 = vpack.c.b16 %v438, %v437
      %v446 = vpack.c.b16 %v440, %v439
      %v447 = vpack.c.b16 %v442, %v441
      %v448 = vpack.c.b16 %v444, %v443
      %vm453 = vcmask 523264
      %v455 = vsel %vm453, %v413, 0
      %457 = vmatprep.subr.bf16.mxu0 0
      %458 = vmatpush1.bf16.msra.mxu0 %v445
      %459 = vmatprep.subr.bf16.mxu0 0
      %460 = vmatpush1.bf16.msra.mxu0 %v446
      %461 = vmatprep.subr.bf16.mxu0 0
      %462 = vmatpush1.bf16.msra.mxu0 %v447
      %463 = vmatprep.subr.bf16.mxu0 0
      %464 = vmatpush1.bf16.msra.mxu0 %v448
      %465 = vmatprep.subr.bf16.mxu0 0
      %466 = vmatpush1.bf16.msra.mxu0 0
      %467 = vmatprep.subr.bf16.mxu0 0
      %468 = vmatpush1.bf16.msra.mxu0 0
      %469 = vmatprep.subr.bf16.mxu0 0
      %470 = vmatpush1.bf16.msra.mxu0 0
      %471 = vmatprep.subr.bf16.mxu0 0
      %472 = vmatpush1.bf16.msra.mxu0 0
      %473 = vmatprep.subr.bf16.mxu0 0
      %474 = vmatpush1.bf16.msra.mxu0 0
      %475 = vmatprep.subr.bf16.mxu0 0
      %476 = vmatpush1.bf16.msra.mxu0 0
      %477 = vmatprep.subr.bf16.mxu0 0
      %478 = vmatpush1.bf16.msra.mxu0 0
      %479 = vmatprep.subr.bf16.mxu0 0
      %480 = vmatpush1.bf16.msra.mxu0 0
      %481 = vmatprep.subr.bf16.mxu0 0
      %482 = vmatpush1.bf16.msra.mxu0 0
      %483 = vmatprep.subr.bf16.mxu0 0
      %484 = vmatpush1.bf16.msra.mxu0 0
      %485 = vmatprep.subr.bf16.mxu0 0
      %486 = vmatpush1.bf16.msra.mxu0 0
      %487 = vmatprep.subr.bf16.mxu0 0
      %488 = vmatpush1.bf16.msra.mxu0 0
      %489 = vmatprep.mubr.bf16.mxu0 0
      %490 = vmatmul.mubr.bf16.gmra.mrb[0].mxu0 %v455
      %v491 = vpop.f32.mrb[0].mxu0
      %v492 = vadd.f32 %v427, %v491
      %v493 = vpop.f32.mrb[0].mxu0
      %v494 = vpop.f32.mrb[0].mxu0
      %v495 = vpop.f32.mrb[0].mxu0
      %496 = vdwg.mxu0
      %v497 = vmax.f32 %v492, 0.0
      %v498 = vpack.c.bf16 %v497, %v497
      %v499 = vld [vmem:[%s5] sm:$0xf]
      %v500 = vld [vmem:[%s5 + $0x4] sm:$0xf]
      %v501 = vld [vmem:[%s5 + $0x8] sm:$0xf]
      %v502 = vld [vmem:[%s5 + $0xc] sm:$0xf]
      %v503 = vld [vmem:[%s5 + $0x10] sm:$0xf]
      %v504 = vld [vmem:[%s5 + $0x14] sm:$0xf]
      %v505 = vld [vmem:[%s5 + $0x18] sm:$0xf]
      %v506 = vld [vmem:[%s5 + $0x1c] sm:$0xf]
      %v507 = vld [vmem:[%s6] sm:$0x1]
      %v509 = vlaneseq
      %v510 = vshrl.u32 %v509, 7
      %v511 = vsub.s32 0, %v510
      %v512 = vrot.slane %v507, %v511
      %v522 = vunpack.c.l.b16 %v499
      %v523 = vunpack.c.l.b16 %v500
      %v524 = vunpack.c.l.b16 %v501
      %v525 = vunpack.c.l.b16 %v502
      %v526 = vunpack.c.l.b16 %v503
      %v527 = vunpack.c.l.b16 %v504
      %v528 = vunpack.c.l.b16 %v505
      %v529 = vunpack.c.l.b16 %v506
      %v530 = vpack.c.b16 %v523, %v522
      %v531 = vpack.c.b16 %v525, %v524
      %v532 = vpack.c.b16 %v527, %v526
      %v533 = vpack.c.b16 %v529, %v528
      %v539 = vsel %vm453, %v498, 0
      %541 = vmatprep.subr.bf16.mxu0 0
      %542 = vmatpush1.bf16.msra.mxu0 %v530
      %543 = vmatprep.subr.bf16.mxu0 0
      %544 = vmatpush1.bf16.msra.mxu0 %v531
      %545 = vmatprep.subr.bf16.mxu0 0
      %546 = vmatpush1.bf16.msra.mxu0 %v532
      %547 = vmatprep.subr.bf16.mxu0 0
      %548 = vmatpush1.bf16.msra.mxu0 %v533
      %549 = vmatprep.subr.bf16.mxu0 0
      %550 = vmatpush1.bf16.msra.mxu0 0
      %551 = vmatprep.subr.bf16.mxu0 0
      %552 = vmatpush1.bf16.msra.mxu0 0
      %553 = vmatprep.subr.bf16.mxu0 0
      %554 = vmatpush1.bf16.msra.mxu0 0
      %555 = vmatprep.subr.bf16.mxu0 0
      %556 = vmatpush1.bf16.msra.mxu0 0
      %557 = vmatprep.subr.bf16.mxu0 0
      %558 = vmatpush1.bf16.msra.mxu0 0
      %559 = vmatprep.subr.bf16.mxu0 0
      %560 = vmatpush1.bf16.msra.mxu0 0
      %561 = vmatprep.subr.bf16.mxu0 0
      %562 = vmatpush1.bf16.msra.mxu0 0
      %563 = vmatprep.subr.bf16.mxu0 0
      %564 = vmatpush1.bf16.msra.mxu0 0
      %565 = vmatprep.subr.bf16.mxu0 0
      %566 = vmatpush1.bf16.msra.mxu0 0
      %567 = vmatprep.subr.bf16.mxu0 0
      %568 = vmatpush1.bf16.msra.mxu0 0
      %569 = vmatprep.subr.bf16.mxu0 0
      %570 = vmatpush1.bf16.msra.mxu0 0
      %571 = vmatprep.subr.bf16.mxu0 0
      %572 = vmatpush1.bf16.msra.mxu0 0
      %573 = vmatprep.mubr.bf16.mxu0 0
      %574 = vmatmul.mubr.bf16.gmra.mrb[0].mxu0 %v539
      %v575 = vpop.f32.mrb[0].mxu0
      %v576 = vadd.f32 %v512, %v575
      %v577 = vpop.f32.mrb[0].mxu0
      %v578 = vpop.f32.mrb[0].mxu0
      %v579 = vpop.f32.mrb[0].mxu0
      %580 = vdwg.mxu0
      %v581 = vld [vmem:[%s341] sm:$0xff]
      %v582 = vadd.f32 %v576, %v581
      %v583 = vpack.c.bf16 %v582, %v582
      %vm584 = vcmask 257024
      %585 = vst.msk [vmem:[%s348] sm:$0xf] %vm584, %v583
      %p586 = scmp.lt.s32.totalorder %s23, 1
      %s587 = scalar_select %p586, %s23, 1
      %p588 = scmp.lt.s32.totalorder %s24, 0
      %s589 = scalar_select %p588, %s24, 0
      %s590 = sadd.s32 %s589, %s587
      %s591 = smul.addr %s590, 4
      %s592 = scalar_lea.vmem %s8, %s591
      // Predicated region
      $region53: #{transformer_forward.9} parent=51 // pred_check
        %p593 = pneg %p231
      $region54: #{transformer_forward.9} parent=51 // pred_check_branch
        %595 = sbr.rel (%p593) target = $region56
      $region55: #{transformer_forward.9} parent=51 // pred_region
        _
      $region56: #{transformer_forward.9} parent=51 // pred_fallthru
        _
    $region52: #{transformer_forward.9} parent=5 // pred_fallthru
      _
    %p596 = scmp.le.s32.totalorder 2, %s14
    // Predicated region
    $region57: #{transformer_forward.9} parent=5 // pred_check
      %p597 = pneg %p596
    $region58: #{transformer_forward.9} parent=5 // pred_check_branch
      %599 = sbr.rel (%p597) target = $region60
    $region59: #{transformer_forward.9} parent=5 // pred_region
      %s600 = ssub.s32 %s14, 2
      // Predicated region
      $region61: #{transformer_forward.9} parent=59 // pred_check
        %p601 = pneg %p237
      $region62: #{transformer_forward.9} parent=59 // pred_check_branch
        %603 = sbr.rel (%p601) target = $region64
      $region63: #{transformer_forward.9} parent=59 // pred_region
        %p604 = scmp.lt.s32.totalorder %s25, 1
        %s605 = scalar_select %p604, %s25, 1
        %p606 = scmp.lt.s32.totalorder %s26, 0
        %s607 = scalar_select %p606, %s26, 0
        %s608 = sadd.s32 %s607, %s605
        %s609 = smul.addr %s608, 4
        %s610 = scalar_lea.vmem %s8, %s609
      $region64: #{transformer_forward.9} parent=59 // pred_fallthru
        _
    $region60: #{transformer_forward.9} parent=5 // pred_fallthru
      _
  $region6: #{transformer_forward.9} parent=0 // loop_footer
    %s18 = sadd.s32 1, %s14
  $region7: #{transformer_forward.9} parent=0 // loop_footer_branch
    %13 = sbr.rel target = $region3
  $region8: #{transformer_forward.9} parent=0 // loop_exit
    _

// kernel: transformer_forward.10
$region0: #{transformer_forward.10}
  #allocation0 [shape = 'u32[]', space=smem, size = 0x4, offset = 0x4, fixed_abs, tag = 'smem constant byte address 0x4 - core index']
  #allocation1 [shape = 'u32[144,128]{1,0:T(1,128)}', space=vmem, size = 0x12000, scoped, tag = 'internal scratch']
  %s0 = inlined_call_operand.vmem [shape: bf16[2,8,32], index: 0, kind: input, shape index: {}]
  %s1 = inlined_call_operand.vmem [shape: bf16[32,96], index: 1, kind: input, shape index: {}]
  %s2 = inlined_call_operand.vmem [shape: f32[1,96], index: 2, kind: input, shape index: {}]
  %s3 = inlined_call_operand.vmem [shape: bf16[2,4,8,8], index: 3, kind: output, shape index: {0}]
  %s4 = inlined_call_operand.vmem [shape: bf16[2,4,8,8], index: 4, kind: output, shape index: {1}]
  %s5 = inlined_call_operand.vmem [shape: bf16[2,4,8,8], index: 5, kind: output, shape index: {2}]
  %6 = xla_tuple %s3, %s4, %s5
  %s7 = sld [smem:[#allocation0]]
  $region61: #{transformer_forward.10} parent=0
    _
  %s9 = ssub.s32 1, %s7
  %s10 = scalar_select 0, %s9, %s7
  loop: start=0, step=1, limit=4
  $region2: #{transformer_forward.10} parent=0 // loop_pre_header
    _
  $region3: #{transformer_forward.10} parent=0 // loop_header
    %s12 = sphi 0, %s16
    %p13 = scmp.ge.s32.totalorder %s12, 4
    %s19 = sphi 0, %s31
    %s20 = sphi 0, %s27
    %s21 = sphi 0, %s19
    %s22 = sphi 0, %s20
    %s23 = sphi 0, %s21
    %s24 = sphi 0, %s22
    %s36 = sphi 0, %s38
    %s39 = sphi 0, %s36
    %s40 = sphi 0, %s39
    %s56 = sphi 0, %s40
    %s60 = sphi 0, %s60
    %s62 = sphi 0, %s60
    %s63 = sphi 0, %s62
    %s77 = sphi 0, %s63
    %s81 = sphi 0, %s81
    %s83 = sphi 0, %s81
    %s84 = sphi 0, %s83
    %s98 = sphi 0, %s84
    %s106 = sphi 0, %s108
    %s109 = sphi 0, %s106
    %s110 = sphi 0, %s109
    %s126 = sphi 0, %s110
    %s134 = sphi 0, %s136
    %s137 = sphi 0, %s134
    %s138 = sphi 0, %s137
    %s154 = sphi 0, %s138
    %s162 = sphi 0, %s164
    %s165 = sphi 0, %s162
    %s166 = sphi 0, %s165
    %s182 = sphi 0, %s166
  $region4: #{transformer_forward.10} parent=0 // loop_header_branch
    %15 = sbr.rel (%p13) target = $region8
  $region5: #{transformer_forward.10} parent=0 // loop_body
    %s17 = ssub.s32 %s12, 1
    %s18 = ssub.s32 %s12, 2
    %s25 = sadd.s32 1, %s20
    %p26 = scmp.ge.s32.totalorder %s25, 1
    %s27 = scalar_select %p26, 0, %s25
    %s28 = sadd.s32 1, %s19
    %s29 = scalar_select %p26, %s28, %s19
    %p30 = scmp.ge.s32.totalorder %s29, 2
    %s31 = scalar_select %p30, 0, %s29
    %s32 = ssub.s32 %s19, %s31
    %s33 = ssub.s32 %s20, %s27
    %s34 = sor.u32 %s32, %s33
    %p35 = scmp.eq.s32.totalorder %s34, 0
    %s37 = sadd.s32 %s36, 1
    %s38 = scalar_select %p35, %s36, %s37
    %p41 = pneg %p35
    %p42 = scmp.eq.s32.totalorder %s12, 1
    %p43 = por %p41, %p42
    %p44 = scmp.ne.s32.totalorder %s36, %s39
    %p45 = scmp.eq.s32.totalorder %s12, 0
    %p46 = por %p44, %p45
    %p47 = scmp.ne.s32.totalorder %s36, %s39
    %p48 = scmp.eq.s32.totalorder %s17, 1
    %p49 = por %p47, %p48
    %p50 = scmp.ne.s32.totalorder %s39, %s40
    %p51 = scmp.eq.s32.totalorder %s17, 0
    %p52 = por %p50, %p51
    %p53 = scmp.ne.s32.totalorder %s39, %s40
    %p54 = scmp.eq.s32.totalorder %s18, 1
    %p55 = por %p53, %p54
    %p57 = scmp.ne.s32.totalorder %s40, %s56
    %p58 = scmp.eq.s32.totalorder %s18, 0
    %p59 = por %p57, %p58
    %s61 = sadd.s32 %s60, 1
    %p64 = scmp.eq.s32.totalorder %s12, 1
    %p65 = scmp.ne.s32.totalorder %s60, %s62
    %p66 = scmp.eq.s32.totalorder %s12, 0
    %p67 = por %p65, %p66
    %p68 = scmp.ne.s32.totalorder %s60, %s62
    %p69 = scmp.eq.s32.totalorder %s17, 1
    %p70 = por %p68, %p69
    %p71 = scmp.ne.s32.totalorder %s62, %s63
    %p72 = scmp.eq.s32.totalorder %s17, 0
    %p73 = por %p71, %p72
    %p74 = scmp.ne.s32.totalorder %s62, %s63
    %p75 = scmp.eq.s32.totalorder %s18, 1
    %p76 = por %p74, %p75
    %p78 = scmp.ne.s32.totalorder %s63, %s77
    %p79 = scmp.eq.s32.totalorder %s18, 0
    %p80 = por %p78, %p79
    %s82 = sadd.s32 %s81, 1
    %p85 = scmp.eq.s32.totalorder %s12, 1
    %p86 = scmp.ne.s32.totalorder %s81, %s83
    %p87 = scmp.eq.s32.totalorder %s12, 0
    %p88 = por %p86, %p87
    %p89 = scmp.ne.s32.totalorder %s81, %s83
    %p90 = scmp.eq.s32.totalorder %s17, 1
    %p91 = por %p89, %p90
    %p92 = scmp.ne.s32.totalorder %s83, %s84
    %p93 = scmp.eq.s32.totalorder %s17, 0
    %p94 = por %p92, %p93
    %p95 = scmp.ne.s32.totalorder %s83, %s84
    %p96 = scmp.eq.s32.totalorder %s18, 1
    %p97 = por %p95, %p96
    %p99 = scmp.ne.s32.totalorder %s84, %s98
    %p100 = scmp.eq.s32.totalorder %s18, 0
    %p101 = por %p99, %p100
    %s102 = ssub.s32 %s19, %s31
    %s103 = ssub.s32 %s20, %s27
    %s104 = sor.u32 %s102, %s103
    %p105 = scmp.eq.s32.totalorder %s104, 0
    %s107 = sadd.s32 %s106, 1
    %s108 = scalar_select %p105, %s106, %s107
    %p111 = pneg %p105
    %p112 = scmp.eq.s32.totalorder %s12, 1
    %p113 = por %p111, %p112
    %p114 = scmp.ne.s32.totalorder %s106, %s109
    %p115 = scmp.eq.s32.totalorder %s12, 0
    %p116 = por %p114, %p115
    %p117 = scmp.ne.s32.totalorder %s106, %s109
    %p118 = scmp.eq.s32.totalorder %s17, 1
    %p119 = por %p117, %p118
    %p120 = scmp.ne.s32.totalorder %s109, %s110
    %p121 = scmp.eq.s32.totalorder %s17, 0
    %p122 = por %p120, %p121
    %p123 = scmp.ne.s32.totalorder %s109, %s110
    %p124 = scmp.eq.s32.totalorder %s18, 1
    %p125 = por %p123, %p124
    %p127 = scmp.ne.s32.totalorder %s110, %s126
    %p128 = scmp.eq.s32.totalorder %s18, 0
    %p129 = por %p127, %p128
    %s130 = ssub.s32 %s19, %s31
    %s131 = ssub.s32 %s20, %s27
    %s132 = sor.u32 %s130, %s131
    %p133 = scmp.eq.s32.totalorder %s132, 0
    %s135 = sadd.s32 %s134, 1
    %s136 = scalar_select %p133, %s134, %s135
    %p139 = pneg %p133
    %p140 = scmp.eq.s32.totalorder %s12, 1
    %p141 = por %p139, %p140
    %p142 = scmp.ne.s32.totalorder %s134, %s137
    %p143 = scmp.eq.s32.totalorder %s12, 0
    %p144 = por %p142, %p143
    %p145 = scmp.ne.s32.totalorder %s134, %s137
    %p146 = scmp.eq.s32.totalorder %s17, 1
    %p147 = por %p145, %p146
    %p148 = scmp.ne.s32.totalorder %s137, %s138
    %p149 = scmp.eq.s32.totalorder %s17, 0
    %p150 = por %p148, %p149
    %p151 = scmp.ne.s32.totalorder %s137, %s138
    %p152 = scmp.eq.s32.totalorder %s18, 1
    %p153 = por %p151, %p152
    %p155 = scmp.ne.s32.totalorder %s138, %s154
    %p156 = scmp.eq.s32.totalorder %s18, 0
    %p157 = por %p155, %p156
    %s158 = ssub.s32 %s19, %s31
    %s159 = ssub.s32 %s20, %s27
    %s160 = sor.u32 %s158, %s159
    %p161 = scmp.eq.s32.totalorder %s160, 0
    %s163 = sadd.s32 %s162, 1
    %s164 = scalar_select %p161, %s162, %s163
    %p167 = pneg %p161
    %p168 = scmp.eq.s32.totalorder %s12, 1
    %p169 = por %p167, %p168
    %p170 = scmp.ne.s32.totalorder %s162, %s165
    %p171 = scmp.eq.s32.totalorder %s12, 0
    %p172 = por %p170, %p171
    %p173 = scmp.ne.s32.totalorder %s162, %s165
    %p174 = scmp.eq.s32.totalorder %s17, 1
    %p175 = por %p173, %p174
    %p176 = scmp.ne.s32.totalorder %s165, %s166
    %p177 = scmp.eq.s32.totalorder %s17, 0
    %p178 = por %p176, %p177
    %p179 = scmp.ne.s32.totalorder %s165, %s166
    %p180 = scmp.eq.s32.totalorder %s18, 1
    %p181 = por %p179, %p180
    %p183 = scmp.ne.s32.totalorder %s166, %s182
    %p184 = scmp.eq.s32.totalorder %s18, 0
    %p185 = por %p183, %p184
    %p186 = scmp.le.s32.totalorder 1, %s12
    %p187 = scmp.lt.s32.totalorder %s12, 3
    %p188 = pnand %p186, %p187
    %p189 = pneg %p188
    // Predicated region
    $region9: #{transformer_forward.10} parent=5 // pred_check
      _
    $region10: #{transformer_forward.10} parent=5 // pred_check_branch
      %191 = sbr.rel (%p188) target = $region12
    $region11: #{transformer_forward.10} parent=5 // pred_region
      %s192 = ssub.s32 %s12, 1
      // Predicated region
      $region13: #{transformer_forward.10} parent=11 // pred_check
        %p193 = pneg %p73
      $region14: #{transformer_forward.10} parent=11 // pred_check_branch
        %195 = sbr.rel (%p193) target = $region16
      $region15: #{transformer_forward.10} parent=11 // pred_region
        _
      $region16: #{transformer_forward.10} parent=11 // pred_fallthru
        _
      // Predicated region
      $region17: #{transformer_forward.10} parent=11 // pred_check
        %p196 = pneg %p94
      $region18: #{transformer_forward.10} parent=11 // pred_check_branch
        %198 = sbr.rel (%p196) target = $region20
      $region19: #{transformer_forward.10} parent=11 // pred_region
        _
      $region20: #{transformer_forward.10} parent=11 // pred_fallthru
        _
    $region12: #{transformer_forward.10} parent=5 // pred_fallthru
      _
    %p199 = scmp.lt.s32.totalorder %s12, 2
    // Predicated region
    $region21: #{transformer_forward.10} parent=5 // pred_check
      %p200 = pneg %p199
    $region22: #{transformer_forward.10} parent=5 // pred_check_branch
      %202 = sbr.rel (%p200) target = $region24
    $region23: #{transformer_forward.10} parent=5 // pred_region
      // Predicated region
      $region25: #{transformer_forward.10} parent=23 // pred_check
        %p203 = pneg %p46
      $region26: #{transformer_forward.10} parent=23 // pred_check_branch
        %205 = sbr.rel (%p203) target = $region28
      $region27: #{transformer_forward.10} parent=23 // pred_region
        %p206 = scmp.lt.s32.totalorder %s19, 1
        %s207 = scalar_select %p206, %s19, 1
        %p208 = scmp.lt.s32.totalorder %s20, 0
        %s209 = scalar_select %p208, %s20, 0
        %s210 = sadd.s32 %s209, %s207
        %s211 = smul.addr %s210, 4
        %s212 = scalar_lea.vmem %s0, %s211
      $region28: #{transformer_forward.10} parent=23 // pred_fallthru
        _
    $region24: #{transformer_forward.10} parent=5 // pred_fallthru
      _
    %p213 = scmp.le.s32.totalorder 1, %s12
    %p214 = scmp.lt.s32.totalorder %s12, 3
    %p215 = pnand %p213, %p214
    %p216 = pneg %p215
    // Predicated region
    $region29: #{transformer_forward.10} parent=5 // pred_check
      _
    $region30: #{transformer_forward.10} parent=5 // pred_check_branch
      %218 = sbr.rel (%p215) target = $region32
    $region31: #{transformer_forward.10} parent=5 // pred_region
      %s219 = ssub.s32 %s12, 1
      %p220 = scmp.lt.s32.totalorder %s21, 1
      %s221 = scalar_select %p220, %s21, 1
      %p222 = scmp.lt.s32.totalorder %s22, 0
      %s223 = scalar_select %p222, %s22, 0
      %s224 = sadd.s32 %s223, %s221
      %s225 = smul.addr %s224, 4
      %s226 = scalar_lea.vmem %s0, %s225
      %p227 = pneg %p52
      %p228 = pneg %p49
      %p229 = pneg %p73
      %p230 = pneg %p70
      %p231 = pneg %p94
      %p232 = pneg %p91
      %p233 = pneg %p122
      %p234 = pneg %p119
      %p235 = scmp.lt.s32.totalorder %s21, 1
      %s236 = scalar_select %p235, %s21, 1
      %p237 = scmp.lt.s32.totalorder %s22, 0
      %s238 = scalar_select %p237, %s22, 0
      %s239 = smul.addr %s236, 4
      %s240 = sadd.s32 %s238, %s239
      %s241 = smul.addr %s240, 4
      %s242 = scalar_lea.vmem %s3, %s241
      %p243 = pneg %p150
      %p244 = pneg %p147
      %p245 = scmp.lt.s32.totalorder %s21, 1
      %s246 = scalar_select %p245, %s21, 1
      %p247 = scmp.lt.s32.totalorder %s22, 0
      %s248 = scalar_select %p247, %s22, 0
      %s249 = smul.addr %s246, 4
      %s250 = sadd.s32 %s248, %s249
      %s251 = smul.addr %s250, 4
      %s252 = scalar_lea.vmem %s4, %s251
      %p253 = pneg %p178
      %p254 = pneg %p175
      %p255 = scmp.lt.s32.totalorder %s21, 1
      %s256 = scalar_select %p255, %s21, 1
      %p257 = scmp.lt.s32.totalorder %s22, 0
      %s258 = scalar_select %p257, %s22, 0
      %s259 = smul.addr %s256, 4
      %s260 = sadd.s32 %s258, %s259
      %s261 = smul.addr %s260, 4
      %s262 = scalar_lea.vmem %s5, %s261
      %p263 = scmp.lt.s32.totalorder %s21, 1
      %s264 = scalar_select %p263, %s21, 1
      %p265 = scmp.lt.s32.totalorder %s22, 0
      %s266 = scalar_select %p265, %s22, 0
      %s267 = sadd.s32 %s266, %s264
      %s268 = smul.addr %s267, 4
      %s269 = scalar_lea.vmem %s0, %s268
      %p270 = scmp.lt.s32.totalorder %s21, 1
      %s271 = scalar_select %p270, %s21, 1
      %p272 = scmp.lt.s32.totalorder %s22, 0
      %s273 = scalar_select %p272, %s22, 0
      %s274 = smul.addr %s271, 4
      %s275 = sadd.s32 %s273, %s274
      %s276 = smul.addr %s275, 4
      %s277 = scalar_lea.vmem %s3, %s276
      %p278 = scmp.lt.s32.totalorder %s21, 1
      %s279 = scalar_select %p278, %s21, 1
      %p280 = scmp.lt.s32.totalorder %s22, 0
      %s281 = scalar_select %p280, %s22, 0
      %s282 = smul.addr %s279, 4
      %s283 = sadd.s32 %s281, %s282
      %s284 = smul.addr %s283, 4
      %s285 = scalar_lea.vmem %s4, %s284
      %p286 = scmp.lt.s32.totalorder %s21, 1
      %s287 = scalar_select %p286, %s21, 1
      %p288 = scmp.lt.s32.totalorder %s22, 0
      %s289 = scalar_select %p288, %s22, 0
      %s290 = smul.addr %s287, 4
      %s291 = sadd.s32 %s289, %s290
      %s292 = smul.addr %s291, 4
      %s293 = scalar_lea.vmem %s5, %s292
      %v295 = vld [vmem:[%s269] sm:$0xf]
      %v296 = vld [vmem:[%s1] sm:$0xf]
      %v297 = vld [vmem:[%s1 + $0x4] sm:$0xf]
      %v298 = vld [vmem:[%s1 + $0x8] sm:$0xf]
      %v299 = vld [vmem:[%s1 + $0xc] sm:$0xf]
      %v300 = vld [vmem:[%s2] sm:$0x1]
      %v302 = vlaneseq
      %v303 = vshrl.u32 %v302, 7
      %v304 = vsub.s32 0, %v303
      %v305 = vrot.slane %v300, %v304
      %v311 = vunpack.c.l.b16 %v296
      %v312 = vunpack.c.l.b16 %v297
      %v313 = vunpack.c.l.b16 %v298
      %v314 = vunpack.c.l.b16 %v299
      %v315 = vpack.c.b16 %v312, %v311
      %v316 = vpack.c.b16 %v314, %v313
      %vm319 = vcmask 261120
      %v321 = vsel %vm319, %v295, 0
      %323 = vmatprep.subr.bf16.mxu0 0
      %324 = vmatpush1.bf16.msra.mxu0 %v315
      %325 = vmatprep.subr.bf16.mxu0 0
      %326 = vmatpush1.bf16.msra.mxu0 %v316
      %327 = vmatprep.subr.bf16.mxu0 0
      %328 = vmatpush1.bf16.msra.mxu0 0
      %329 = vmatprep.subr.bf16.mxu0 0
      %330 = vmatpush1.bf16.msra.mxu0 0
      %331 = vmatprep.subr.bf16.mxu0 0
      %332 = vmatpush1.bf16.msra.mxu0 0
      %333 = vmatprep.subr.bf16.mxu0 0
      %334 = vmatpush1.bf16.msra.mxu0 0
      %335 = vmatprep.subr.bf16.mxu0 0
      %336 = vmatpush1.bf16.msra.mxu0 0
      %337 = vmatprep.subr.bf16.mxu0 0
      %338 = vmatpush1.bf16.msra.mxu0 0
      %339 = vmatprep.subr.bf16.mxu0 0
      %340 = vmatpush1.bf16.msra.mxu0 0
      %341 = vmatprep.subr.bf16.mxu0 0
      %342 = vmatpush1.bf16.msra.mxu0 0
      %343 = vmatprep.subr.bf16.mxu0 0
      %344 = vmatpush1.bf16.msra.mxu0 0
      %345 = vmatprep.subr.bf16.mxu0 0
      %346 = vmatpush1.bf16.msra.mxu0 0
      %347 = vmatprep.subr.bf16.mxu0 0
      %348 = vmatpush1.bf16.msra.mxu0 0
      %349 = vmatprep.subr.bf16.mxu0 0
      %350 = vmatpush1.bf16.msra.mxu0 0
      %351 = vmatprep.subr.bf16.mxu0 0
      %352 = vmatpush1.bf16.msra.mxu0 0
      %353 = vmatprep.subr.bf16.mxu0 0
      %354 = vmatpush1.bf16.msra.mxu0 0
      %355 = vmatprep.mubr.bf16.mxu0 0
      %356 = vmatmul.mubr.bf16.gmra.mrb[0].mxu0 %v321
      %v357 = vpop.f32.mrb[0].mxu0
      %v358 = vadd.f32 %v305, %v357
      %v359 = vpop.f32.mrb[0].mxu0
      %v360 = vpop.f32.mrb[0].mxu0
      %v361 = vpop.f32.mrb[0].mxu0
      %362 = vdwg.mxu0
      %v363 = vpack.c.bf16 %v358, %v358
      %vm364 = vcmask 60416
      %365 = vst.msk [vmem:[%s277] sm:$0xf] %vm364, %v363
      %v367 = vunpack.c.l.b16 %v363
      %v368 = vpack.c.b16 %v367, %v367
      %369 = vrot.lane.b32.xlu0 %v368, 96
      %v370 = vpop.permute.xlu0 %369
      %372 = vst.msk [vmem:[%s285] sm:$0xf] %vm364, %v370
      %373 = vrot.lane.b32.xlu0 %v368, 64
      %v374 = vpop.permute.xlu0 %373
      %376 = vst.msk [vmem:[%s293] sm:$0xf] %vm364, %v374
      %377 = vrot.lane.b32.xlu0 %v368, 120
      %v378 = vpop.permute.xlu0 %377
      %s380 = scalar_lea.vmem %s277, 4
      %381 = vst.msk [vmem:[%s380] sm:$0xf] %vm364, %v378
      %382 = vrot.lane.b32.xlu0 %v368, 88
      %v383 = vpop.permute.xlu0 %382
      %s385 = scalar_lea.vmem %s285, 4
      %386 = vst.msk [vmem:[%s385] sm:$0xf] %vm364, %v383
      %387 = vrot.lane.b32.xlu0 %v368, 56
      %v388 = vpop.permute.xlu0 %387
      %s390 = scalar_lea.vmem %s293, 4
      %391 = vst.msk [vmem:[%s390] sm:$0xf] %vm364, %v388
      %392 = vrot.lane.b32.xlu0 %v368, 112
      %v393 = vpop.permute.xlu0 %392
      %s395 = scalar_lea.vmem %s277, 8
      %396 = vst.msk [vmem:[%s395] sm:$0xf] %vm364, %v393
      %397 = vrot.lane.b32.xlu0 %v368, 80
      %v398 = vpop.permute.xlu0 %397
      %s400 = scalar_lea.vmem %s285, 8
      %401 = vst.msk [vmem:[%s400] sm:$0xf] %vm364, %v398
      %402 = vrot.lane.b32.xlu0 %v368, 48
      %v403 = vpop.permute.xlu0 %402
      %s405 = scalar_lea.vmem %s293, 8
      %406 = vst.msk [vmem:[%s405] sm:$0xf] %vm364, %v403
      %407 = vrot.lane.b32.xlu0 %v368, 104
      %v408 = vpop.permute.xlu0 %407
      %s410 = scalar_lea.vmem %s277, 12
      %411 = vst.msk [vmem:[%s410] sm:$0xf] %vm364, %v408
      %412 = vrot.lane.b32.xlu0 %v368, 72
      %v413 = vpop.permute.xlu0 %412
      %s415 = scalar_lea.vmem %s285, 12
      %416 = vst.msk [vmem:[%s415] sm:$0xf] %vm364, %v413
      %417 = vrot.lane.b32.xlu0 %v368, 40
      %v418 = vpop.permute.xlu0 %417
      %s420 = scalar_lea.vmem %s293, 12
      %421 = vst.msk [vmem:[%s420] sm:$0xf] %vm364, %v418
      %p422 = scmp.lt.s32.totalorder %s21, 1
      %s423 = scalar_select %p422, %s21, 1
      %p424 = scmp.lt.s32.totalorder %s22, 0
      %s425 = scalar_select %p424, %s22, 0
      %s426 = smul.addr %s423, 4
      %s427 = sadd.s32 %s425, %s426
      %s428 = smul.addr %s427, 4
      %s429 = scalar_lea.vmem %s3, %s428
      %p430 = scmp.lt.s32.totalorder %s21, 1
      %s431 = scalar_select %p430, %s21, 1
      %p432 = scmp.lt.s32.totalorder %s22, 0
      %s433 = scalar_select %p432, %s22, 0
      %s434 = smul.addr %s431, 4
      %s435 = sadd.s32 %s433, %s434
      %s436 = smul.addr %s435, 4
      %s437 = scalar_lea.vmem %s4, %s436
      %p438 = scmp.lt.s32.totalorder %s21, 1
      %s439 = scalar_select %p438, %s21, 1
      %p440 = scmp.lt.s32.totalorder %s22, 0
      %s441 = scalar_select %p440, %s22, 0
      %s442 = smul.addr %s439, 4
      %s443 = sadd.s32 %s441, %s442
      %s444 = smul.addr %s443, 4
      %s445 = scalar_lea.vmem %s5, %s444
      // Predicated region
      $region33: #{transformer_forward.10} parent=31 // pred_check
        %p446 = pneg %p119
      $region34: #{transformer_forward.10} parent=31 // pred_check_branch
        %448 = sbr.rel (%p446) target = $region36
      $region35: #{transformer_forward.10} parent=31 // pred_region
        _
      $region36: #{transformer_forward.10} parent=31 // pred_fallthru
        _
      // Predicated region
      $region37: #{transformer_forward.10} parent=31 // pred_check
        %p449 = pneg %p147
      $region38: #{transformer_forward.10} parent=31 // pred_check_branch
        %451 = sbr.rel (%p449) target = $region40
      $region39: #{transformer_forward.10} parent=31 // pred_region
        _
      $region40: #{transformer_forward.10} parent=31 // pred_fallthru
        _
      // Predicated region
      $region41: #{transformer_forward.10} parent=31 // pred_check
        %p452 = pneg %p175
      $region42: #{transformer_forward.10} parent=31 // pred_check_branch
        %454 = sbr.rel (%p452) target = $region44
      $region43: #{transformer_forward.10} parent=31 // pred_region
        _
      $region44: #{transformer_forward.10} parent=31 // pred_fallthru
        _
    $region32: #{transformer_forward.10} parent=5 // pred_fallthru
      _
    %p455 = scmp.le.s32.totalorder 2, %s12
    // Predicated region
    $region45: #{transformer_forward.10} parent=5 // pred_check
      %p456 = pneg %p455
    $region46: #{transformer_forward.10} parent=5 // pred_check_branch
      %458 = sbr.rel (%p456) target = $region48
    $region47: #{transformer_forward.10} parent=5 // pred_region
      %s459 = ssub.s32 %s12, 2
      // Predicated region
      $region49: #{transformer_forward.10} parent=47 // pred_check
        %p460 = pneg %p125
      $region50: #{transformer_forward.10} parent=47 // pred_check_branch
        %462 = sbr.rel (%p460) target = $region52
      $region51: #{transformer_forward.10} parent=47 // pred_region
        %p463 = scmp.lt.s32.totalorder %s23, 1
        %s464 = scalar_select %p463, %s23, 1
        %p465 = scmp.lt.s32.totalorder %s24, 0
        %s466 = scalar_select %p465, %s24, 0
        %s467 = smul.addr %s464, 4
        %s468 = sadd.s32 %s466, %s467
        %s469 = smul.addr %s468, 4
        %s470 = scalar_lea.vmem %s3, %s469
      $region52: #{transformer_forward.10} parent=47 // pred_fallthru
        _
      // Predicated region
      $region53: #{transformer_forward.10} parent=47 // pred_check
        %p471 = pneg %p153
      $region54: #{transformer_forward.10} parent=47 // pred_check_branch
        %473 = sbr.rel (%p471) target = $region56
      $region55: #{transformer_forward.10} parent=47 // pred_region
        %p474 = scmp.lt.s32.totalorder %s23, 1
        %s475 = scalar_select %p474, %s23, 1
        %p476 = scmp.lt.s32.totalorder %s24, 0
        %s477 = scalar_select %p476, %s24, 0
        %s478 = smul.addr %s475, 4
        %s479 = sadd.s32 %s477, %s478
        %s480 = smul.addr %s479, 4
        %s481 = scalar_lea.vmem %s4, %s480
      $region56: #{transformer_forward.10} parent=47 // pred_fallthru
        _
      // Predicated region
      $region57: #{transformer_forward.10} parent=47 // pred_check
        %p482 = pneg %p181
      $region58: #{transformer_forward.10} parent=47 // pred_check_branch
        %484 = sbr.rel (%p482) target = $region60
      $region59: #{transformer_forward.10} parent=47 // pred_region
        %p485 = scmp.lt.s32.totalorder %s23, 1
        %s486 = scalar_select %p485, %s23, 1
        %p487 = scmp.lt.s32.totalorder %s24, 0
        %s488 = scalar_select %p487, %s24, 0
        %s489 = smul.addr %s486, 4
        %s490 = sadd.s32 %s488, %s489
        %s491 = smul.addr %s490, 4
        %s492 = scalar_lea.vmem %s5, %s491
      $region60: #{transformer_forward.10} parent=47 // pred_fallthru
        _
    $region48: #{transformer_forward.10} parent=5 // pred_fallthru
      _
  $region6: #{transformer_forward.10} parent=0 // loop_footer
    %s16 = sadd.s32 1, %s12
  $region7: #{transformer_forward.10} parent=0 // loop_footer_branch
    %11 = sbr.rel target = $region3
  $region8: #{transformer_forward.10} parent=0 // loop_exit
    _

// kernel: transformer_forward.11
$region0: #{transformer_forward.11}
  #allocation0 [shape = 'u32[]', space=smem, size = 0x4, offset = 0x4, fixed_abs, tag = 'smem constant byte address 0x4 - core index']
  #allocation1 [shape = 'u32[144,128]{1,0:T(1,128)}', space=vmem, size = 0x12000, scoped, tag = 'internal scratch']
  #allocation2 [shape = 'f32[8,1]{1,0:T(8,128)}', space=vmem, size = 0x1000, scoped, tag = 'scratch operand']
  #allocation3 [shape = 'f32[8,1]{1,0:T(8,128)}', space=vmem, size = 0x1000, scoped, tag = 'scratch operand']
  #allocation4 [shape = 'f32[8,8]{1,0:T(8,128)}', space=vmem, size = 0x1000, scoped, tag = 'scratch operand']
  %s0 = inlined_call_operand.vmem [shape: f32[2,1,8], index: 0, kind: input, shape index: {}]
  %s1 = inlined_call_operand.vmem [shape: bf16[2,4,8,8], index: 1, kind: input, shape index: {}]
  %s2 = inlined_call_operand.vmem [shape: bf16[2,4,8,8], index: 2, kind: input, shape index: {}]
  %s3 = inlined_call_operand.vmem [shape: bf16[2,4,8,8], index: 3, kind: input, shape index: {}]
  %s4 = inlined_call_operand.vmem [shape: bf16[2,4,8,8], index: 4, kind: output, shape index: {}]
  %s5 = sld [smem:[#allocation0]]
  $region57: #{transformer_forward.11} parent=0
    _
  %s7 = ssub.s32 1, %s5
  %s8 = scalar_select 0, %s7, %s5
  loop: start=0, step=1, limit=10
  $region2: #{transformer_forward.11} parent=0 // loop_pre_header
    _
  $region3: #{transformer_forward.11} parent=0 // loop_header
    %s10 = sphi 0, %s14
    %p11 = scmp.ge.s32.totalorder %s10, 10
    %s17 = sphi 0, %s43
    %s18 = sphi 0, %s39
    %s19 = sphi 0, %s35
    %s20 = sphi 0, %s31
    %s21 = sphi 0, %s17
    %s22 = sphi 0, %s18
    %s23 = sphi 0, %s19
    %s24 = sphi 0, %s20
    %s25 = sphi 0, %s21
    %s26 = sphi 0, %s22
    %s27 = sphi 0, %s23
    %s28 = sphi 0, %s24
    %s48 = sphi 0, %s50
    %s51 = sphi 0, %s48
    %s52 = sphi 0, %s51
    %s68 = sphi 0, %s52
    %s78 = sphi 0, %s80
    %s81 = sphi 0, %s78
    %s82 = sphi 0, %s81
    %s98 = sphi 0, %s82
    %s108 = sphi 0, %s110
    %s111 = sphi 0, %s108
    %s112 = sphi 0, %s111
    %s128 = sphi 0, %s112
    %s138 = sphi 0, %s140
    %s141 = sphi 0, %s138
    %s142 = sphi 0, %s141
    %s158 = sphi 0, %s142
    %s168 = sphi 0, %s170
    %s171 = sphi 0, %s168
    %s172 = sphi 0, %s171
    %s188 = sphi 0, %s172
  $region4: #{transformer_forward.11} parent=0 // loop_header_branch
    %13 = sbr.rel (%p11) target = $region8
  $region5: #{transformer_forward.11} parent=0 // loop_body
    %s15 = ssub.s32 %s10, 1
    %s16 = ssub.s32 %s10, 2
    %s29 = sadd.s32 1, %s20
    %p30 = scmp.ge.s32.totalorder %s29, 1
    %s31 = scalar_select %p30, 0, %s29
    %s32 = sadd.s32 1, %s19
    %s33 = scalar_select %p30, %s32, %s19
    %p34 = scmp.ge.s32.totalorder %s33, 1
    %s35 = scalar_select %p34, 0, %s33
    %s36 = sadd.s32 1, %s18
    %s37 = scalar_select %p34, %s36, %s18
    %p38 = scmp.ge.s32.totalorder %s37, 4
    %s39 = scalar_select %p38, 0, %s37
    %s40 = sadd.s32 1, %s17
    %s41 = scalar_select %p38, %s40, %s17
    %p42 = scmp.ge.s32.totalorder %s41, 2
    %s43 = scalar_select %p42, 0, %s41
    %s44 = ssub.s32 %s17, %s43
    %s45 = ssub.s32 %s20, %s31
    %s46 = sor.u32 %s44, %s45
    %p47 = scmp.eq.s32.totalorder %s46, 0
    %s49 = sadd.s32 %s48, 1
    %s50 = scalar_select %p47, %s48, %s49
    %p53 = pneg %p47
    %p54 = scmp.eq.s32.totalorder %s10, 7
    %p55 = por %p53, %p54
    %p56 = scmp.ne.s32.totalorder %s48, %s51
    %p57 = scmp.eq.s32.totalorder %s10, 0
    %p58 = por %p56, %p57
    %p59 = scmp.ne.s32.totalorder %s48, %s51
    %p60 = scmp.eq.s32.totalorder %s15, 7
    %p61 = por %p59, %p60
    %p62 = scmp.ne.s32.totalorder %s51, %s52
    %p63 = scmp.eq.s32.totalorder %s15, 0
    %p64 = por %p62, %p63
    %p65 = scmp.ne.s32.totalorder %s51, %s52
    %p66 = scmp.eq.s32.totalorder %s16, 7
    %p67 = por %p65, %p66
    %p69 = scmp.ne.s32.totalorder %s52, %s68
    %p70 = scmp.eq.s32.totalorder %s16, 0
    %p71 = por %p69, %p70
    %s72 = ssub.s32 %s17, %s43
    %s73 = ssub.s32 %s18, %s39
    %s74 = sor.u32 %s72, %s73
    %s75 = ssub.s32 %s19, %s35
    %s76 = sor.u32 %s74, %s75
    %p77 = scmp.eq.s32.totalorder %s76, 0
    %s79 = sadd.s32 %s78, 1
    %s80 = scalar_select %p77, %s78, %s79
    %p83 = pneg %p77
    %p84 = scmp.eq.s32.totalorder %s10, 7
    %p85 = por %p83, %p84
    %p86 = scmp.ne.s32.totalorder %s78, %s81
    %p87 = scmp.eq.s32.totalorder %s10, 0
    %p88 = por %p86, %p87
    %p89 = scmp.ne.s32.totalorder %s78, %s81
    %p90 = scmp.eq.s32.totalorder %s15, 7
    %p91 = por %p89, %p90
    %p92 = scmp.ne.s32.totalorder %s81, %s82
    %p93 = scmp.eq.s32.totalorder %s15, 0
    %p94 = por %p92, %p93
    %p95 = scmp.ne.s32.totalorder %s81, %s82
    %p96 = scmp.eq.s32.totalorder %s16, 7
    %p97 = por %p95, %p96
    %p99 = scmp.ne.s32.totalorder %s82, %s98
    %p100 = scmp.eq.s32.totalorder %s16, 0
    %p101 = por %p99, %p100
    %s102 = ssub.s32 %s17, %s43
    %s103 = ssub.s32 %s18, %s39
    %s104 = sor.u32 %s102, %s103
    %s105 = ssub.s32 %s20, %s31
    %s106 = sor.u32 %s104, %s105
    %p107 = scmp.eq.s32.totalorder %s106, 0
    %s109 = sadd.s32 %s108, 1
    %s110 = scalar_select %p107, %s108, %s109
    %p113 = pneg %p107
    %p114 = scmp.eq.s32.totalorder %s10, 7
    %p115 = por %p113, %p114
    %p116 = scmp.ne.s32.totalorder %s108, %s111
    %p117 = scmp.eq.s32.totalorder %s10, 0
    %p118 = por %p116, %p117
    %p119 = scmp.ne.s32.totalorder %s108, %s111
    %p120 = scmp.eq.s32.totalorder %s15, 7
    %p121 = por %p119, %p120
    %p122 = scmp.ne.s32.totalorder %s111, %s112
    %p123 = scmp.eq.s32.totalorder %s15, 0
    %p124 = por %p122, %p123
    %p125 = scmp.ne.s32.totalorder %s111, %s112
    %p126 = scmp.eq.s32.totalorder %s16, 7
    %p127 = por %p125, %p126
    %p129 = scmp.ne.s32.totalorder %s112, %s128
    %p130 = scmp.eq.s32.totalorder %s16, 0
    %p131 = por %p129, %p130
    %s132 = ssub.s32 %s17, %s43
    %s133 = ssub.s32 %s18, %s39
    %s134 = sor.u32 %s132, %s133
    %s135 = ssub.s32 %s20, %s31
    %s136 = sor.u32 %s134, %s135
    %p137 = scmp.eq.s32.totalorder %s136, 0
    %s139 = sadd.s32 %s138, 1
    %s140 = scalar_select %p137, %s138, %s139
    %p143 = pneg %p137
    %p144 = scmp.eq.s32.totalorder %s10, 7
    %p145 = por %p143, %p144
    %p146 = scmp.ne.s32.totalorder %s138, %s141
    %p147 = scmp.eq.s32.totalorder %s10, 0
    %p148 = por %p146, %p147
    %p149 = scmp.ne.s32.totalorder %s138, %s141
    %p150 = scmp.eq.s32.totalorder %s15, 7
    %p151 = por %p149, %p150
    %p152 = scmp.ne.s32.totalorder %s141, %s142
    %p153 = scmp.eq.s32.totalorder %s15, 0
    %p154 = por %p152, %p153
    %p155 = scmp.ne.s32.totalorder %s141, %s142
    %p156 = scmp.eq.s32.totalorder %s16, 7
    %p157 = por %p155, %p156
    %p159 = scmp.ne.s32.totalorder %s142, %s158
    %p160 = scmp.eq.s32.totalorder %s16, 0
    %p161 = por %p159, %p160
    %s162 = ssub.s32 %s17, %s43
    %s163 = ssub.s32 %s18, %s39
    %s164 = sor.u32 %s162, %s163
    %s165 = ssub.s32 %s19, %s35
    %s166 = sor.u32 %s164, %s165
    %p167 = scmp.eq.s32.totalorder %s166, 0
    %s169 = sadd.s32 %s168, 1
    %s170 = scalar_select %p167, %s168, %s169
    %p173 = pneg %p167
    %p174 = scmp.eq.s32.totalorder %s10, 7
    %p175 = por %p173, %p174
    %p176 = scmp.ne.s32.totalorder %s168, %s171
    %p177 = scmp.eq.s32.totalorder %s10, 0
    %p178 = por %p176, %p177
    %p179 = scmp.ne.s32.totalorder %s168, %s171
    %p180 = scmp.eq.s32.totalorder %s15, 7
    %p181 = por %p179, %p180
    %p182 = scmp.ne.s32.totalorder %s171, %s172
    %p183 = scmp.eq.s32.totalorder %s15, 0
    %p184 = por %p182, %p183
    %p185 = scmp.ne.s32.totalorder %s171, %s172
    %p186 = scmp.eq.s32.totalorder %s16, 7
    %p187 = por %p185, %p186
    %p189 = scmp.ne.s32.totalorder %s172, %s188
    %p190 = scmp.eq.s32.totalorder %s16, 0
    %p191 = por %p189, %p190
    %p192 = scmp.le.s32.totalorder 1, %s10
    %p193 = scmp.lt.s32.totalorder %s10, 9
    %p194 = pnand %p192, %p193
    %p195 = pneg %p194
    // Predicated region
    $region9: #{transformer_forward.11} parent=5 // pred_check
      _
    $region10: #{transformer_forward.11} parent=5 // pred_check_branch
      %197 = sbr.rel (%p194) target = $region12
    $region11: #{transformer_forward.11} parent=5 // pred_region
      %s198 = ssub.s32 %s10, 1
    $region12: #{transformer_forward.11} parent=5 // pred_fallthru
      _
    %p199 = scmp.lt.s32.totalorder %s10, 8
    // Predicated region
    $region13: #{transformer_forward.11} parent=5 // pred_check
      %p200 = pneg %p199
    $region14: #{transformer_forward.11} parent=5 // pred_check_branch
      %202 = sbr.rel (%p200) target = $region16
    $region15: #{transformer_forward.11} parent=5 // pred_region
      // Predicated region
      $region17: #{transformer_forward.11} parent=15 // pred_check
        %p203 = pneg %p58
      $region18: #{transformer_forward.11} parent=15 // pred_check_branch
        %205 = sbr.rel (%p203) target = $region20
      $region19: #{transformer_forward.11} parent=15 // pred_region
        %p206 = scmp.lt.s32.totalorder %s17, 1
        %s207 = scalar_select %p206, %s17, 1
        %p208 = scmp.lt.s32.totalorder %s20, 0
        %s209 = scalar_select %p208, %s20, 0
        %s210 = sadd.s32 %s209, %s207
        %s211 = scalar_lea.vmem %s0, %s210
      $region20: #{transformer_forward.11} parent=15 // pred_fallthru
        _
      // Predicated region
      $region21: #{transformer_forward.11} parent=15 // pred_check
        %p212 = pneg %p88
      $region22: #{transformer_forward.11} parent=15 // pred_check_branch
        %214 = sbr.rel (%p212) target = $region24
      $region23: #{transformer_forward.11} parent=15 // pred_region
        %p215 = scmp.lt.s32.totalorder %s17, 1
        %s216 = scalar_select %p215, %s17, 1
        %p217 = scmp.lt.s32.totalorder %s18, 3
        %s218 = scalar_select %p217, %s18, 3
        %p219 = scmp.lt.s32.totalorder %s19, 0
        %s220 = scalar_select %p219, %s19, 0
        %s221 = sadd.s32 %s220, %s218
        %s222 = smul.addr %s216, 4
        %s223 = sadd.s32 %s221, %s222
        %s224 = smul.addr %s223, 4
        %s225 = scalar_lea.vmem %s1, %s224
      $region24: #{transformer_forward.11} parent=15 // pred_fallthru
        _
      // Predicated region
      $region25: #{transformer_forward.11} parent=15 // pred_check
        %p226 = pneg %p118
      $region26: #{transformer_forward.11} parent=15 // pred_check_branch
        %228 = sbr.rel (%p226) target = $region28
      $region27: #{transformer_forward.11} parent=15 // pred_region
        %p229 = scmp.lt.s32.totalorder %s17, 1
        %s230 = scalar_select %p229, %s17, 1
        %p231 = scmp.lt.s32.totalorder %s18, 3
        %s232 = scalar_select %p231, %s18, 3
        %p233 = scmp.lt.s32.totalorder %s20, 0
        %s234 = scalar_select %p233, %s20, 0
        %s235 = sadd.s32 %s234, %s232
        %s236 = smul.addr %s230, 4
        %s237 = sadd.s32 %s235, %s236
        %s238 = smul.addr %s237, 4
        %s239 = scalar_lea.vmem %s2, %s238
      $region28: #{transformer_forward.11} parent=15 // pred_fallthru
        _
      // Predicated region
      $region29: #{transformer_forward.11} parent=15 // pred_check
        %p240 = pneg %p148
      $region30: #{transformer_forward.11} parent=15 // pred_check_branch
        %242 = sbr.rel (%p240) target = $region32
      $region31: #{transformer_forward.11} parent=15 // pred_region
        %p243 = scmp.lt.s32.totalorder %s17, 1
        %s244 = scalar_select %p243, %s17, 1
        %p245 = scmp.lt.s32.totalorder %s18, 3
        %s246 = scalar_select %p245, %s18, 3
        %p247 = scmp.lt.s32.totalorder %s20, 0
        %s248 = scalar_select %p247, %s20, 0
        %s249 = sadd.s32 %s248, %s246
        %s250 = smul.addr %s244, 4
        %s251 = sadd.s32 %s249, %s250
        %s252 = smul.addr %s251, 4
        %s253 = scalar_lea.vmem %s3, %s252
      $region32: #{transformer_forward.11} parent=15 // pred_fallthru
        _
    $region16: #{transformer_forward.11} parent=5 // pred_fallthru
      _
    %p254 = scmp.le.s32.totalorder 1, %s10
    %p255 = scmp.lt.s32.totalorder %s10, 9
    %p256 = pnand %p254, %p255
    %p257 = pneg %p256
    // Predicated region
    $region33: #{transformer_forward.11} parent=5 // pred_check
      _
    $region34: #{transformer_forward.11} parent=5 // pred_check_branch
      %259 = sbr.rel (%p256) target = $region36
    $region35: #{transformer_forward.11} parent=5 // pred_region
      %s260 = ssub.s32 %s10, 1
      %p261 = scmp.lt.s32.totalorder %s21, 1
      %s262 = scalar_select %p261, %s21, 1
      %p263 = scmp.lt.s32.totalorder %s24, 0
      %s264 = scalar_select %p263, %s24, 0
      %s265 = sadd.s32 %s264, %s262
      %s266 = scalar_lea.vmem %s0, %s265
      %p267 = pneg %p64
      %p268 = pneg %p61
      %p269 = scmp.lt.s32.totalorder %s21, 1
      %s270 = scalar_select %p269, %s21, 1
      %p271 = scmp.lt.s32.totalorder %s22, 3
      %s272 = scalar_select %p271, %s22, 3
      %p273 = scmp.lt.s32.totalorder %s23, 0
      %s274 = scalar_select %p273, %s23, 0
      %s275 = sadd.s32 %s274, %s272
      %s276 = smul.addr %s270, 4
      %s277 = sadd.s32 %s275, %s276
      %s278 = smul.addr %s277, 4
      %s279 = scalar_lea.vmem %s1, %s278
      %p280 = pneg %p94
      %p281 = pneg %p91
      %p282 = scmp.lt.s32.totalorder %s21, 1
      %s283 = scalar_select %p282, %s21, 1
      %p284 = scmp.lt.s32.totalorder %s22, 3
      %s285 = scalar_select %p284, %s22, 3
      %p286 = scmp.lt.s32.totalorder %s24, 0
      %s287 = scalar_select %p286, %s24, 0
      %s288 = sadd.s32 %s287, %s285
      %s289 = smul.addr %s283, 4
      %s290 = sadd.s32 %s288, %s289
      %s291 = smul.addr %s290, 4
      %s292 = scalar_lea.vmem %s2, %s291
      %p293 = pneg %p124
      %p294 = pneg %p121
      %p295 = scmp.lt.s32.totalorder %s21, 1
      %s296 = scalar_select %p295, %s21, 1
      %p297 = scmp.lt.s32.totalorder %s22, 3
      %s298 = scalar_select %p297, %s22, 3
      %p299 = scmp.lt.s32.totalorder %s24, 0
      %s300 = scalar_select %p299, %s24, 0
      %s301 = sadd.s32 %s300, %s298
      %s302 = smul.addr %s296, 4
      %s303 = sadd.s32 %s301, %s302
      %s304 = smul.addr %s303, 4
      %s305 = scalar_lea.vmem %s3, %s304
      %p306 = pneg %p154
      %p307 = pneg %p151
      %p308 = pneg %p184
      %p309 = pneg %p181
      %p310 = scmp.lt.s32.totalorder %s21, 1
      %s311 = scalar_select %p310, %s21, 1
      %p312 = scmp.lt.s32.totalorder %s22, 3
      %s313 = scalar_select %p312, %s22, 3
      %p314 = scmp.lt.s32.totalorder %s23, 0
      %s315 = scalar_select %p314, %s23, 0
      %s316 = sadd.s32 %s315, %s313
      %s317 = smul.addr %s311, 4
      %s318 = sadd.s32 %s316, %s317
      %s319 = smul.addr %s318, 4
      %s320 = scalar_lea.vmem %s4, %s319
      %p321 = scmp.lt.s32.totalorder %s21, 1
      %s322 = scalar_select %p321, %s21, 1
      %p323 = scmp.lt.s32.totalorder %s24, 0
      %s324 = scalar_select %p323, %s24, 0
      %s325 = sadd.s32 %s324, %s322
      %s326 = scalar_lea.vmem %s0, %s325
      %p327 = scmp.lt.s32.totalorder %s21, 1
      %s328 = scalar_select %p327, %s21, 1
      %p329 = scmp.lt.s32.totalorder %s22, 3
      %s330 = scalar_select %p329, %s22, 3
      %p331 = scmp.lt.s32.totalorder %s23, 0
      %s332 = scalar_select %p331, %s23, 0
      %s333 = sadd.s32 %s332, %s330
      %s334 = smul.addr %s328, 4
      %s335 = sadd.s32 %s333, %s334
      %s336 = smul.addr %s335, 4
      %s337 = scalar_lea.vmem %s1, %s336
      %p338 = scmp.lt.s32.totalorder %s21, 1
      %s339 = scalar_select %p338, %s21, 1
      %p340 = scmp.lt.s32.totalorder %s22, 3
      %s341 = scalar_select %p340, %s22, 3
      %p342 = scmp.lt.s32.totalorder %s24, 0
      %s343 = scalar_select %p342, %s24, 0
      %s344 = sadd.s32 %s343, %s341
      %s345 = smul.addr %s339, 4
      %s346 = sadd.s32 %s344, %s345
      %s347 = smul.addr %s346, 4
      %s348 = scalar_lea.vmem %s2, %s347
      %p349 = scmp.lt.s32.totalorder %s21, 1
      %s350 = scalar_select %p349, %s21, 1
      %p351 = scmp.lt.s32.totalorder %s22, 3
      %s352 = scalar_select %p351, %s22, 3
      %p353 = scmp.lt.s32.totalorder %s24, 0
      %s354 = scalar_select %p353, %s24, 0
      %s355 = sadd.s32 %s354, %s352
      %s356 = smul.addr %s350, 4
      %s357 = sadd.s32 %s355, %s356
      %s358 = smul.addr %s357, 4
      %s359 = scalar_lea.vmem %s3, %s358
      %p360 = scmp.lt.s32.totalorder %s21, 1
      %s361 = scalar_select %p360, %s21, 1
      %p362 = scmp.lt.s32.totalorder %s22, 3
      %s363 = scalar_select %p362, %s22, 3
      %p364 = scmp.lt.s32.totalorder %s23, 0
      %s365 = scalar_select %p364, %s23, 0
      %s366 = sadd.s32 %s365, %s363
      %s367 = smul.addr %s361, 4
      %s368 = sadd.s32 %s366, %s367
      %s369 = smul.addr %s368, 4
      %s370 = scalar_lea.vmem %s4, %s369
      %p372 = scmp.eq.s32.totalorder %s24, 0
      // Predicated region
      $region37: #{transformer_forward.11} parent=35 // pred_check
        %p373 = pneg %p372
      $region38: #{transformer_forward.11} parent=35 // pred_check_branch
        %375 = sbr.rel (%p373) target = $region40
      $region39: #{transformer_forward.11} parent=35 // pred_region
        %vm376 = vcmask 7168
        %377 = vst.msk [vmem:[#allocation2] sm:$0xff] %vm376, -inf
        %378 = vst.msk [vmem:[#allocation3] sm:$0xff] %vm376, 0.0
        %vm379 = vcmask 64512
        %380 = vst.msk [vmem:[#allocation4] sm:$0xff] %vm379, 0.0
      $region40: #{transformer_forward.11} parent=35 // pred_fallthru
        _
      %v381 = vld [vmem:[%s337] sm:$0xf]
      %v382 = vld [vmem:[%s348] sm:$0xf]
      %v383 = vld [vmem:[%s359] sm:$0xf]
      %vm384 = vcmask 64512
      %v386 = vsel %vm384, %v381, 0
      %v389 = vsel %vm384, %v382, 0
      %391 = vmatprep.subr.bf16.mxu0 0
      %392 = vmatpush1.bf16.xpose.msra.mxu0 %v389
      %393 = vmatprep.subr.bf16.mxu0 0
      %394 = vmatpush1.bf16.xpose.msra.mxu0 0
      %395 = vmatprep.subr.bf16.mxu0 0
      %396 = vmatpush1.bf16.xpose.msra.mxu0 0
      %397 = vmatprep.subr.bf16.mxu0 0
      %398 = vmatpush1.bf16.xpose.msra.mxu0 0
      %399 = vmatprep.subr.bf16.mxu0 0
      %400 = vmatpush1.bf16.xpose.msra.mxu0 0
      %401 = vmatprep.subr.bf16.mxu0 0
      %402 = vmatpush1.bf16.xpose.msra.mxu0 0
      %403 = vmatprep.subr.bf16.mxu0 0
      %404 = vmatpush1.bf16.xpose.msra.mxu0 0
      %405 = vmatprep.subr.bf16.mxu0 0
      %406 = vmatpush1.bf16.xpose.msra.mxu0 0
      %407 = vmatprep.subr.bf16.mxu0 0
      %408 = vmatpush1.bf16.xpose.msra.mxu0 0
      %409 = vmatprep.subr.bf16.mxu0 0
      %410 = vmatpush1.bf16.xpose.msra.mxu0 0
      %411 = vmatprep.subr.bf16.mxu0 0
      %412 = vmatpush1.bf16.xpose.msra.mxu0 0
      %413 = vmatprep.subr.bf16.mxu0 0
      %414 = vmatpush1.bf16.xpose.msra.mxu0 0
      %415 = vmatprep.subr.bf16.mxu0 0
      %416 = vmatpush1.bf16.xpose.msra.mxu0 0
      %417 = vmatprep.subr.bf16.mxu0 0
      %418 = vmatpush1.bf16.xpose.msra.mxu0 0
      %419 = vmatprep.subr.bf16.mxu0 0
      %420 = vmatpush1.bf16.xpose.msra.mxu0 0
      %421 = vmatprep.subr.bf16.mxu0 0
      %422 = vmatpush1.bf16.xpose.msra.mxu0 0
      %423 = vmatprep.mubr.bf16.mxu0 0
      %424 = vmatmul.mubr.bf16.gmra.mrb[0].mxu0 %v386
      %v425 = vpop.f32.mrb[0].mxu0
      %v426 = vadd.f32 0.0, %v425
      %v427 = vpop.f32.mrb[0].mxu0
      %v428 = vpop.f32.mrb[0].mxu0
      %v429 = vpop.f32.mrb[0].mxu0
      %430 = vdwg.mxu0
      %v431 = vmul.f32 %v426, 0.35355338
      %v432 = vld [vmem:[%s326] sm:$0x1]
      %v434 = vlaneseq
      %v435 = vshrl.u32 %v434, 7
      %v436 = vsub.s32 0, %v435
      %v437 = vrot.slane %v432, %v436
      %v439 = vadd.f32 %v431, %v437
      %v440 = vld [vmem:[#allocation2] sm:$0xff]
      %v441 = vsel %vm384, %v439, -inf
      %442 = vmax.xlane.f32.xlu0 %v441
      %v443 = vpop.xlane.xlu0 %442
      %v444 = vmax.f32 %v440, %v443
      %v445 = vsub.f32 %v440, %v444
      %v446 = vmul.f32 %v445, 1.442695
      %v447 = vpow.pop %v446
      %449 = vset.pattern.permute.xlu0 0
      %450 = vperm.xlu0 %449, %v444
      %v451 = vpop.permute.xlu0 %450
      %v453 = vsub.f32 %v439, %v451
      %v454 = vmul.f32 %v453, 1.442695
      %v455 = vpow.pop %v454
      %v456 = vld [vmem:[#allocation3] sm:$0xff]
      %v457 = vmul.f32 %v447, %v456
      %v458 = vsel %vm384, %v455, 0.0
      %459 = vadd.xlane.f32.xlu0 %v458
      %v460 = vpop.xlane.xlu0 %459
      %v461 = vadd.f32 %v457, %v460
      %vm462 = vcmask 7168
      %463 = vst.msk [vmem:[#allocation3] sm:$0xff] %vm462, %v461
      %v464 = vld [vmem:[#allocation4] sm:$0xff]
      %466 = vset.pattern.permute.xlu0 0
      %467 = vperm.xlu0 %466, %v447
      %v468 = vpop.permute.xlu0 %467
      %v470 = vmul.f32 %v468, %v464
      %v471 = vpack.c.bf16 %v455, %v455
      %v473 = vsel %vm384, %v471, 0
      %vm475 = vcmask 1043456
      %v477 = vsel %vm475, %v383, 0
      %479 = vmatprep.subr.bf16.mxu0 0
      %480 = vmatpush1.bf16.msra.mxu0 %v477
      %481 = vmatprep.subr.bf16.mxu0 0
      %482 = vmatpush1.bf16.msra.mxu0 0
      %483 = vmatprep.subr.bf16.mxu0 0
      %484 = vmatpush1.bf16.msra.mxu0 0
      %485 = vmatprep.subr.bf16.mxu0 0
      %486 = vmatpush1.bf16.msra.mxu0 0
      %487 = vmatprep.subr.bf16.mxu0 0
      %488 = vmatpush1.bf16.msra.mxu0 0
      %489 = vmatprep.subr.bf16.mxu0 0
      %490 = vmatpush1.bf16.msra.mxu0 0
      %491 = vmatprep.subr.bf16.mxu0 0
      %492 = vmatpush1.bf16.msra.mxu0 0
      %493 = vmatprep.subr.bf16.mxu0 0
      %494 = vmatpush1.bf16.msra.mxu0 0
      %495 = vmatprep.subr.bf16.mxu0 0
      %496 = vmatpush1.bf16.msra.mxu0 0
      %497 = vmatprep.subr.bf16.mxu0 0
      %498 = vmatpush1.bf16.msra.mxu0 0
      %499 = vmatprep.subr.bf16.mxu0 0
      %500 = vmatpush1.bf16.msra.mxu0 0
      %501 = vmatprep.subr.bf16.mxu0 0
      %502 = vmatpush1.bf16.msra.mxu0 0
      %503 = vmatprep.subr.bf16.mxu0 0
      %504 = vmatpush1.bf16.msra.mxu0 0
      %505 = vmatprep.subr.bf16.mxu0 0
      %506 = vmatpush1.bf16.msra.mxu0 0
      %507 = vmatprep.subr.bf16.mxu0 0
      %508 = vmatpush1.bf16.msra.mxu0 0
      %509 = vmatprep.subr.bf16.mxu0 0
      %510 = vmatpush1.bf16.msra.mxu0 0
      %511 = vmatprep.mubr.bf16.mxu0 0
      %512 = vmatmul.mubr.bf16.gmra.mrb[0].mxu0 %v473
      %v513 = vpop.f32.mrb[0].mxu0
      %v514 = vadd.f32 0.0, %v513
      %v515 = vpop.f32.mrb[0].mxu0
      %v516 = vpop.f32.mrb[0].mxu0
      %v517 = vpop.f32.mrb[0].mxu0
      %518 = vdwg.mxu0
      %v519 = vadd.f32 %v470, %v514
      %520 = vst.msk [vmem:[#allocation4] sm:$0xff] %vm384, %v519
      %521 = vst.msk [vmem:[#allocation2] sm:$0xff] %vm462, %v444
      // Predicated region
      $region41: #{transformer_forward.11} parent=35 // pred_check
        %p522 = pneg %p372
      $region42: #{transformer_forward.11} parent=35 // pred_check_branch
        %524 = sbr.rel (%p522) target = $region44
      $region43: #{transformer_forward.11} parent=35 // pred_region
        %v525 = vld [vmem:[#allocation3] sm:$0xff]
        %v526 = vrcp.pop %v525
        %v527 = vld [vmem:[#allocation4] sm:$0xff]
        %529 = vset.pattern.permute.xlu0 0
        %530 = vperm.xlu0 %529, %v526
        %v531 = vpop.permute.xlu0 %530
        %v533 = vmul.f32 %v527, %v531
        %v534 = vpack.c.bf16 %v533, %v533
        %vm535 = vcmask 60416
        %536 = vst.msk [vmem:[%s370] sm:$0xf] %vm535, %v534
      $region44: #{transformer_forward.11} parent=35 // pred_fallthru
        _
      %p537 = scmp.lt.s32.totalorder %s21, 1
      %s538 = scalar_select %p537, %s21, 1
      %p539 = scmp.lt.s32.totalorder %s22, 3
      %s540 = scalar_select %p539, %s22, 3
      %p541 = scmp.lt.s32.totalorder %s23, 0
      %s542 = scalar_select %p541, %s23, 0
      %s543 = sadd.s32 %s542, %s540
      %s544 = smul.addr %s538, 4
      %s545 = sadd.s32 %s543, %s544
      %s546 = smul.addr %s545, 4
      %s547 = scalar_lea.vmem %s4, %s546
      // Predicated region
      $region45: #{transformer_forward.11} parent=35 // pred_check
        %p548 = pneg %p181
      $region46: #{transformer_forward.11} parent=35 // pred_check_branch
        %550 = sbr.rel (%p548) target = $region48
      $region47: #{transformer_forward.11} parent=35 // pred_region
        _
      $region48: #{transformer_forward.11} parent=35 // pred_fallthru
        _
    $region36: #{transformer_forward.11} parent=5 // pred_fallthru
      _
    %p551 = scmp.le.s32.totalorder 2, %s10
    // Predicated region
    $region49: #{transformer_forward.11} parent=5 // pred_check
      %p552 = pneg %p551
    $region50: #{transformer_forward.11} parent=5 // pred_check_branch
      %554 = sbr.rel (%p552) target = $region52
    $region51: #{transformer_forward.11} parent=5 // pred_region
      %s555 = ssub.s32 %s10, 2
      // Predicated region
      $region53: #{transformer_forward.11} parent=51 // pred_check
        %p556 = pneg %p187
      $region54: #{transformer_forward.11} parent=51 // pred_check_branch
        %558 = sbr.rel (%p556) target = $region56
      $region55: #{transformer_forward.11} parent=51 // pred_region
        %p559 = scmp.lt.s32.totalorder %s25, 1
        %s560 = scalar_select %p559, %s25, 1
        %p561 = scmp.lt.s32.totalorder %s26, 3
        %s562 = scalar_select %p561, %s26, 3
        %p563 = scmp.lt.s32.totalorder %s27, 0
        %s564 = scalar_select %p563, %s27, 0
        %s565 = sadd.s32 %s564, %s562
        %s566 = smul.addr %s560, 4
        %s567 = sadd.s32 %s565, %s566
        %s568 = smul.addr %s567, 4
        %s569 = scalar_lea.vmem %s4, %s568
      $region56: #{transformer_forward.11} parent=51 // pred_fallthru
        _
    $region52: #{transformer_forward.11} parent=5 // pred_fallthru
      _
  $region6: #{transformer_forward.11} parent=0 // loop_footer
    %s14 = sadd.s32 1, %s10
  $region7: #{transformer_forward.11} parent=0 // loop_footer_branch
    %9 = sbr.rel target = $region3
  $region8: #{transformer_forward.11} parent=0 // loop_exit
    _

// kernel: transformer_forward.12
$region0: #{transformer_forward.12}
  #allocation0 [shape = 'u32[]', space=smem, size = 0x4, offset = 0x4, fixed_abs, tag = 'smem constant byte address 0x4 - core index']
  #allocation1 [shape = 'u32[144,128]{1,0:T(1,128)}', space=vmem, size = 0x12000, scoped, tag = 'internal scratch']
  %s0 = inlined_call_operand.vmem [shape: bf16[2,4,8,8], index: 0, kind: input, shape index: {}]
  %s1 = inlined_call_operand.vmem [shape: bf16[4,8,32], index: 1, kind: input, shape index: {}]
  %s2 = inlined_call_operand.vmem [shape: f32[1,32], index: 2, kind: input, shape index: {}]
  %s3 = inlined_call_operand.vmem [shape: bf16[2,8,32], index: 3, kind: input, shape index: {}]
  %s4 = inlined_call_operand.vmem [shape: f32[1,32], index: 4, kind: input, shape index: {}]
  %s5 = inlined_call_operand.vmem [shape: f32[1,32], index: 5, kind: input, shape index: {}]
  %s6 = inlined_call_operand.vmem [shape: bf16[2,8,32], index: 6, kind: output, shape index: {}]
  %s7 = sld [smem:[#allocation0]]
  $region57: #{transformer_forward.12} parent=0
    _
  %s9 = ssub.s32 1, %s7
  %s10 = scalar_select 0, %s9, %s7
  loop: start=0, step=1, limit=4
  $region2: #{transformer_forward.12} parent=0 // loop_pre_header
    _
  $region3: #{transformer_forward.12} parent=0 // loop_header
    %s12 = sphi 0, %s16
    %p13 = scmp.ge.s32.totalorder %s12, 4
    %s19 = sphi 0, %s31
    %s20 = sphi 0, %s27
    %s21 = sphi 0, %s19
    %s22 = sphi 0, %s20
    %s23 = sphi 0, %s21
    %s24 = sphi 0, %s22
    %s36 = sphi 0, %s38
    %s39 = sphi 0, %s36
    %s40 = sphi 0, %s39
    %s56 = sphi 0, %s40
    %s60 = sphi 0, %s60
    %s62 = sphi 0, %s60
    %s63 = sphi 0, %s62
    %s77 = sphi 0, %s63
    %s81 = sphi 0, %s81
    %s83 = sphi 0, %s81
    %s84 = sphi 0, %s83
    %s98 = sphi 0, %s84
    %s106 = sphi 0, %s108
    %s109 = sphi 0, %s106
    %s110 = sphi 0, %s109
    %s126 = sphi 0, %s110
    %s130 = sphi 0, %s130
    %s132 = sphi 0, %s130
    %s133 = sphi 0, %s132
    %s147 = sphi 0, %s133
    %s151 = sphi 0, %s151
    %s153 = sphi 0, %s151
    %s154 = sphi 0, %s153
    %s168 = sphi 0, %s154
    %s176 = sphi 0, %s178
    %s179 = sphi 0, %s176
    %s180 = sphi 0, %s179
    %s196 = sphi 0, %s180
  $region4: #{transformer_forward.12} parent=0 // loop_header_branch
    %15 = sbr.rel (%p13) target = $region8
  $region5: #{transformer_forward.12} parent=0 // loop_body
    %s17 = ssub.s32 %s12, 1
    %s18 = ssub.s32 %s12, 2
    %s25 = sadd.s32 1, %s20
    %p26 = scmp.ge.s32.totalorder %s25, 1
    %s27 = scalar_select %p26, 0, %s25
    %s28 = sadd.s32 1, %s19
    %s29 = scalar_select %p26, %s28, %s19
    %p30 = scmp.ge.s32.totalorder %s29, 2
    %s31 = scalar_select %p30, 0, %s29
    %s32 = ssub.s32 %s19, %s31
    %s33 = ssub.s32 %s20, %s27
    %s34 = sor.u32 %s32, %s33
    %p35 = scmp.eq.s32.totalorder %s34, 0
    %s37 = sadd.s32 %s36, 1
    %s38 = scalar_select %p35, %s36, %s37
    %p41 = pneg %p35
    %p42 = scmp.eq.s32.totalorder %s12, 1
    %p43 = por %p41, %p42
    %p44 = scmp.ne.s32.totalorder %s36, %s39
    %p45 = scmp.eq.s32.totalorder %s12, 0
    %p46 = por %p44, %p45
    %p47 = scmp.ne.s32.totalorder %s36, %s39
    %p48 = scmp.eq.s32.totalorder %s17, 1
    %p49 = por %p47, %p48
    %p50 = scmp.ne.s32.totalorder %s39, %s40
    %p51 = scmp.eq.s32.totalorder %s17, 0
    %p52 = por %p50, %p51
    %p53 = scmp.ne.s32.totalorder %s39, %s40
    %p54 = scmp.eq.s32.totalorder %s18, 1
    %p55 = por %p53, %p54
    %p57 = scmp.ne.s32.totalorder %s40, %s56
    %p58 = scmp.eq.s32.totalorder %s18, 0
    %p59 = por %p57, %p58
    %s61 = sadd.s32 %s60, 1
    %p64 = scmp.eq.s32.totalorder %s12, 1
    %p65 = scmp.ne.s32.totalorder %s60, %s62
    %p66 = scmp.eq.s32.totalorder %s12, 0
    %p67 = por %p65, %p66
    %p68 = scmp.ne.s32.totalorder %s60, %s62
    %p69 = scmp.eq.s32.totalorder %s17, 1
    %p70 = por %p68, %p69
    %p71 = scmp.ne.s32.totalorder %s62, %s63
    %p72 = scmp.eq.s32.totalorder %s17, 0
    %p73 = por %p71, %p72
    %p74 = scmp.ne.s32.totalorder %s62, %s63
    %p75 = scmp.eq.s32.totalorder %s18, 1
    %p76 = por %p74, %p75
    %p78 = scmp.ne.s32.totalorder %s63, %s77
    %p79 = scmp.eq.s32.totalorder %s18, 0
    %p80 = por %p78, %p79
    %s82 = sadd.s32 %s81, 1
    %p85 = scmp.eq.s32.totalorder %s12, 1
    %p86 = scmp.ne.s32.totalorder %s81, %s83
    %p87 = scmp.eq.s32.totalorder %s12, 0
    %p88 = por %p86, %p87
    %p89 = scmp.ne.s32.totalorder %s81, %s83
    %p90 = scmp.eq.s32.totalorder %s17, 1
    %p91 = por %p89, %p90
    %p92 = scmp.ne.s32.totalorder %s83, %s84
    %p93 = scmp.eq.s32.totalorder %s17, 0
    %p94 = por %p92, %p93
    %p95 = scmp.ne.s32.totalorder %s83, %s84
    %p96 = scmp.eq.s32.totalorder %s18, 1
    %p97 = por %p95, %p96
    %p99 = scmp.ne.s32.totalorder %s84, %s98
    %p100 = scmp.eq.s32.totalorder %s18, 0
    %p101 = por %p99, %p100
    %s102 = ssub.s32 %s19, %s31
    %s103 = ssub.s32 %s20, %s27
    %s104 = sor.u32 %s102, %s103
    %p105 = scmp.eq.s32.totalorder %s104, 0
    %s107 = sadd.s32 %s106, 1
    %s108 = scalar_select %p105, %s106, %s107
    %p111 = pneg %p105
    %p112 = scmp.eq.s32.totalorder %s12, 1
    %p113 = por %p111, %p112
    %p114 = scmp.ne.s32.totalorder %s106, %s109
    %p115 = scmp.eq.s32.totalorder %s12, 0
    %p116 = por %p114, %p115
    %p117 = scmp.ne.s32.totalorder %s106, %s109
    %p118 = scmp.eq.s32.totalorder %s17, 1
    %p119 = por %p117, %p118
    %p120 = scmp.ne.s32.totalorder %s109, %s110
    %p121 = scmp.eq.s32.totalorder %s17, 0
    %p122 = por %p120, %p121
    %p123 = scmp.ne.s32.totalorder %s109, %s110
    %p124 = scmp.eq.s32.totalorder %s18, 1
    %p125 = por %p123, %p124
    %p127 = scmp.ne.s32.totalorder %s110, %s126
    %p128 = scmp.eq.s32.totalorder %s18, 0
    %p129 = por %p127, %p128
    %s131 = sadd.s32 %s130, 1
    %p134 = scmp.eq.s32.totalorder %s12, 1
    %p135 = scmp.ne.s32.totalorder %s130, %s132
    %p136 = scmp.eq.s32.totalorder %s12, 0
    %p137 = por %p135, %p136
    %p138 = scmp.ne.s32.totalorder %s130, %s132
    %p139 = scmp.eq.s32.totalorder %s17, 1
    %p140 = por %p138, %p139
    %p141 = scmp.ne.s32.totalorder %s132, %s133
    %p142 = scmp.eq.s32.totalorder %s17, 0
    %p143 = por %p141, %p142
    %p144 = scmp.ne.s32.totalorder %s132, %s133
    %p145 = scmp.eq.s32.totalorder %s18, 1
    %p146 = por %p144, %p145
    %p148 = scmp.ne.s32.totalorder %s133, %s147
    %p149 = scmp.eq.s32.totalorder %s18, 0
    %p150 = por %p148, %p149
    %s152 = sadd.s32 %s151, 1
    %p155 = scmp.eq.s32.totalorder %s12, 1
    %p156 = scmp.ne.s32.totalorder %s151, %s153
    %p157 = scmp.eq.s32.totalorder %s12, 0
    %p158 = por %p156, %p157
    %p159 = scmp.ne.s32.totalorder %s151, %s153
    %p160 = scmp.eq.s32.totalorder %s17, 1
    %p161 = por %p159, %p160
    %p162 = scmp.ne.s32.totalorder %s153, %s154
    %p163 = scmp.eq.s32.totalorder %s17, 0
    %p164 = por %p162, %p163
    %p165 = scmp.ne.s32.totalorder %s153, %s154
    %p166 = scmp.eq.s32.totalorder %s18, 1
    %p167 = por %p165, %p166
    %p169 = scmp.ne.s32.totalorder %s154, %s168
    %p170 = scmp.eq.s32.totalorder %s18, 0
    %p171 = por %p169, %p170
    %s172 = ssub.s32 %s19, %s31
    %s173 = ssub.s32 %s20, %s27
    %s174 = sor.u32 %s172, %s173
    %p175 = scmp.eq.s32.totalorder %s174, 0
    %s177 = sadd.s32 %s176, 1
    %s178 = scalar_select %p175, %s176, %s177
    %p181 = pneg %p175
    %p182 = scmp.eq.s32.totalorder %s12, 1
    %p183 = por %p181, %p182
    %p184 = scmp.ne.s32.totalorder %s176, %s179
    %p185 = scmp.eq.s32.totalorder %s12, 0
    %p186 = por %p184, %p185
    %p187 = scmp.ne.s32.totalorder %s176, %s179
    %p188 = scmp.eq.s32.totalorder %s17, 1
    %p189 = por %p187, %p188
    %p190 = scmp.ne.s32.totalorder %s179, %s180
    %p191 = scmp.eq.s32.totalorder %s17, 0
    %p192 = por %p190, %p191
    %p193 = scmp.ne.s32.totalorder %s179, %s180
    %p194 = scmp.eq.s32.totalorder %s18, 1
    %p195 = por %p193, %p194
    %p197 = scmp.ne.s32.totalorder %s180, %s196
    %p198 = scmp.eq.s32.totalorder %s18, 0
    %p199 = por %p197, %p198
    %p200 = scmp.le.s32.totalorder 1, %s12
    %p201 = scmp.lt.s32.totalorder %s12, 3
    %p202 = pnand %p200, %p201
    %p203 = pneg %p202
    // Predicated region
    $region9: #{transformer_forward.12} parent=5 // pred_check
      _
    $region10: #{transformer_forward.12} parent=5 // pred_check_branch
      %205 = sbr.rel (%p202) target = $region12
    $region11: #{transformer_forward.12} parent=5 // pred_region
      %s206 = ssub.s32 %s12, 1
      // Predicated region
      $region13: #{transformer_forward.12} parent=11 // pred_check
        %p207 = pneg %p73
      $region14: #{transformer_forward.12} parent=11 // pred_check_branch
        %209 = sbr.rel (%p207) target = $region16
      $region15: #{transformer_forward.12} parent=11 // pred_region
        _
      $region16: #{transformer_forward.12} parent=11 // pred_fallthru
        _
      // Predicated region
      $region17: #{transformer_forward.12} parent=11 // pred_check
        %p210 = pneg %p94
      $region18: #{transformer_forward.12} parent=11 // pred_check_branch
        %212 = sbr.rel (%p210) target = $region20
      $region19: #{transformer_forward.12} parent=11 // pred_region
        _
      $region20: #{transformer_forward.12} parent=11 // pred_fallthru
        _
      // Predicated region
      $region21: #{transformer_forward.12} parent=11 // pred_check
        %p213 = pneg %p143
      $region22: #{transformer_forward.12} parent=11 // pred_check_branch
        %215 = sbr.rel (%p213) target = $region24
      $region23: #{transformer_forward.12} parent=11 // pred_region
        _
      $region24: #{transformer_forward.12} parent=11 // pred_fallthru
        _
      // Predicated region
      $region25: #{transformer_forward.12} parent=11 // pred_check
        %p216 = pneg %p164
      $region26: #{transformer_forward.12} parent=11 // pred_check_branch
        %218 = sbr.rel (%p216) target = $region28
      $region27: #{transformer_forward.12} parent=11 // pred_region
        _
      $region28: #{transformer_forward.12} parent=11 // pred_fallthru
        _
    $region12: #{transformer_forward.12} parent=5 // pred_fallthru
      _
    %p219 = scmp.lt.s32.totalorder %s12, 2
    // Predicated region
    $region29: #{transformer_forward.12} parent=5 // pred_check
      %p220 = pneg %p219
    $region30: #{transformer_forward.12} parent=5 // pred_check_branch
      %222 = sbr.rel (%p220) target = $region32
    $region31: #{transformer_forward.12} parent=5 // pred_region
      // Predicated region
      $region33: #{transformer_forward.12} parent=31 // pred_check
        %p223 = pneg %p46
      $region34: #{transformer_forward.12} parent=31 // pred_check_branch
        %225 = sbr.rel (%p223) target = $region36
      $region35: #{transformer_forward.12} parent=31 // pred_region
        %p226 = scmp.lt.s32.totalorder %s19, 1
        %s227 = scalar_select %p226, %s19, 1
        %p228 = scmp.lt.s32.totalorder %s20, 0
        %s229 = scalar_select %p228, %s20, 0
        %s230 = smul.addr %s227, 4
        %s231 = sadd.s32 %s229, %s230
        %s232 = smul.addr %s231, 4
        %s233 = scalar_lea.vmem %s0, %s232
      $region36: #{transformer_forward.12} parent=31 // pred_fallthru
        _
      // Predicated region
      $region37: #{transformer_forward.12} parent=31 // pred_check
        %p234 = pneg %p116
      $region38: #{transformer_forward.12} parent=31 // pred_check_branch
        %236 = sbr.rel (%p234) target = $region40
      $region39: #{transformer_forward.12} parent=31 // pred_region
        %p237 = scmp.lt.s32.totalorder %s19, 1
        %s238 = scalar_select %p237, %s19, 1
        %p239 = scmp.lt.s32.totalorder %s20, 0
        %s240 = scalar_select %p239, %s20, 0
        %s241 = sadd.s32 %s240, %s238
        %s242 = smul.addr %s241, 4
        %s243 = scalar_lea.vmem %s3, %s242
      $region40: #{transformer_forward.12} parent=31 // pred_fallthru
        _
    $region32: #{transformer_forward.12} parent=5 // pred_fallthru
      _
    %p244 = scmp.le.s32.totalorder 1, %s12
    %p245 = scmp.lt.s32.totalorder %s12, 3
    %p246 = pnand %p244, %p245
    %p247 = pneg %p246
    // Predicated region
    $region41: #{transformer_forward.12} parent=5 // pred_check
      _
    $region42: #{transformer_forward.12} parent=5 // pred_check_branch
      %249 = sbr.rel (%p246) target = $region44
    $region43: #{transformer_forward.12} parent=5 // pred_region
      %s250 = ssub.s32 %s12, 1
      %p251 = scmp.lt.s32.totalorder %s21, 1
      %s252 = scalar_select %p251, %s21, 1
      %p253 = scmp.lt.s32.totalorder %s22, 0
      %s254 = scalar_select %p253, %s22, 0
      %s255 = smul.addr %s252, 4
      %s256 = sadd.s32 %s254, %s255
      %s257 = smul.addr %s256, 4
      %s258 = scalar_lea.vmem %s0, %s257
      %p259 = pneg %p52
      %p260 = pneg %p49
      %p261 = pneg %p73
      %p262 = pneg %p70
      %p263 = pneg %p94
      %p264 = pneg %p91
      %p265 = scmp.lt.s32.totalorder %s21, 1
      %s266 = scalar_select %p265, %s21, 1
      %p267 = scmp.lt.s32.totalorder %s22, 0
      %s268 = scalar_select %p267, %s22, 0
      %s269 = sadd.s32 %s268, %s266
      %s270 = smul.addr %s269, 4
      %s271 = scalar_lea.vmem %s3, %s270
      %p272 = pneg %p122
      %p273 = pneg %p119
      %p274 = pneg %p143
      %p275 = pneg %p140
      %p276 = pneg %p164
      %p277 = pneg %p161
      %p278 = pneg %p192
      %p279 = pneg %p189
      %p280 = scmp.lt.s32.totalorder %s21, 1
      %s281 = scalar_select %p280, %s21, 1
      %p282 = scmp.lt.s32.totalorder %s22, 0
      %s283 = scalar_select %p282, %s22, 0
      %s284 = sadd.s32 %s283, %s281
      %s285 = smul.addr %s284, 4
      %s286 = scalar_lea.vmem %s6, %s285
      %p287 = scmp.lt.s32.totalorder %s21, 1
      %s288 = scalar_select %p287, %s21, 1
      %p289 = scmp.lt.s32.totalorder %s22, 0
      %s290 = scalar_select %p289, %s22, 0
      %s291 = smul.addr %s288, 4
      %s292 = sadd.s32 %s290, %s291
      %s293 = smul.addr %s292, 4
      %s294 = scalar_lea.vmem %s0, %s293
      %p295 = scmp.lt.s32.totalorder %s21, 1
      %s296 = scalar_select %p295, %s21, 1
      %p297 = scmp.lt.s32.totalorder %s22, 0
      %s298 = scalar_select %p297, %s22, 0
      %s299 = sadd.s32 %s298, %s296
      %s300 = smul.addr %s299, 4
      %s301 = scalar_lea.vmem %s3, %s300
      %p302 = scmp.lt.s32.totalorder %s21, 1
      %s303 = scalar_select %p302, %s21, 1
      %p304 = scmp.lt.s32.totalorder %s22, 0
      %s305 = scalar_select %p304, %s22, 0
      %s306 = sadd.s32 %s305, %s303
      %s307 = smul.addr %s306, 4
      %s308 = scalar_lea.vmem %s6, %s307
      %v310 = vld [vmem:[%s294] sm:$0xf]
      %v311 = vld [vmem:[%s1] sm:$0xf]
      %s312 = scalar_lea.vmem %s294, 4
      %v313 = vld [vmem:[%s312] sm:$0xf]
      %s314 = scalar_lea.vmem %s1, 4
      %v315 = vld [vmem:[%s314] sm:$0xf]
      %vm316 = vcmask 64512
      %v318 = vsel %vm316, %v313, 0
      %vm320 = vcmask 1043456
      %v322 = vsel %vm320, %v315, 0
      %324 = vmatprep.subr.bf16.mxu0 0
      %325 = vmatpush1.bf16.msra.mxu0 %v322
      %326 = vmatprep.subr.bf16.mxu0 0
      %327 = vmatpush1.bf16.msra.mxu0 0
      %328 = vmatprep.subr.bf16.mxu0 0
      %329 = vmatpush1.bf16.msra.mxu0 0
      %330 = vmatprep.subr.bf16.mxu0 0
      %331 = vmatpush1.bf16.msra.mxu0 0
      %332 = vmatprep.subr.bf16.mxu0 0
      %333 = vmatpush1.bf16.msra.mxu0 0
      %334 = vmatprep.subr.bf16.mxu0 0
      %335 = vmatpush1.bf16.msra.mxu0 0
      %336 = vmatprep.subr.bf16.mxu0 0
      %337 = vmatpush1.bf16.msra.mxu0 0
      %338 = vmatprep.subr.bf16.mxu0 0
      %339 = vmatpush1.bf16.msra.mxu0 0
      %340 = vmatprep.subr.bf16.mxu0 0
      %341 = vmatpush1.bf16.msra.mxu0 0
      %342 = vmatprep.subr.bf16.mxu0 0
      %343 = vmatpush1.bf16.msra.mxu0 0
      %344 = vmatprep.subr.bf16.mxu0 0
      %345 = vmatpush1.bf16.msra.mxu0 0
      %346 = vmatprep.subr.bf16.mxu0 0
      %347 = vmatpush1.bf16.msra.mxu0 0
      %348 = vmatprep.subr.bf16.mxu0 0
      %349 = vmatpush1.bf16.msra.mxu0 0
      %350 = vmatprep.subr.bf16.mxu0 0
      %351 = vmatpush1.bf16.msra.mxu0 0
      %352 = vmatprep.subr.bf16.mxu0 0
      %353 = vmatpush1.bf16.msra.mxu0 0
      %354 = vmatprep.subr.bf16.mxu0 0
      %355 = vmatpush1.bf16.msra.mxu0 0
      %356 = vmatprep.mubr.bf16.mxu0 0
      %357 = vmatmul.mubr.bf16.gmra.mrb[0].mxu0 %v318
      %v358 = vpop.f32.mrb[0].mxu0
      %v359 = vadd.f32 0.0, %v358
      %v360 = vpop.f32.mrb[0].mxu0
      %v361 = vpop.f32.mrb[0].mxu0
      %v362 = vpop.f32.mrb[0].mxu0
      %363 = vdwg.mxu0
      %v365 = vsel %vm316, %v310, 0
      %v368 = vsel %vm320, %v311, 0
      %370 = vmatprep.subr.bf16.mxu0 0
      %371 = vmatpush1.bf16.msra.mxu0 %v368
      %372 = vmatprep.subr.bf16.mxu0 0
      %373 = vmatpush1.bf16.msra.mxu0 0
      %374 = vmatprep.subr.bf16.mxu0 0
      %375 = vmatpush1.bf16.msra.mxu0 0
      %376 = vmatprep.subr.bf16.mxu0 0
      %377 = vmatpush1.bf16.msra.mxu0 0
      %378 = vmatprep.subr.bf16.mxu0 0
      %379 = vmatpush1.bf16.msra.mxu0 0
      %380 = vmatprep.subr.bf16.mxu0 0
      %381 = vmatpush1.bf16.msra.mxu0 0
      %382 = vmatprep.subr.bf16.mxu0 0
      %383 = vmatpush1.bf16.msra.mxu0 0
      %384 = vmatprep.subr.bf16.mxu0 0
      %385 = vmatpush1.bf16.msra.mxu0 0
      %386 = vmatprep.subr.bf16.mxu0 0
      %387 = vmatpush1.bf16.msra.mxu0 0
      %388 = vmatprep.subr.bf16.mxu0 0
      %389 = vmatpush1.bf16.msra.mxu0 0
      %390 = vmatprep.subr.bf16.mxu0 0
      %391 = vmatpush1.bf16.msra.mxu0 0
      %392 = vmatprep.subr.bf16.mxu0 0
      %393 = vmatpush1.bf16.msra.mxu0 0
      %394 = vmatprep.subr.bf16.mxu0 0
      %395 = vmatpush1.bf16.msra.mxu0 0
      %396 = vmatprep.subr.bf16.mxu0 0
      %397 = vmatpush1.bf16.msra.mxu0 0
      %398 = vmatprep.subr.bf16.mxu0 0
      %399 = vmatpush1.bf16.msra.mxu0 0
      %400 = vmatprep.subr.bf16.mxu0 0
      %401 = vmatpush1.bf16.msra.mxu0 0
      %402 = vmatprep.mubr.bf16.mxu0 0
      %403 = vmatmul.mubr.bf16.gmra.mrb[0].mxu0 %v365
      %v404 = vpop.f32.mrb[0].mxu0
      %v405 = vadd.f32 %v359, %v404
      %v406 = vpop.f32.mrb[0].mxu0
      %v407 = vpop.f32.mrb[0].mxu0
      %v408 = vpop.f32.mrb[0].mxu0
      %409 = vdwg.mxu0
      %s410 = scalar_lea.vmem %s294, 8
      %v411 = vld [vmem:[%s410] sm:$0xf]
      %s412 = scalar_lea.vmem %s1, 8
      %v413 = vld [vmem:[%s412] sm:$0xf]
      %v415 = vsel %vm316, %v411, 0
      %v418 = vsel %vm320, %v413, 0
      %420 = vmatprep.subr.bf16.mxu0 0
      %421 = vmatpush1.bf16.msra.mxu0 %v418
      %422 = vmatprep.subr.bf16.mxu0 0
      %423 = vmatpush1.bf16.msra.mxu0 0
      %424 = vmatprep.subr.bf16.mxu0 0
      %425 = vmatpush1.bf16.msra.mxu0 0
      %426 = vmatprep.subr.bf16.mxu0 0
      %427 = vmatpush1.bf16.msra.mxu0 0
      %428 = vmatprep.subr.bf16.mxu0 0
      %429 = vmatpush1.bf16.msra.mxu0 0
      %430 = vmatprep.subr.bf16.mxu0 0
      %431 = vmatpush1.bf16.msra.mxu0 0
      %432 = vmatprep.subr.bf16.mxu0 0
      %433 = vmatpush1.bf16.msra.mxu0 0
      %434 = vmatprep.subr.bf16.mxu0 0
      %435 = vmatpush1.bf16.msra.mxu0 0
      %436 = vmatprep.subr.bf16.mxu0 0
      %437 = vmatpush1.bf16.msra.mxu0 0
      %438 = vmatprep.subr.bf16.mxu0 0
      %439 = vmatpush1.bf16.msra.mxu0 0
      %440 = vmatprep.subr.bf16.mxu0 0
      %441 = vmatpush1.bf16.msra.mxu0 0
      %442 = vmatprep.subr.bf16.mxu0 0
      %443 = vmatpush1.bf16.msra.mxu0 0
      %444 = vmatprep.subr.bf16.mxu0 0
      %445 = vmatpush1.bf16.msra.mxu0 0
      %446 = vmatprep.subr.bf16.mxu0 0
      %447 = vmatpush1.bf16.msra.mxu0 0
      %448 = vmatprep.subr.bf16.mxu0 0
      %449 = vmatpush1.bf16.msra.mxu0 0
      %450 = vmatprep.subr.bf16.mxu0 0
      %451 = vmatpush1.bf16.msra.mxu0 0
      %452 = vmatprep.mubr.bf16.mxu0 0
      %453 = vmatmul.mubr.bf16.gmra.mrb[0].mxu0 %v415
      %v454 = vpop.f32.mrb[0].mxu0
      %v455 = vadd.f32 0.0, %v454
      %v456 = vpop.f32.mrb[0].mxu0
      %v457 = vpop.f32.mrb[0].mxu0
      %v458 = vpop.f32.mrb[0].mxu0
      %459 = vdwg.mxu0
      %v460 = vadd.f32 %v405, %v455
      %s461 = scalar_lea.vmem %s294, 12
      %v462 = vld [vmem:[%s461] sm:$0xf]
      %s463 = scalar_lea.vmem %s1, 12
      %v464 = vld [vmem:[%s463] sm:$0xf]
      %v466 = vsel %vm316, %v462, 0
      %v469 = vsel %vm320, %v464, 0
      %471 = vmatprep.subr.bf16.mxu0 0
      %472 = vmatpush1.bf16.msra.mxu0 %v469
      %473 = vmatprep.subr.bf16.mxu0 0
      %474 = vmatpush1.bf16.msra.mxu0 0
      %475 = vmatprep.subr.bf16.mxu0 0
      %476 = vmatpush1.bf16.msra.mxu0 0
      %477 = vmatprep.subr.bf16.mxu0 0
      %478 = vmatpush1.bf16.msra.mxu0 0
      %479 = vmatprep.subr.bf16.mxu0 0
      %480 = vmatpush1.bf16.msra.mxu0 0
      %481 = vmatprep.subr.bf16.mxu0 0
      %482 = vmatpush1.bf16.msra.mxu0 0
      %483 = vmatprep.subr.bf16.mxu0 0
      %484 = vmatpush1.bf16.msra.mxu0 0
      %485 = vmatprep.subr.bf16.mxu0 0
      %486 = vmatpush1.bf16.msra.mxu0 0
      %487 = vmatprep.subr.bf16.mxu0 0
      %488 = vmatpush1.bf16.msra.mxu0 0
      %489 = vmatprep.subr.bf16.mxu0 0
      %490 = vmatpush1.bf16.msra.mxu0 0
      %491 = vmatprep.subr.bf16.mxu0 0
      %492 = vmatpush1.bf16.msra.mxu0 0
      %493 = vmatprep.subr.bf16.mxu0 0
      %494 = vmatpush1.bf16.msra.mxu0 0
      %495 = vmatprep.subr.bf16.mxu0 0
      %496 = vmatpush1.bf16.msra.mxu0 0
      %497 = vmatprep.subr.bf16.mxu0 0
      %498 = vmatpush1.bf16.msra.mxu0 0
      %499 = vmatprep.subr.bf16.mxu0 0
      %500 = vmatpush1.bf16.msra.mxu0 0
      %501 = vmatprep.subr.bf16.mxu0 0
      %502 = vmatpush1.bf16.msra.mxu0 0
      %503 = vmatprep.mubr.bf16.mxu0 0
      %504 = vmatmul.mubr.bf16.gmra.mrb[0].mxu0 %v466
      %v505 = vpop.f32.mrb[0].mxu0
      %v506 = vadd.f32 0.0, %v505
      %v507 = vpop.f32.mrb[0].mxu0
      %v508 = vpop.f32.mrb[0].mxu0
      %v509 = vpop.f32.mrb[0].mxu0
      %510 = vdwg.mxu0
      %v511 = vadd.f32 %v460, %v506
      %v512 = vld [vmem:[%s2] sm:$0x1]
      %v514 = vlaneseq
      %v515 = vshrl.u32 %v514, 7
      %v516 = vsub.s32 0, %v515
      %v517 = vrot.slane %v512, %v516
      %v519 = vadd.f32 %v511, %v517
      %v520 = vld [vmem:[%s301] sm:$0xf]
      %v521 = vunpack.c.l.bf16 %v520
      %v522 = vadd.f32 %v519, %v521
      %v523 = vld [vmem:[%s4] sm:$0x1]
      %v524 = vld [vmem:[%s5] sm:$0x1]
      %vm525 = vcmask 261120
      %v526 = vsel %vm525, %v522, 0.0
      %527 = vadd.xlane.f32.xlu0 %v526
      %v528 = vpop.xlane.xlu0 %527
      %v529 = vrcp.pop 32.0
      %v530 = vmul.f32 %v528, %v529
      %v531 = vsub.f32 %v522, %v530
      %v532 = vmul.f32 %v531, %v531
      %v533 = vsel %vm525, %v532, 0.0
      %534 = vadd.xlane.f32.xlu0 %v533
      %v535 = vpop.xlane.xlu0 %534
      %v536 = vmul.f32 %v535, %v529
      %v537 = vadd.f32 %v536, 1e-05
      %v538 = vrsqrt.pop %v537
      %v539 = vmul.f32 %v531, %v538
      %v541 = vlaneseq
      %v542 = vshrl.u32 %v541, 7
      %v543 = vsub.s32 0, %v542
      %v544 = vrot.slane %v523, %v543
      %v546 = vmul.f32 %v539, %v544
      %v548 = vlaneseq
      %v549 = vshrl.u32 %v548, 7
      %v550 = vsub.s32 0, %v549
      %v551 = vrot.slane %v524, %v550
      %v553 = vadd.f32 %v546, %v551
      %v554 = vpack.c.bf16 %v553, %v553
      %vm555 = vcmask 257024
      %556 = vst.msk [vmem:[%s308] sm:$0xf] %vm555, %v554
      %p557 = scmp.lt.s32.totalorder %s21, 1
      %s558 = scalar_select %p557, %s21, 1
      %p559 = scmp.lt.s32.totalorder %s22, 0
      %s560 = scalar_select %p559, %s22, 0
      %s561 = sadd.s32 %s560, %s558
      %s562 = smul.addr %s561, 4
      %s563 = scalar_lea.vmem %s6, %s562
      // Predicated region
      $region45: #{transformer_forward.12} parent=43 // pred_check
        %p564 = pneg %p189
      $region46: #{transformer_forward.12} parent=43 // pred_check_branch
        %566 = sbr.rel (%p564) target = $region48
      $region47: #{transformer_forward.12} parent=43 // pred_region
        _
      $region48: #{transformer_forward.12} parent=43 // pred_fallthru
        _
    $region44: #{transformer_forward.12} parent=5 // pred_fallthru
      _
    %p567 = scmp.le.s32.totalorder 2, %s12
    // Predicated region
    $region49: #{transformer_forward.12} parent=5 // pred_check
      %p568 = pneg %p567
    $region50: #{transformer_forward.12} parent=5 // pred_check_branch
      %570 = sbr.rel (%p568) target = $region52
    $region51: #{transformer_forward.12} parent=5 // pred_region
      %s571 = ssub.s32 %s12, 2
      // Predicated region
      $region53: #{transformer_forward.12} parent=51 // pred_check
        %p572 = pneg %p195
      $region54: #{transformer_forward.12} parent=51 // pred_check_branch
        %574 = sbr.rel (%p572) target = $region56
      $region55: #{transformer_forward.12} parent=51 // pred_region
        %p575 = scmp.lt.s32.totalorder %s23, 1
        %s576 = scalar_select %p575, %s23, 1
        %p577 = scmp.lt.s32.totalorder %s24, 0
        %s578 = scalar_select %p577, %s24, 0
        %s579 = sadd.s32 %s578, %s576
        %s580 = smul.addr %s579, 4
        %s581 = scalar_lea.vmem %s6, %s580
      $region56: #{transformer_forward.12} parent=51 // pred_fallthru
        _
    $region52: #{transformer_forward.12} parent=5 // pred_fallthru
      _
  $region6: #{transformer_forward.12} parent=0 // loop_footer
    %s16 = sadd.s32 1, %s12
  $region7: #{transformer_forward.12} parent=0 // loop_footer_branch
    %11 = sbr.rel target = $region3
  $region8: #{transformer_forward.12} parent=0 // loop_exit
    _

// kernel: transformer_forward.13
$region0: #{transformer_forward.13}
  #allocation0 [shape = 'u32[]', space=smem, size = 0x4, offset = 0x4, fixed_abs, tag = 'smem constant byte address 0x4 - core index']
  #allocation1 [shape = 'u32[144,128]{1,0:T(1,128)}', space=vmem, size = 0x12000, scoped, tag = 'internal scratch']
  %s0 = inlined_call_operand.vmem [shape: bf16[16,32], index: 0, kind: input, shape index: {}]
  %s1 = inlined_call_operand.vmem [shape: bf16[32,64], index: 1, kind: input, shape index: {}]
  %s2 = inlined_call_operand.vmem [shape: f32[1,64], index: 2, kind: input, shape index: {}]
  %s3 = inlined_call_operand.vmem [shape: bf16[64,32], index: 3, kind: input, shape index: {}]
  %s4 = inlined_call_operand.vmem [shape: f32[1,32], index: 4, kind: input, shape index: {}]
  %s5 = inlined_call_operand.vmem [shape: f32[1,32], index: 5, kind: input, shape index: {}]
  %s6 = inlined_call_operand.vmem [shape: f32[1,32], index: 6, kind: input, shape index: {}]
  %s7 = inlined_call_operand.vmem [shape: bf16[16,32], index: 7, kind: output, shape index: {}]
  %s8 = sld [smem:[#allocation0]]
  $region38: #{transformer_forward.13} parent=0
    _
  %s10 = ssub.s32 1, %s8
  %s11 = scalar_select 0, %s10, %s8
  // Predicated region
  $region2: #{transformer_forward.13} parent=0 // pred_check
    _
  $region3: #{transformer_forward.13} parent=0 // pred_check_branch
    %13 = sbr.rel (0) target = $region5
  $region4: #{transformer_forward.13} parent=0 // pred_region
    _
  $region5: #{transformer_forward.13} parent=0 // pred_fallthru
    _
  // Predicated region
  $region6: #{transformer_forward.13} parent=0 // pred_check
    _
  $region7: #{transformer_forward.13} parent=0 // pred_check_branch
    %15 = sbr.rel (0) target = $region9
  $region8: #{transformer_forward.13} parent=0 // pred_region
    _
  $region9: #{transformer_forward.13} parent=0 // pred_fallthru
    _
  // Predicated region
  $region10: #{transformer_forward.13} parent=0 // pred_check
    _
  $region11: #{transformer_forward.13} parent=0 // pred_check_branch
    %17 = sbr.rel (0) target = $region13
  $region12: #{transformer_forward.13} parent=0 // pred_region
    _
  $region13: #{transformer_forward.13} parent=0 // pred_fallthru
    _
  // Predicated region
  $region14: #{transformer_forward.13} parent=0 // pred_check
    _
  $region15: #{transformer_forward.13} parent=0 // pred_check_branch
    %19 = sbr.rel (0) target = $region17
  $region16: #{transformer_forward.13} parent=0 // pred_region
    _
  $region17: #{transformer_forward.13} parent=0 // pred_fallthru
    _
  // Predicated region
  $region18: #{transformer_forward.13} parent=0 // pred_check
    _
  $region19: #{transformer_forward.13} parent=0 // pred_check_branch
    %21 = sbr.rel (0) target = $region21
  $region20: #{transformer_forward.13} parent=0 // pred_region
    _
  $region21: #{transformer_forward.13} parent=0 // pred_fallthru
    _
  // Predicated region
  $region22: #{transformer_forward.13} parent=0 // pred_check
    _
  $region23: #{transformer_forward.13} parent=0 // pred_check_branch
    %23 = sbr.rel (0) target = $region25
  $region24: #{transformer_forward.13} parent=0 // pred_region
    _
  $region25: #{transformer_forward.13} parent=0 // pred_fallthru
    _
  // Predicated region
  $region26: #{transformer_forward.13} parent=0 // pred_check
    _
  $region27: #{transformer_forward.13} parent=0 // pred_check_branch
    %25 = sbr.rel (0) target = $region29
  $region28: #{transformer_forward.13} parent=0 // pred_region
    _
  $region29: #{transformer_forward.13} parent=0 // pred_fallthru
    _
  %v27 = vld [vmem:[%s0] sm:$0xf]
  %v28 = vld [vmem:[%s0 + $0x4] sm:$0xf]
  %v29 = vld [vmem:[%s1] sm:$0xf]
  %v30 = vld [vmem:[%s1 + $0x4] sm:$0xf]
  %v31 = vld [vmem:[%s1 + $0x8] sm:$0xf]
  %v32 = vld [vmem:[%s1 + $0xc] sm:$0xf]
  %v33 = vld [vmem:[%s2] sm:$0x1]
  %v35 = vlaneseq
  %v36 = vshrl.u32 %v35, 7
  %v37 = vsub.s32 0, %v36
  %v38 = vrot.slane %v33, %v37
  %v42 = vunpack.c.l.b16 %v27
  %v43 = vunpack.c.l.b16 %v28
  %v44 = vpack.c.b16 %v43, %v42
  %v49 = vunpack.c.l.b16 %v29
  %v50 = vunpack.c.l.b16 %v30
  %v51 = vunpack.c.l.b16 %v31
  %v52 = vunpack.c.l.b16 %v32
  %v53 = vpack.c.b16 %v50, %v49
  %v54 = vpack.c.b16 %v52, %v51
  %vm57 = vcmask 261120
  %v59 = vsel %vm57, %v44, 0
  %61 = vmatprep.subr.bf16.mxu0 0
  %62 = vmatpush1.bf16.msra.mxu0 %v53
  %63 = vmatprep.subr.bf16.mxu0 0
  %64 = vmatpush1.bf16.msra.mxu0 %v54
  %65 = vmatprep.subr.bf16.mxu0 0
  %66 = vmatpush1.bf16.msra.mxu0 0
  %67 = vmatprep.subr.bf16.mxu0 0
  %68 = vmatpush1.bf16.msra.mxu0 0
  %69 = vmatprep.subr.bf16.mxu0 0
  %70 = vmatpush1.bf16.msra.mxu0 0
  %71 = vmatprep.subr.bf16.mxu0 0
  %72 = vmatpush1.bf16.msra.mxu0 0
  %73 = vmatprep.subr.bf16.mxu0 0
  %74 = vmatpush1.bf16.msra.mxu0 0
  %75 = vmatprep.subr.bf16.mxu0 0
  %76 = vmatpush1.bf16.msra.mxu0 0
  %77 = vmatprep.subr.bf16.mxu0 0
  %78 = vmatpush1.bf16.msra.mxu0 0
  %79 = vmatprep.subr.bf16.mxu0 0
  %80 = vmatpush1.bf16.msra.mxu0 0
  %81 = vmatprep.subr.bf16.mxu0 0
  %82 = vmatpush1.bf16.msra.mxu0 0
  %83 = vmatprep.subr.bf16.mxu0 0
  %84 = vmatpush1.bf16.msra.mxu0 0
  %85 = vmatprep.subr.bf16.mxu0 0
  %86 = vmatpush1.bf16.msra.mxu0 0
  %87 = vmatprep.subr.bf16.mxu0 0
  %88 = vmatpush1.bf16.msra.mxu0 0
  %89 = vmatprep.subr.bf16.mxu0 0
  %90 = vmatpush1.bf16.msra.mxu0 0
  %91 = vmatprep.subr.bf16.mxu0 0
  %92 = vmatpush1.bf16.msra.mxu0 0
  %93 = vmatprep.mubr.bf16.mxu0 0
  %94 = vmatmul.mubr.bf16.gmra.mrb[0].mxu0 %v59
  %v95 = vpop.f32.mrb[0].mxu0
  %v96 = vadd.f32 %v38, %v95
  %v97 = vpop.f32.mrb[0].mxu0
  %v98 = vpop.f32.mrb[0].mxu0
  %v99 = vadd.f32 %v38, %v98
  %v100 = vpop.f32.mrb[0].mxu0
  %101 = vdwg.mxu0
  %v102 = vmax.f32 %v96, 0.0
  %v103 = vmax.f32 %v99, 0.0
  %v104 = vpack.c.bf16 %v103, %v102
  %v105 = vld [vmem:[%s3] sm:$0xf]
  %v106 = vld [vmem:[%s3 + $0x4] sm:$0xf]
  %v107 = vld [vmem:[%s3 + $0x8] sm:$0xf]
  %v108 = vld [vmem:[%s3 + $0xc] sm:$0xf]
  %v109 = vld [vmem:[%s3 + $0x10] sm:$0xf]
  %v110 = vld [vmem:[%s3 + $0x14] sm:$0xf]
  %v111 = vld [vmem:[%s3 + $0x18] sm:$0xf]
  %v112 = vld [vmem:[%s3 + $0x1c] sm:$0xf]
  %v113 = vld [vmem:[%s4] sm:$0x1]
  %v115 = vlaneseq
  %v116 = vshrl.u32 %v115, 7
  %v117 = vsub.s32 0, %v116
  %v118 = vrot.slane %v113, %v117
  %v128 = vunpack.c.l.b16 %v105
  %v129 = vunpack.c.l.b16 %v106
  %v130 = vunpack.c.l.b16 %v107
  %v131 = vunpack.c.l.b16 %v108
  %v132 = vunpack.c.l.b16 %v109
  %v133 = vunpack.c.l.b16 %v110
  %v134 = vunpack.c.l.b16 %v111
  %v135 = vunpack.c.l.b16 %v112
  %v136 = vpack.c.b16 %v129, %v128
  %v137 = vpack.c.b16 %v131, %v130
  %v138 = vpack.c.b16 %v133, %v132
  %v139 = vpack.c.b16 %v135, %v134
  %vm144 = vcmask 523264
  %v146 = vsel %vm144, %v104, 0
  %148 = vmatprep.subr.bf16.mxu0 0
  %149 = vmatpush1.bf16.msra.mxu0 %v136
  %150 = vmatprep.subr.bf16.mxu0 0
  %151 = vmatpush1.bf16.msra.mxu0 %v137
  %152 = vmatprep.subr.bf16.mxu0 0
  %153 = vmatpush1.bf16.msra.mxu0 %v138
  %154 = vmatprep.subr.bf16.mxu0 0
  %155 = vmatpush1.bf16.msra.mxu0 %v139
  %156 = vmatprep.subr.bf16.mxu0 0
  %157 = vmatpush1.bf16.msra.mxu0 0
  %158 = vmatprep.subr.bf16.mxu0 0
  %159 = vmatpush1.bf16.msra.mxu0 0
  %160 = vmatprep.subr.bf16.mxu0 0
  %161 = vmatpush1.bf16.msra.mxu0 0
  %162 = vmatprep.subr.bf16.mxu0 0
  %163 = vmatpush1.bf16.msra.mxu0 0
  %164 = vmatprep.subr.bf16.mxu0 0
  %165 = vmatpush1.bf16.msra.mxu0 0
  %166 = vmatprep.subr.bf16.mxu0 0
  %167 = vmatpush1.bf16.msra.mxu0 0
  %168 = vmatprep.subr.bf16.mxu0 0
  %169 = vmatpush1.bf16.msra.mxu0 0
  %170 = vmatprep.subr.bf16.mxu0 0
  %171 = vmatpush1.bf16.msra.mxu0 0
  %172 = vmatprep.subr.bf16.mxu0 0
  %173 = vmatpush1.bf16.msra.mxu0 0
  %174 = vmatprep.subr.bf16.mxu0 0
  %175 = vmatpush1.bf16.msra.mxu0 0
  %176 = vmatprep.subr.bf16.mxu0 0
  %177 = vmatpush1.bf16.msra.mxu0 0
  %178 = vmatprep.subr.bf16.mxu0 0
  %179 = vmatpush1.bf16.msra.mxu0 0
  %180 = vmatprep.mubr.bf16.mxu0 0
  %181 = vmatmul.mubr.bf16.gmra.mrb[0].mxu0 %v146
  %v182 = vpop.f32.mrb[0].mxu0
  %v183 = vadd.f32 %v118, %v182
  %v184 = vpop.f32.mrb[0].mxu0
  %v185 = vpop.f32.mrb[0].mxu0
  %v186 = vadd.f32 %v118, %v185
  %v187 = vpop.f32.mrb[0].mxu0
  %188 = vdwg.mxu0
  %v189 = vunpack.c.l.bf16 %v27
  %v190 = vunpack.c.l.bf16 %v28
  %v191 = vadd.f32 %v183, %v189
  %v192 = vadd.f32 %v186, %v190
  %v193 = vld [vmem:[%s5] sm:$0x1]
  %v194 = vld [vmem:[%s6] sm:$0x1]
  %v195 = vsel %vm57, %v191, 0.0
  %196 = vadd.xlane.f32.xlu0 %v195
  %v197 = vpop.xlane.xlu0 %196
  %v198 = vsel %vm57, %v192, 0.0
  %199 = vadd.xlane.f32.xlu0 %v198
  %v200 = vpop.xlane.xlu0 %199
  %v201 = vrcp.pop 32.0
  %v202 = vmul.f32 %v197, %v201
  %v203 = vmul.f32 %v200, %v201
  %v204 = vsub.f32 %v191, %v202
  %v205 = vsub.f32 %v192, %v203
  %v206 = vmul.f32 %v204, %v204
  %v207 = vmul.f32 %v205, %v205
  %v208 = vsel %vm57, %v206, 0.0
  %209 = vadd.xlane.f32.xlu0 %v208
  %v210 = vpop.xlane.xlu0 %209
  %v211 = vsel %vm57, %v207, 0.0
  %212 = vadd.xlane.f32.xlu0 %v211
  %v213 = vpop.xlane.xlu0 %212
  %v214 = vmul.f32 %v210, %v201
  %v215 = vmul.f32 %v213, %v201
  %v216 = vadd.f32 %v214, 1e-05
  %v217 = vadd.f32 %v215, 1e-05
  %v218 = vrsqrt.pop %v216
  %v219 = vrsqrt.pop %v217
  %v220 = vmul.f32 %v204, %v218
  %v221 = vmul.f32 %v205, %v219
  %v223 = vlaneseq
  %v224 = vshrl.u32 %v223, 7
  %v225 = vsub.s32 0, %v224
  %v226 = vrot.slane %v193, %v225
  %v228 = vmul.f32 %v220, %v226
  %v229 = vmul.f32 %v221, %v226
  %v231 = vlaneseq
  %v232 = vshrl.u32 %v231, 7
  %v233 = vsub.s32 0, %v232
  %v234 = vrot.slane %v194, %v233
  %v236 = vadd.f32 %v228, %v234
  %v237 = vadd.f32 %v229, %v234
  %v238 = vpack.c.bf16 %v237, %v236
  %v240 = vunpack.c.l.b16 %v238
  %v241 = vunpack.c.h.b16 %v238
  %v242 = vpack.c.b16 %v240, %v240
  %v243 = vpack.c.b16 %v241, %v241
  %vm246 = vcmask 257024
  %247 = vst.msk [vmem:[%s7] sm:$0xf] %vm246, %v242
  %248 = vst.msk [vmem:[%s7 + $0x4] sm:$0xf] %vm246, %v243
  // Predicated region
  $region30: #{transformer_forward.13} parent=0 // pred_check
    _
  $region31: #{transformer_forward.13} parent=0 // pred_check_branch
    %250 = sbr.rel (0) target = $region33
  $region32: #{transformer_forward.13} parent=0 // pred_region
    _
  $region33: #{transformer_forward.13} parent=0 // pred_fallthru
    _
  // Predicated region
  $region34: #{transformer_forward.13} parent=0 // pred_check
    _
  $region35: #{transformer_forward.13} parent=0 // pred_check_branch
    %252 = sbr.rel (0) target = $region37
  $region36: #{transformer_forward.13} parent=0 // pred_region
    _
  $region37: #{transformer_forward.13} parent=0 // pred_fallthru
    _

</llo_original>
